<compile_context>
chip_gen: v5e
topology: v5e:2x2
jax: 0.10.0
libtpu: 0.0.40
codegen_flags: <defaults>
</compile_context>

<pallas_src>
import functools

import jax
import jax.numpy as jnp
from jax import lax
from jax.experimental import pallas as pl
from jax.experimental.pallas import tpu as pltpu

TITLE_DIM = 160        # PCNN output / LayerNorm(160)
ANN_HIDDEN = 100       # user_encoder.hidden_size
ANN_HIDDEN_PAD = 128   # lane-padded attention hidden dim (zero pad is exact)
N_FILTERS = 80         # 80 word filters + 80 entity filters -> 160
KWIN = 3               # conv window over title words
GATE_STRIDE = 256      # per-GRU-gate lane stride (160 padded to 256 -> 128-aligned)
EPS = 1e-5             # nn.LayerNorm default eps


def _layer_norm(x, g, b):
    mu = jnp.mean(x, axis=-1, keepdims=True)
    var = jnp.mean((x - mu) ** 2, axis=-1, keepdims=True)
    return (x - mu) * lax.rsqrt(var + EPS) * g + b


# --------------------------------------------------------------------------
# Single fused per-user kernel: PCNN(conv+ReLU+maxpool) -> norms -> ANN
# attention -> ARNN (GRU + attention) -> final norm.
# --------------------------------------------------------------------------
def user_encoder_kernel(conv_win_ref, w_conv_ref, b_conv_ref,
                        g_ne_ref, b_ne_ref, g_u1_ref, b_u1_ref,
                        cand_ref,
                        ann_w1_ref, ann_w2_ref, ann_b_ref, ann_v_ref,
                        gru_wx_ref, gru_wh_ref, gru_bx_ref, gru_bh_ref,
                        g_u2_ref, b_u2_ref,
                        out_ref, hist_ref, *, n_news, n_pos):
    N, P, D = n_news, n_pos, TITLE_DIM

    # ---- PCNN: one merged conv matmul (bf16 MXU, f32 accumulate) + ReLU -----
    cc = jnp.dot(conv_win_ref[...], w_conv_ref[...],
                 preferred_element_type=jnp.float32) + b_conv_ref[...]
    cc = jnp.maximum(cc, 0.0)                                   # [P*N, 160] f32

    # max-pool over the P conv positions: pairwise VALU maximum over
    # contiguous sublane-aligned [N, 160] row slabs (p-major layout).
    rep = cc[0:N, :]
    for p in range(1, P):
        rep = jnp.maximum(rep, cc[p * N:(p + 1) * N, :])        # [N, 160]

    # dropout (eval) -> identity ; new_encoder.norm1 ; dropout ; user.norm1
    rep = _layer_norm(rep, g_ne_ref[...], b_ne_ref[...])
    rep = _layer_norm(rep, g_u1_ref[...], b_u1_ref[...])        # new_rep [N,160]
    rep_bf = rep.astype(jnp.bfloat16)                           # MXU-operand copy

    # ---- ANN (mode='interest'): additive attention over clicked news -------
    ch = jnp.dot(cand_ref[...], ann_w1_ref[...],
                 preferred_element_type=jnp.float32)            # [S, 128] f32
    hh = jnp.dot(rep_bf, ann_w2_ref[...],
                 preferred_element_type=jnp.float32)            # [N, 128] f32
    e = jnp.tanh(ch[:, None, :] + hh[None, :, :]
                 + ann_b_ref[...][None, :, :])                  # [S, N, 128]
    scores = jnp.sum(e * ann_v_ref[...][None, :, :], axis=-1)   # [S, N]
    scores = scores - jnp.max(scores, axis=-1, keepdims=True)
    pexp = jnp.exp(scores)
    alpha = pexp * pl.reciprocal(jnp.sum(pexp, axis=-1, keepdims=True),
                                 approx=True)
    interest = jnp.dot(alpha.astype(jnp.bfloat16), rep_bf,
                       preferred_element_type=jnp.float32)      # [S, 160] f32

    # ---- ARNN: GRU over history, then attention of interest over GRU states
    # Hoisted input transform: ONE fused [N,160]x[160,768] matmul for all 3
    # gates (gate blocks padded to 256 lanes -> 128-aligned gate slices).
    gx = jnp.dot(rep_bf, gru_wx_ref[...],
                 preferred_element_type=jnp.float32) + gru_bx_ref[...]   # [N,768]
    wh_f = gru_wh_ref[...]                                      # [160, 768] bf16
    bh_f = gru_bh_ref[...]                                      # [1, 768] f32

    # Fully unrolled recurrence (n_news small & static): each step is ONE
    # fused [1,160]x[160,768] MXU push; H rows go to VMEM scratch via static
    # stores (no concat / relayout on the serial chain).
    # TODO(synk): for production history lengths (N ~ 50+) switch to
    #             lax.fori_loop(..., unroll=4) carrying h to bound vreg pressure.
    h = jnp.zeros((1, D), jnp.float32)
    for t in range(N):
        gh = jnp.dot(h.astype(jnp.bfloat16), wh_f,
                     preferred_element_type=jnp.float32) + bh_f          # [1,768]
        gxt = gx[t:t + 1, :]
        r = jax.nn.sigmoid(gxt[:, 0:D] + gh[:, 0:D])
        z = jax.nn.sigmoid(gxt[:, GATE_STRIDE:GATE_STRIDE + D]
                           + gh[:, GATE_STRIDE:GATE_STRIDE + D])
        n = jnp.tanh(gxt[:, 2 * GATE_STRIDE:2 * GATE_STRIDE + D]
                     + r * gh[:, 2 * GATE_STRIDE:2 * GATE_STRIDE + D])
        h = (1.0 - z) * n + z * h
        hist_ref[pl.ds(t, 1), :] = h
    H = hist_ref[...]                                           # [N, 160] f32

    # attention of `interest` over GRU states: broadcast-multiply + lane reduce
    # (VPU/XLU slots) instead of a transposed MXU contraction -> no H relayout.
    scores2 = jnp.sum(interest[:, None, :] * H[None, :, :], axis=-1)   # [S, N]
    scores2 = scores2 - jnp.max(scores2, axis=-1, keepdims=True)
    p2 = jnp.exp(scores2)
    alpha2 = p2 * pl.reciprocal(jnp.sum(p2, axis=-1, keepdims=True),
                                approx=True)
    ctx = jnp.dot(alpha2.astype(jnp.bfloat16), H.astype(jnp.bfloat16),
                  preferred_element_type=jnp.float32)           # [S, 160]

    # dropout (eval) -> identity ; user_encoder.norm2
    out_ref[...] = _layer_norm(ctx, g_u2_ref[...], b_u2_ref[...])


# --------------------------------------------------------------------------
# Glue / wrapper
# --------------------------------------------------------------------------
def _im2col_pmajor(x, k):
    # x: [B, N, T, D] -> [B, P*N, k*D]  (p-major rows within each user)
    b, n, t, d = x.shape
    p = t - k + 1
    win = jnp.stack(
        [jnp.concatenate([x[:, :, i + j, :] for j in range(k)], axis=-1)
         for i in range(p)], axis=1)                            # [B, P, N, k*D]
    return win.reshape(b, p * n, k * d)


def _pad_gate(w):
    pad = GATE_STRIDE - TITLE_DIM
    return jnp.pad(w, [(0, 0)] * (w.ndim - 1) + [(0, pad)])


def user_encoder_forward(params, word_embedding, entity_embedding, entity_cate,
                         candidate_new_rep):
    """Batched user_encoder.forward: leading dim = independent users."""
    B, N, T, _ = word_embedding.shape
    P = T - KWIN + 1
    S = candidate_new_rep.shape[1]

    # --- glue: category lookup, merged p-major im2col (bf16), weight prep ---
    cate_emb = jnp.take(params["cate_table"], entity_cate, axis=0)      # [B,N,T,Ec]
    ent_feat = jnp.concatenate([entity_embedding, cate_emb], axis=-1)   # [B,N,T,Ef]
    word_win = _im2col_pmajor(word_embedding, KWIN)                     # [B,P*N,3*Wd]
    ent_win = _im2col_pmajor(ent_feat, KWIN)                            # [B,P*N,3*Ef]
    Kw, Ke = word_win.shape[-1], ent_win.shape[-1]
    conv_win = jnp.concatenate([word_win, ent_win],
                               axis=-1).astype(jnp.bfloat16)            # [B,P*N,K]

    # merged conv weight: block_diag(w_conv_w, w_conv_e) -> one [K,160] matmul
    # whose output is directly the lane-dense [word_filters | entity_filters].
    w_merged = jnp.concatenate([
        jnp.concatenate([params["w_conv_w"],
                         jnp.zeros((Kw, N_FILTERS), jnp.float32)], axis=1),
        jnp.concatenate([jnp.zeros((Ke, N_FILTERS), jnp.float32),
                         params["w_conv_e"]], axis=1)],
        axis=0).astype(jnp.bfloat16)
    b_merged = jnp.concatenate([params["b_conv_w"], params["b_conv_e"]], axis=1)

    # lane-pad ANN attention hidden 100 -> 128 (exact: tanh(0)=0 and v_pad=0)
    pad = ANN_HIDDEN_PAD - ANN_HIDDEN
    ann_w1 = jnp.pad(params["ann_w1"], ((0, 0), (0, pad))).astype(jnp.bfloat16)
    ann_w2 = jnp.pad(params["ann_w2"], ((0, 0), (0, pad))).astype(jnp.bfloat16)
    ann_b = jnp.pad(params["ann_b"], ((0, 0), (0, pad)))
    ann_v = jnp.pad(params["ann_v"], ((0, 0), (0, pad)))

    # fused GRU gate weights: [160, 3*256] (r|z|n, each gate zero-padded to a
    # 128-aligned 256-lane block) -> ONE matmul per recurrence step / for gx.
    gru_wx = jnp.concatenate([_pad_gate(params["gru_wx"][i]) for i in range(3)],
                             axis=1).astype(jnp.bfloat16)               # [160,768]
    gru_wh = jnp.concatenate([_pad_gate(params["gru_wh"][i]) for i in range(3)],
                             axis=1).astype(jnp.bfloat16)               # [160,768]
    gru_bx = jnp.concatenate([_pad_gate(params["gru_bx"][i]) for i in range(3)],
                             axis=1)                                    # [1,768]
    gru_bh = jnp.concatenate([_pad_gate(params["gru_bh"][i]) for i in range(3)],
                             axis=1)                                    # [1,768]

    cand = candidate_new_rep.astype(jnp.bfloat16)                       # [B,S,160]

    kernel_inputs = (
        conv_win, w_merged, b_merged,
        params["g_ne"], params["b_ne"], params["g_u1"], params["b_u1"],
        cand,
        ann_w1, ann_w2, ann_b, ann_v,
        gru_wx, gru_wh, gru_bx, gru_bh,
        params["g_u2"], params["b_u2"],
    )

    per_user3 = lambda b: (b, 0, 0)
    shared2 = lambda b: (0, 0)

    def full2(arr):
        return pl.BlockSpec(arr.shape, shared2)

    Kc = conv_win.shape[-1]
    in_specs = [
        pl.BlockSpec((pl.Squeezed(), P * N, Kc), per_user3),
        full2(w_merged), full2(b_merged),
        full2(params["g_ne"]), full2(params["b_ne"]),
        full2(params["g_u1"]), full2(params["b_u1"]),
        pl.BlockSpec((pl.Squeezed(), S, TITLE_DIM), per_user3),
        full2(ann_w1), full2(ann_w2), full2(ann_b), full2(ann_v),
        full2(gru_wx), full2(gru_wh), full2(gru_bx), full2(gru_bh),
        full2(params["g_u2"]), full2(params["b_u2"]),
    ]
    out_specs = pl.BlockSpec((pl.Squeezed(), S, TITLE_DIM), per_user3)

    # advisory cost estimate for XLA scheduling around the tiny custom call
    flops = B * int(
        2 * P * N * Kc * TITLE_DIM                        # merged conv matmul
        + 2 * (S + N) * TITLE_DIM * ANN_HIDDEN_PAD        # ANN projections
        + 4 * S * N * ANN_HIDDEN_PAD                      # ANN scores
        + 6 * S * N * TITLE_DIM                           # interest/scores2/ctx
        + 2 * 2 * N * TITLE_DIM * 3 * GATE_STRIDE)        # GRU gx + gh (fused)
    trans = B * int(S * N * ANN_HIDDEN_PAD + 3 * N * TITLE_DIM + 4 * S * N)
    bytes_acc = int(sum(a.size * a.dtype.itemsize for a in kernel_inputs)
                    + 4 * B * S * TITLE_DIM)

    user_rep = pl.pallas_call(
        functools.partial(user_encoder_kernel, n_news=N, n_pos=P),
        out_shape=jax.ShapeDtypeStruct((B, S, TITLE_DIM), jnp.float32),
        grid_spec=pltpu.PrefetchScalarGridSpec(
            num_scalar_prefetch=0, grid=(B,),
            in_specs=in_specs, out_specs=out_specs,
            scratch_shapes=[pltpu.VMEM((N, TITLE_DIM), jnp.float32)]),
        compiler_params=pltpu.CompilerParams(
            dimension_semantics=("parallel",)),            # shards users on v7x TCs
        cost_estimate=pl.CostEstimate(flops=flops, transcendentals=trans,
                                      bytes_accessed=bytes_acc),
    )(*kernel_inputs)
    return user_rep


def init_params(key, word_dim, entity_dim, cate_size, cate_emb_dim):
    ks = jax.random.split(key, 12)

    def w(k, shape, scale=0.1):
        return jax.random.normal(k, shape, jnp.float32) * scale

    ent_feat_dim = entity_dim + cate_emb_dim
    return {
        # PCNN
        "cate_table": w(ks[0], (cate_size, cate_emb_dim)),
        "w_conv_w": w(ks[1], (KWIN * word_dim, N_FILTERS)),
        "b_conv_w": jnp.zeros((1, N_FILTERS), jnp.float32),
        "w_conv_e": w(ks[2], (KWIN * ent_feat_dim, N_FILTERS)),
        "b_conv_e": jnp.zeros((1, N_FILTERS), jnp.float32),
        # LayerNorms (PyTorch default init: gamma=1, beta=0)
        "g_ne": jnp.ones((1, TITLE_DIM), jnp.float32),
        "b_ne": jnp.zeros((1, TITLE_DIM), jnp.float32),
        "g_u1": jnp.ones((1, TITLE_DIM), jnp.float32),
        "b_u1": jnp.zeros((1, TITLE_DIM), jnp.float32),
        "g_u2": jnp.ones((1, TITLE_DIM), jnp.float32),
        "b_u2": jnp.zeros((1, TITLE_DIM), jnp.float32),
        # ANN additive attention (hidden=100; lane-padded to 128 in the wrapper)
        "ann_w1": w(ks[3], (TITLE_DIM, ANN_HIDDEN)),
        "ann_w2": w(ks[4], (TITLE_DIM, ANN_HIDDEN)),
        "ann_b": jnp.zeros((1, ANN_HIDDEN), jnp.float32),
        "ann_v": w(ks[5], (1, ANN_HIDDEN)),
        # ARNN GRU, per-gate weights (gate order: r, z, n) — fused in wrapper
        "gru_wx": w(ks[6], (3, TITLE_DIM, TITLE_DIM)),
        "gru_wh": w(ks[7], (3, TITLE_DIM, TITLE_DIM)),
        "gru_bx": jnp.zeros((3, 1, TITLE_DIM), jnp.float32),
        "gru_bh": jnp.zeros((3, 1, TITLE_DIM), jnp.float32),
    }


if __name__ == "__main__":
    key = jax.random.PRNGKey(0)
    # small shapes consistent with the module (batch = independent users)
    batch_users = 2
    user_clicked_new_num = 8    # N clicked news in the user history
    title_word_size = 8         # words per title
    word_dim = 16
    entity_dim = 16
    entity_cate_size = 10
    cate_emb_dim = 16
    sample_num = 2              # candidate news

    k1, k2, k3, k4, k5 = jax.random.split(key, 5)
    word_embedding = jax.random.normal(
        k1, (batch_users, user_clicked_new_num, title_word_size, word_dim),
        jnp.float32)
    entity_embedding = jax.random.normal(
        k2, (batch_users, user_clicked_new_num, title_word_size, entity_dim),
        jnp.float32)
    entity_cate = jax.random.randint(
        k3, (batch_users, user_clicked_new_num, title_word_size),
        0, entity_cate_size)
    candidate_new_rep = jax.random.normal(
        k4, (batch_users, sample_num, TITLE_DIM), jnp.float32)

    params = init_params(k5, word_dim, entity_dim, entity_cate_size, cate_emb_dim)

    out = user_encoder_forward(params, word_embedding, entity_embedding,
                               entity_cate, candidate_new_rep)
    out = jax.block_until_ready(out)
    assert out.shape == (batch_users, sample_num, TITLE_DIM)
    assert bool(jnp.all(jnp.isfinite(out)))
    print("KERNEL_OK")
</pallas_src>

<mosaic_0001>
module attributes {stable_mosaic.version = 11 : i64} {
  func.func @user_encoder_kernel(%arg0: i32, %arg1: memref<1x48x144xbf16, #tpu.memory_space<vmem>>, %arg2: memref<144x160xbf16, #tpu.memory_space<vmem>>, %arg3: memref<1x160xf32, #tpu.memory_space<vmem>>, %arg4: memref<1x160xf32, #tpu.memory_space<vmem>>, %arg5: memref<1x160xf32, #tpu.memory_space<vmem>>, %arg6: memref<1x160xf32, #tpu.memory_space<vmem>>, %arg7: memref<1x160xf32, #tpu.memory_space<vmem>>, %arg8: memref<1x2x160xbf16, #tpu.memory_space<vmem>>, %arg9: memref<160x128xbf16, #tpu.memory_space<vmem>>, %arg10: memref<160x128xbf16, #tpu.memory_space<vmem>>, %arg11: memref<1x128xf32, #tpu.memory_space<vmem>>, %arg12: memref<1x128xf32, #tpu.memory_space<vmem>>, %arg13: memref<160x768xbf16, #tpu.memory_space<vmem>>, %arg14: memref<160x768xbf16, #tpu.memory_space<vmem>>, %arg15: memref<1x768xf32, #tpu.memory_space<vmem>>, %arg16: memref<1x768xf32, #tpu.memory_space<vmem>>, %arg17: memref<1x160xf32, #tpu.memory_space<vmem>>, %arg18: memref<1x160xf32, #tpu.memory_space<vmem>>, %arg19: memref<1x2x160xf32, #tpu.memory_space<vmem>>, %arg20: memref<8x160xf32, #tpu.memory_space<vmem>>) attributes {dimension_semantics = [#tpu.dimension_semantics<parallel>], iteration_bounds = array<i64: 2>, scalar_prefetch = 0 : i64, scratch_operands = 1 : i64, tpu.core_type = #tpu.core_type<tc>, window_params = [{transform_indices = @transform_0, window_bounds = array<i64: 1, 48, 144>}, {pipeline_mode = #tpu.pipeline_mode<synchronous>, transform_indices = @transform_1, window_bounds = array<i64: 144, 160>}, {pipeline_mode = #tpu.pipeline_mode<synchronous>, transform_indices = @transform_2, window_bounds = array<i64: 1, 160>}, {pipeline_mode = #tpu.pipeline_mode<synchronous>, transform_indices = @transform_3, window_bounds = array<i64: 1, 160>}, {pipeline_mode = #tpu.pipeline_mode<synchronous>, transform_indices = @transform_4, window_bounds = array<i64: 1, 160>}, {pipeline_mode = #tpu.pipeline_mode<synchronous>, transform_indices = @transform_5, window_bounds = array<i64: 1, 160>}, {pipeline_mode = #tpu.pipeline_mode<synchronous>, transform_indices = @transform_6, window_bounds = array<i64: 1, 160>}, {transform_indices = @transform_7, window_bounds = array<i64: 1, 2, 160>}, {pipeline_mode = #tpu.pipeline_mode<synchronous>, transform_indices = @transform_8, window_bounds = array<i64: 160, 128>}, {pipeline_mode = #tpu.pipeline_mode<synchronous>, transform_indices = @transform_9, window_bounds = array<i64: 160, 128>}, {pipeline_mode = #tpu.pipeline_mode<synchronous>, transform_indices = @transform_10, window_bounds = array<i64: 1, 128>}, {pipeline_mode = #tpu.pipeline_mode<synchronous>, transform_indices = @transform_11, window_bounds = array<i64: 1, 128>}, {pipeline_mode = #tpu.pipeline_mode<synchronous>, transform_indices = @transform_12, window_bounds = array<i64: 160, 768>}, {pipeline_mode = #tpu.pipeline_mode<synchronous>, transform_indices = @transform_13, window_bounds = array<i64: 160, 768>}, {pipeline_mode = #tpu.pipeline_mode<synchronous>, transform_indices = @transform_14, window_bounds = array<i64: 1, 768>}, {pipeline_mode = #tpu.pipeline_mode<synchronous>, transform_indices = @transform_15, window_bounds = array<i64: 1, 768>}, {pipeline_mode = #tpu.pipeline_mode<synchronous>, transform_indices = @transform_16, window_bounds = array<i64: 1, 160>}, {pipeline_mode = #tpu.pipeline_mode<synchronous>, transform_indices = @transform_17, window_bounds = array<i64: 1, 160>}, {transform_indices = @transform_18, window_bounds = array<i64: 1, 2, 160>}]} {
    %c0 = arith.constant 0 : index
    %c0_0 = arith.constant 0 : index
    %c0_1 = arith.constant 0 : index
    %0 = vector.load %arg1[%c0, %c0_0, %c0_1] : memref<1x48x144xbf16, #tpu.memory_space<vmem>>, vector<1x48x144xbf16>
    %1 = vector.shape_cast %0 : vector<1x48x144xbf16> to vector<48x144xbf16>
    %c0_2 = arith.constant 0 : index
    %c0_3 = arith.constant 0 : index
    %2 = vector.load %arg2[%c0_2, %c0_3] : memref<144x160xbf16, #tpu.memory_space<vmem>>, vector<144x160xbf16>
    %cst = arith.constant dense<0.000000e+00> : vector<48x160xf32>
    %3 = tpu.matmul %1, %2, %cst {dimension_numbers = #tpu.dot_dimension_numbers<[1], [0], [0], [1], [0, 0, 1, 1], [], []>} : vector<48x144xbf16>, vector<144x160xbf16>, vector<48x160xf32> -> vector<48x160xf32>
    %c0_4 = arith.constant 0 : index
    %c0_5 = arith.constant 0 : index
    %4 = vector.load %arg3[%c0_4, %c0_5] : memref<1x160xf32, #tpu.memory_space<vmem>>, vector<1x160xf32>
    %5 = vector.broadcast %4 : vector<1x160xf32> to vector<48x160xf32>
    %6 = arith.addf %3, %5 : vector<48x160xf32>
    %cst_6 = arith.constant 0.000000e+00 : f32
    %7 = vector.broadcast %cst_6 : f32 to vector<48x160xf32>
    %8 = arith.maximumf %6, %7 : vector<48x160xf32>
    %9 = vector.extract_strided_slice %8 {offsets = [0, 0], sizes = [8, 160], strides = [1, 1]} : vector<48x160xf32> to vector<8x160xf32>
    %10 = vector.extract_strided_slice %8 {offsets = [8, 0], sizes = [8, 160], strides = [1, 1]} : vector<48x160xf32> to vector<8x160xf32>
    %11 = arith.maximumf %9, %10 : vector<8x160xf32>
    %12 = vector.extract_strided_slice %8 {offsets = [16, 0], sizes = [8, 160], strides = [1, 1]} : vector<48x160xf32> to vector<8x160xf32>
    %13 = arith.maximumf %11, %12 : vector<8x160xf32>
    %14 = vector.extract_strided_slice %8 {offsets = [24, 0], sizes = [8, 160], strides = [1, 1]} : vector<48x160xf32> to vector<8x160xf32>
    %15 = arith.maximumf %13, %14 : vector<8x160xf32>
    %16 = vector.extract_strided_slice %8 {offsets = [32, 0], sizes = [8, 160], strides = [1, 1]} : vector<48x160xf32> to vector<8x160xf32>
    %17 = arith.maximumf %15, %16 : vector<8x160xf32>
    %18 = vector.extract_strided_slice %8 {offsets = [40, 0], sizes = [8, 160], strides = [1, 1]} : vector<48x160xf32> to vector<8x160xf32>
    %19 = arith.maximumf %17, %18 : vector<8x160xf32>
    %c0_7 = arith.constant 0 : index
    %c0_8 = arith.constant 0 : index
    %20 = vector.load %arg4[%c0_7, %c0_8] : memref<1x160xf32, #tpu.memory_space<vmem>>, vector<1x160xf32>
    %c0_9 = arith.constant 0 : index
    %c0_10 = arith.constant 0 : index
    %21 = vector.load %arg5[%c0_9, %c0_10] : memref<1x160xf32, #tpu.memory_space<vmem>>, vector<1x160xf32>
    %cst_11 = arith.constant dense<0.000000e+00> : vector<8xf32>
    %22 = vector.multi_reduction <add>, %19, %cst_11 [1] : vector<8x160xf32> to vector<8xf32>
    %23 = vector.shape_cast %22 : vector<8xf32> to vector<8x1xf32>
    %cst_12 = arith.constant 1.600000e+02 : f32
    %24 = vector.broadcast %cst_12 : f32 to vector<8x1xf32>
    %25 = arith.divf %23, %24 : vector<8x1xf32>
    %26 = vector.broadcast %25 : vector<8x1xf32> to vector<8x160xf32>
    %27 = arith.subf %19, %26 : vector<8x160xf32>
    %28 = arith.mulf %27, %27 : vector<8x160xf32>
    %cst_13 = arith.constant dense<0.000000e+00> : vector<8xf32>
    %29 = vector.multi_reduction <add>, %28, %cst_13 [1] : vector<8x160xf32> to vector<8xf32>
    %30 = vector.shape_cast %29 : vector<8xf32> to vector<8x1xf32>
    %cst_14 = arith.constant 1.600000e+02 : f32
    %31 = vector.broadcast %cst_14 : f32 to vector<8x1xf32>
    %32 = arith.divf %30, %31 : vector<8x1xf32>
    %33 = vector.broadcast %25 : vector<8x1xf32> to vector<8x160xf32>
    %34 = arith.subf %19, %33 : vector<8x160xf32>
    %cst_15 = arith.constant 9.99999974E-6 : f32
    %35 = vector.broadcast %cst_15 : f32 to vector<8x1xf32>
    %36 = arith.addf %32, %35 : vector<8x1xf32>
    %37 = math.rsqrt %36 : vector<8x1xf32>
    %38 = vector.broadcast %37 : vector<8x1xf32> to vector<8x160xf32>
    %39 = arith.mulf %34, %38 : vector<8x160xf32>
    %40 = vector.broadcast %20 : vector<1x160xf32> to vector<8x160xf32>
    %41 = arith.mulf %39, %40 : vector<8x160xf32>
    %42 = vector.broadcast %21 : vector<1x160xf32> to vector<8x160xf32>
    %43 = arith.addf %41, %42 : vector<8x160xf32>
    %c0_16 = arith.constant 0 : index
    %c0_17 = arith.constant 0 : index
    %44 = vector.load %arg6[%c0_16, %c0_17] : memref<1x160xf32, #tpu.memory_space<vmem>>, vector<1x160xf32>
    %c0_18 = arith.constant 0 : index
    %c0_19 = arith.constant 0 : index
    %45 = vector.load %arg7[%c0_18, %c0_19] : memref<1x160xf32, #tpu.memory_space<vmem>>, vector<1x160xf32>
    %cst_20 = arith.constant dense<0.000000e+00> : vector<8xf32>
    %46 = vector.multi_reduction <add>, %43, %cst_20 [1] : vector<8x160xf32> to vector<8xf32>
    %47 = vector.shape_cast %46 : vector<8xf32> to vector<8x1xf32>
    %cst_21 = arith.constant 1.600000e+02 : f32
    %48 = vector.broadcast %cst_21 : f32 to vector<8x1xf32>
    %49 = arith.divf %47, %48 : vector<8x1xf32>
    %50 = vector.broadcast %49 : vector<8x1xf32> to vector<8x160xf32>
    %51 = arith.subf %43, %50 : vector<8x160xf32>
    %52 = arith.mulf %51, %51 : vector<8x160xf32>
    %cst_22 = arith.constant dense<0.000000e+00> : vector<8xf32>
    %53 = vector.multi_reduction <add>, %52, %cst_22 [1] : vector<8x160xf32> to vector<8xf32>
    %54 = vector.shape_cast %53 : vector<8xf32> to vector<8x1xf32>
    %cst_23 = arith.constant 1.600000e+02 : f32
    %55 = vector.broadcast %cst_23 : f32 to vector<8x1xf32>
    %56 = arith.divf %54, %55 : vector<8x1xf32>
    %57 = vector.broadcast %49 : vector<8x1xf32> to vector<8x160xf32>
    %58 = arith.subf %43, %57 : vector<8x160xf32>
    %cst_24 = arith.constant 9.99999974E-6 : f32
    %59 = vector.broadcast %cst_24 : f32 to vector<8x1xf32>
    %60 = arith.addf %56, %59 : vector<8x1xf32>
    %61 = math.rsqrt %60 : vector<8x1xf32>
    %62 = vector.broadcast %61 : vector<8x1xf32> to vector<8x160xf32>
    %63 = arith.mulf %58, %62 : vector<8x160xf32>
    %64 = vector.broadcast %44 : vector<1x160xf32> to vector<8x160xf32>
    %65 = arith.mulf %63, %64 : vector<8x160xf32>
    %66 = vector.broadcast %45 : vector<1x160xf32> to vector<8x160xf32>
    %67 = arith.addf %65, %66 : vector<8x160xf32>
    %68 = arith.truncf %67 : vector<8x160xf32> to vector<8x160xbf16>
    %c0_25 = arith.constant 0 : index
    %c0_26 = arith.constant 0 : index
    %c0_27 = arith.constant 0 : index
    %69 = vector.load %arg8[%c0_25, %c0_26, %c0_27] : memref<1x2x160xbf16, #tpu.memory_space<vmem>>, vector<1x2x160xbf16>
    %70 = vector.shape_cast %69 : vector<1x2x160xbf16> to vector<2x160xbf16>
    %c0_28 = arith.constant 0 : index
    %c0_29 = arith.constant 0 : index
    %71 = vector.load %arg9[%c0_28, %c0_29] : memref<160x128xbf16, #tpu.memory_space<vmem>>, vector<160x128xbf16>
    %cst_30 = arith.constant dense<0.000000e+00> : vector<2x128xf32>
    %72 = tpu.matmul %70, %71, %cst_30 {dimension_numbers = #tpu.dot_dimension_numbers<[1], [0], [0], [1], [0, 0, 1, 1], [], []>} : vector<2x160xbf16>, vector<160x128xbf16>, vector<2x128xf32> -> vector<2x128xf32>
    %c0_31 = arith.constant 0 : index
    %c0_32 = arith.constant 0 : index
    %73 = vector.load %arg10[%c0_31, %c0_32] : memref<160x128xbf16, #tpu.memory_space<vmem>>, vector<160x128xbf16>
    %cst_33 = arith.constant dense<0.000000e+00> : vector<8x128xf32>
    %74 = tpu.matmul %68, %73, %cst_33 {dimension_numbers = #tpu.dot_dimension_numbers<[1], [0], [0], [1], [0, 0, 1, 1], [], []>} : vector<8x160xbf16>, vector<160x128xbf16>, vector<8x128xf32> -> vector<8x128xf32>
    %75 = vector.shape_cast %72 : vector<2x128xf32> to vector<2x1x128xf32>
    %76 = vector.shape_cast %74 : vector<8x128xf32> to vector<1x8x128xf32>
    %77 = vector.broadcast %75 : vector<2x1x128xf32> to vector<2x8x128xf32>
    %78 = vector.broadcast %76 : vector<1x8x128xf32> to vector<2x8x128xf32>
    %79 = arith.addf %77, %78 : vector<2x8x128xf32>
    %c0_34 = arith.constant 0 : index
    %c0_35 = arith.constant 0 : index
    %80 = vector.load %arg11[%c0_34, %c0_35] : memref<1x128xf32, #tpu.memory_space<vmem>>, vector<1x128xf32>
    %81 = vector.shape_cast %80 : vector<1x128xf32> to vector<1x1x128xf32>
    %82 = vector.broadcast %81 : vector<1x1x128xf32> to vector<2x8x128xf32>
    %83 = arith.addf %79, %82 : vector<2x8x128xf32>
    %84 = math.tanh %83 : vector<2x8x128xf32>
    %c0_36 = arith.constant 0 : index
    %c0_37 = arith.constant 0 : index
    %85 = vector.load %arg12[%c0_36, %c0_37] : memref<1x128xf32, #tpu.memory_space<vmem>>, vector<1x128xf32>
    %86 = vector.shape_cast %85 : vector<1x128xf32> to vector<1x1x128xf32>
    %87 = vector.broadcast %86 : vector<1x1x128xf32> to vector<2x8x128xf32>
    %88 = arith.mulf %84, %87 : vector<2x8x128xf32>
    %cst_38 = arith.constant dense<0.000000e+00> : vector<2x8xf32>
    %89 = vector.multi_reduction <add>, %88, %cst_38 [2] : vector<2x8x128xf32> to vector<2x8xf32>
    %cst_39 = arith.constant dense<0xFF800000> : vector<2xf32>
    %90 = vector.multi_reduction <maximumf>, %89, %cst_39 [1] : vector<2x8xf32> to vector<2xf32>
    %91 = vector.shape_cast %90 : vector<2xf32> to vector<2x1xf32>
    %92 = vector.broadcast %91 : vector<2x1xf32> to vector<2x8xf32>
    %93 = arith.subf %89, %92 : vector<2x8xf32>
    %94 = math.exp %93 : vector<2x8xf32>
    %cst_40 = arith.constant dense<0.000000e+00> : vector<2xf32>
    %95 = vector.multi_reduction <add>, %94, %cst_40 [1] : vector<2x8xf32> to vector<2xf32>
    %96 = vector.shape_cast %95 : vector<2xf32> to vector<2x1xf32>
    %97 = tpu.reciprocal %96 {approx = true} : vector<2x1xf32> -> vector<2x1xf32>
    %98 = vector.broadcast %97 : vector<2x1xf32> to vector<2x8xf32>
    %99 = arith.mulf %94, %98 : vector<2x8xf32>
    %100 = arith.truncf %99 : vector<2x8xf32> to vector<2x8xbf16>
    %cst_41 = arith.constant dense<0.000000e+00> : vector<2x160xf32>
    %101 = tpu.matmul %100, %68, %cst_41 {dimension_numbers = #tpu.dot_dimension_numbers<[1], [0], [0], [1], [0, 0, 1, 1], [], []>} : vector<2x8xbf16>, vector<8x160xbf16>, vector<2x160xf32> -> vector<2x160xf32>
    %c0_42 = arith.constant 0 : index
    %c0_43 = arith.constant 0 : index
    %102 = vector.load %arg13[%c0_42, %c0_43] : memref<160x768xbf16, #tpu.memory_space<vmem>>, vector<160x768xbf16>
    %cst_44 = arith.constant dense<0.000000e+00> : vector<8x768xf32>
    %103 = tpu.matmul %68, %102, %cst_44 {dimension_numbers = #tpu.dot_dimension_numbers<[1], [0], [0], [1], [0, 0, 1, 1], [], []>} : vector<8x160xbf16>, vector<160x768xbf16>, vector<8x768xf32> -> vector<8x768xf32>
    %c0_45 = arith.constant 0 : index
    %c0_46 = arith.constant 0 : index
    %104 = vector.load %arg15[%c0_45, %c0_46] : memref<1x768xf32, #tpu.memory_space<vmem>>, vector<1x768xf32>
    %105 = vector.broadcast %104 : vector<1x768xf32> to vector<8x768xf32>
    %106 = arith.addf %103, %105 : vector<8x768xf32>
    %c0_47 = arith.constant 0 : index
    %c0_48 = arith.constant 0 : index
    %107 = vector.load %arg14[%c0_47, %c0_48] : memref<160x768xbf16, #tpu.memory_space<vmem>>, vector<160x768xbf16>
    %c0_49 = arith.constant 0 : index
    %c0_50 = arith.constant 0 : index
    %108 = vector.load %arg16[%c0_49, %c0_50] : memref<1x768xf32, #tpu.memory_space<vmem>>, vector<1x768xf32>
    %cst_51 = arith.constant 0.000000e+00 : f32
    %109 = vector.broadcast %cst_51 : f32 to vector<1x160xf32>
    %110 = arith.truncf %109 : vector<1x160xf32> to vector<1x160xbf16>
    %cst_52 = arith.constant dense<0.000000e+00> : vector<1x768xf32>
    %111 = tpu.matmul %110, %107, %cst_52 {dimension_numbers = #tpu.dot_dimension_numbers<[1], [0], [0], [1], [0, 0, 1, 1], [], []>} : vector<1x160xbf16>, vector<160x768xbf16>, vector<1x768xf32> -> vector<1x768xf32>
    %112 = arith.addf %111, %108 : vector<1x768xf32>
    %113 = vector.extract_strided_slice %106 {offsets = [0, 0], sizes = [1, 768], strides = [1, 1]} : vector<8x768xf32> to vector<1x768xf32>
    %114 = vector.extract_strided_slice %113 {offsets = [0, 0], sizes = [1, 160], strides = [1, 1]} : vector<1x768xf32> to vector<1x160xf32>
    %115 = vector.extract_strided_slice %112 {offsets = [0, 0], sizes = [1, 160], strides = [1, 1]} : vector<1x768xf32> to vector<1x160xf32>
    %116 = arith.addf %114, %115 : vector<1x160xf32>
    %117 = arith.negf %116 : vector<1x160xf32>
    %118 = math.exp %117 : vector<1x160xf32>
    %cst_53 = arith.constant 1.000000e+00 : f32
    %119 = vector.broadcast %cst_53 : f32 to vector<1x160xf32>
    %120 = arith.addf %119, %118 : vector<1x160xf32>
    %121 = arith.divf %119, %120 : vector<1x160xf32>
    %122 = vector.extract_strided_slice %113 {offsets = [0, 256], sizes = [1, 160], strides = [1, 1]} : vector<1x768xf32> to vector<1x160xf32>
    %123 = vector.extract_strided_slice %112 {offsets = [0, 256], sizes = [1, 160], strides = [1, 1]} : vector<1x768xf32> to vector<1x160xf32>
    %124 = arith.addf %122, %123 : vector<1x160xf32>
    %125 = arith.negf %124 : vector<1x160xf32>
    %126 = math.exp %125 : vector<1x160xf32>
    %cst_54 = arith.constant 1.000000e+00 : f32
    %127 = vector.broadcast %cst_54 : f32 to vector<1x160xf32>
    %128 = arith.addf %127, %126 : vector<1x160xf32>
    %129 = arith.divf %127, %128 : vector<1x160xf32>
    %130 = vector.extract_strided_slice %113 {offsets = [0, 512], sizes = [1, 160], strides = [1, 1]} : vector<1x768xf32> to vector<1x160xf32>
    %131 = vector.extract_strided_slice %112 {offsets = [0, 512], sizes = [1, 160], strides = [1, 1]} : vector<1x768xf32> to vector<1x160xf32>
    %132 = arith.mulf %121, %131 : vector<1x160xf32>
    %133 = arith.addf %130, %132 : vector<1x160xf32>
    %134 = math.tanh %133 : vector<1x160xf32>
    %cst_55 = arith.constant 1.000000e+00 : f32
    %135 = vector.broadcast %cst_55 : f32 to vector<1x160xf32>
    %136 = arith.subf %135, %129 : vector<1x160xf32>
    %137 = arith.mulf %136, %134 : vector<1x160xf32>
    %138 = arith.mulf %129, %109 : vector<1x160xf32>
    %139 = arith.addf %137, %138 : vector<1x160xf32>
    %c0_56 = arith.constant 0 : index
    %c0_57 = arith.constant 0 : index
    %140 = vector.load %arg20[%c0_56, %c0_57] : memref<8x160xf32, #tpu.memory_space<vmem>>, vector<1x160xf32>
    tpu.vector_store %arg20[%c0_56, %c0_57], %139 {strides = array<i32>} : memref<8x160xf32, #tpu.memory_space<vmem>>, vector<1x160xf32>,
    %141 = arith.truncf %139 : vector<1x160xf32> to vector<1x160xbf16>
    %cst_58 = arith.constant dense<0.000000e+00> : vector<1x768xf32>
    %142 = tpu.matmul %141, %107, %cst_58 {dimension_numbers = #tpu.dot_dimension_numbers<[1], [0], [0], [1], [0, 0, 1, 1], [], []>} : vector<1x160xbf16>, vector<160x768xbf16>, vector<1x768xf32> -> vector<1x768xf32>
    %143 = arith.addf %142, %108 : vector<1x768xf32>
    %144 = vector.extract_strided_slice %106 {offsets = [1, 0], sizes = [1, 768], strides = [1, 1]} : vector<8x768xf32> to vector<1x768xf32>
    %145 = vector.extract_strided_slice %144 {offsets = [0, 0], sizes = [1, 160], strides = [1, 1]} : vector<1x768xf32> to vector<1x160xf32>
    %146 = vector.extract_strided_slice %143 {offsets = [0, 0], sizes = [1, 160], strides = [1, 1]} : vector<1x768xf32> to vector<1x160xf32>
    %147 = arith.addf %145, %146 : vector<1x160xf32>
    %148 = arith.negf %147 : vector<1x160xf32>
    %149 = math.exp %148 : vector<1x160xf32>
    %cst_59 = arith.constant 1.000000e+00 : f32
    %150 = vector.broadcast %cst_59 : f32 to vector<1x160xf32>
    %151 = arith.addf %150, %149 : vector<1x160xf32>
    %152 = arith.divf %150, %151 : vector<1x160xf32>
    %153 = vector.extract_strided_slice %144 {offsets = [0, 256], sizes = [1, 160], strides = [1, 1]} : vector<1x768xf32> to vector<1x160xf32>
    %154 = vector.extract_strided_slice %143 {offsets = [0, 256], sizes = [1, 160], strides = [1, 1]} : vector<1x768xf32> to vector<1x160xf32>
    %155 = arith.addf %153, %154 : vector<1x160xf32>
    %156 = arith.negf %155 : vector<1x160xf32>
    %157 = math.exp %156 : vector<1x160xf32>
    %cst_60 = arith.constant 1.000000e+00 : f32
    %158 = vector.broadcast %cst_60 : f32 to vector<1x160xf32>
    %159 = arith.addf %158, %157 : vector<1x160xf32>
    %160 = arith.divf %158, %159 : vector<1x160xf32>
    %161 = vector.extract_strided_slice %144 {offsets = [0, 512], sizes = [1, 160], strides = [1, 1]} : vector<1x768xf32> to vector<1x160xf32>
    %162 = vector.extract_strided_slice %143 {offsets = [0, 512], sizes = [1, 160], strides = [1, 1]} : vector<1x768xf32> to vector<1x160xf32>
    %163 = arith.mulf %152, %162 : vector<1x160xf32>
    %164 = arith.addf %161, %163 : vector<1x160xf32>
    %165 = math.tanh %164 : vector<1x160xf32>
    %cst_61 = arith.constant 1.000000e+00 : f32
    %166 = vector.broadcast %cst_61 : f32 to vector<1x160xf32>
    %167 = arith.subf %166, %160 : vector<1x160xf32>
    %168 = arith.mulf %167, %165 : vector<1x160xf32>
    %169 = arith.mulf %160, %139 : vector<1x160xf32>
    %170 = arith.addf %168, %169 : vector<1x160xf32>
    %c1 = arith.constant 1 : index
    %c0_62 = arith.constant 0 : index
    %171 = vector.load %arg20[%c1, %c0_62] : memref<8x160xf32, #tpu.memory_space<vmem>>, vector<1x160xf32>
    tpu.vector_store %arg20[%c1, %c0_62], %170 {strides = array<i32>} : memref<8x160xf32, #tpu.memory_space<vmem>>, vector<1x160xf32>,
    %172 = arith.truncf %170 : vector<1x160xf32> to vector<1x160xbf16>
    %cst_63 = arith.constant dense<0.000000e+00> : vector<1x768xf32>
    %173 = tpu.matmul %172, %107, %cst_63 {dimension_numbers = #tpu.dot_dimension_numbers<[1], [0], [0], [1], [0, 0, 1, 1], [], []>} : vector<1x160xbf16>, vector<160x768xbf16>, vector<1x768xf32> -> vector<1x768xf32>
    %174 = arith.addf %173, %108 : vector<1x768xf32>
    %175 = vector.extract_strided_slice %106 {offsets = [2, 0], sizes = [1, 768], strides = [1, 1]} : vector<8x768xf32> to vector<1x768xf32>
    %176 = vector.extract_strided_slice %175 {offsets = [0, 0], sizes = [1, 160], strides = [1, 1]} : vector<1x768xf32> to vector<1x160xf32>
    %177 = vector.extract_strided_slice %174 {offsets = [0, 0], sizes = [1, 160], strides = [1, 1]} : vector<1x768xf32> to vector<1x160xf32>
    %178 = arith.addf %176, %177 : vector<1x160xf32>
    %179 = arith.negf %178 : vector<1x160xf32>
    %180 = math.exp %179 : vector<1x160xf32>
    %cst_64 = arith.constant 1.000000e+00 : f32
    %181 = vector.broadcast %cst_64 : f32 to vector<1x160xf32>
    %182 = arith.addf %181, %180 : vector<1x160xf32>
    %183 = arith.divf %181, %182 : vector<1x160xf32>
    %184 = vector.extract_strided_slice %175 {offsets = [0, 256], sizes = [1, 160], strides = [1, 1]} : vector<1x768xf32> to vector<1x160xf32>
    %185 = vector.extract_strided_slice %174 {offsets = [0, 256], sizes = [1, 160], strides = [1, 1]} : vector<1x768xf32> to vector<1x160xf32>
    %186 = arith.addf %184, %185 : vector<1x160xf32>
    %187 = arith.negf %186 : vector<1x160xf32>
    %188 = math.exp %187 : vector<1x160xf32>
    %cst_65 = arith.constant 1.000000e+00 : f32
    %189 = vector.broadcast %cst_65 : f32 to vector<1x160xf32>
    %190 = arith.addf %189, %188 : vector<1x160xf32>
    %191 = arith.divf %189, %190 : vector<1x160xf32>
    %192 = vector.extract_strided_slice %175 {offsets = [0, 512], sizes = [1, 160], strides = [1, 1]} : vector<1x768xf32> to vector<1x160xf32>
    %193 = vector.extract_strided_slice %174 {offsets = [0, 512], sizes = [1, 160], strides = [1, 1]} : vector<1x768xf32> to vector<1x160xf32>
    %194 = arith.mulf %183, %193 : vector<1x160xf32>
    %195 = arith.addf %192, %194 : vector<1x160xf32>
    %196 = math.tanh %195 : vector<1x160xf32>
    %cst_66 = arith.constant 1.000000e+00 : f32
    %197 = vector.broadcast %cst_66 : f32 to vector<1x160xf32>
    %198 = arith.subf %197, %191 : vector<1x160xf32>
    %199 = arith.mulf %198, %196 : vector<1x160xf32>
    %200 = arith.mulf %191, %170 : vector<1x160xf32>
    %201 = arith.addf %199, %200 : vector<1x160xf32>
    %c2 = arith.constant 2 : index
    %c0_67 = arith.constant 0 : index
    %202 = vector.load %arg20[%c2, %c0_67] : memref<8x160xf32, #tpu.memory_space<vmem>>, vector<1x160xf32>
    tpu.vector_store %arg20[%c2, %c0_67], %201 {strides = array<i32>} : memref<8x160xf32, #tpu.memory_space<vmem>>, vector<1x160xf32>,
    %203 = arith.truncf %201 : vector<1x160xf32> to vector<1x160xbf16>
    %cst_68 = arith.constant dense<0.000000e+00> : vector<1x768xf32>
    %204 = tpu.matmul %203, %107, %cst_68 {dimension_numbers = #tpu.dot_dimension_numbers<[1], [0], [0], [1], [0, 0, 1, 1], [], []>} : vector<1x160xbf16>, vector<160x768xbf16>, vector<1x768xf32> -> vector<1x768xf32>
    %205 = arith.addf %204, %108 : vector<1x768xf32>
    %206 = vector.extract_strided_slice %106 {offsets = [3, 0], sizes = [1, 768], strides = [1, 1]} : vector<8x768xf32> to vector<1x768xf32>
    %207 = vector.extract_strided_slice %206 {offsets = [0, 0], sizes = [1, 160], strides = [1, 1]} : vector<1x768xf32> to vector<1x160xf32>
    %208 = vector.extract_strided_slice %205 {offsets = [0, 0], sizes = [1, 160], strides = [1, 1]} : vector<1x768xf32> to vector<1x160xf32>
    %209 = arith.addf %207, %208 : vector<1x160xf32>
    %210 = arith.negf %209 : vector<1x160xf32>
    %211 = math.exp %210 : vector<1x160xf32>
    %cst_69 = arith.constant 1.000000e+00 : f32
    %212 = vector.broadcast %cst_69 : f32 to vector<1x160xf32>
    %213 = arith.addf %212, %211 : vector<1x160xf32>
    %214 = arith.divf %212, %213 : vector<1x160xf32>
    %215 = vector.extract_strided_slice %206 {offsets = [0, 256], sizes = [1, 160], strides = [1, 1]} : vector<1x768xf32> to vector<1x160xf32>
    %216 = vector.extract_strided_slice %205 {offsets = [0, 256], sizes = [1, 160], strides = [1, 1]} : vector<1x768xf32> to vector<1x160xf32>
    %217 = arith.addf %215, %216 : vector<1x160xf32>
    %218 = arith.negf %217 : vector<1x160xf32>
    %219 = math.exp %218 : vector<1x160xf32>
    %cst_70 = arith.constant 1.000000e+00 : f32
    %220 = vector.broadcast %cst_70 : f32 to vector<1x160xf32>
    %221 = arith.addf %220, %219 : vector<1x160xf32>
    %222 = arith.divf %220, %221 : vector<1x160xf32>
    %223 = vector.extract_strided_slice %206 {offsets = [0, 512], sizes = [1, 160], strides = [1, 1]} : vector<1x768xf32> to vector<1x160xf32>
    %224 = vector.extract_strided_slice %205 {offsets = [0, 512], sizes = [1, 160], strides = [1, 1]} : vector<1x768xf32> to vector<1x160xf32>
    %225 = arith.mulf %214, %224 : vector<1x160xf32>
    %226 = arith.addf %223, %225 : vector<1x160xf32>
    %227 = math.tanh %226 : vector<1x160xf32>
    %cst_71 = arith.constant 1.000000e+00 : f32
    %228 = vector.broadcast %cst_71 : f32 to vector<1x160xf32>
    %229 = arith.subf %228, %222 : vector<1x160xf32>
    %230 = arith.mulf %229, %227 : vector<1x160xf32>
    %231 = arith.mulf %222, %201 : vector<1x160xf32>
    %232 = arith.addf %230, %231 : vector<1x160xf32>
    %c3 = arith.constant 3 : index
    %c0_72 = arith.constant 0 : index
    %233 = vector.load %arg20[%c3, %c0_72] : memref<8x160xf32, #tpu.memory_space<vmem>>, vector<1x160xf32>
    tpu.vector_store %arg20[%c3, %c0_72], %232 {strides = array<i32>} : memref<8x160xf32, #tpu.memory_space<vmem>>, vector<1x160xf32>,
    %234 = arith.truncf %232 : vector<1x160xf32> to vector<1x160xbf16>
    %cst_73 = arith.constant dense<0.000000e+00> : vector<1x768xf32>
    %235 = tpu.matmul %234, %107, %cst_73 {dimension_numbers = #tpu.dot_dimension_numbers<[1], [0], [0], [1], [0, 0, 1, 1], [], []>} : vector<1x160xbf16>, vector<160x768xbf16>, vector<1x768xf32> -> vector<1x768xf32>
    %236 = arith.addf %235, %108 : vector<1x768xf32>
    %237 = vector.extract_strided_slice %106 {offsets = [4, 0], sizes = [1, 768], strides = [1, 1]} : vector<8x768xf32> to vector<1x768xf32>
    %238 = vector.extract_strided_slice %237 {offsets = [0, 0], sizes = [1, 160], strides = [1, 1]} : vector<1x768xf32> to vector<1x160xf32>
    %239 = vector.extract_strided_slice %236 {offsets = [0, 0], sizes = [1, 160], strides = [1, 1]} : vector<1x768xf32> to vector<1x160xf32>
    %240 = arith.addf %238, %239 : vector<1x160xf32>
    %241 = arith.negf %240 : vector<1x160xf32>
    %242 = math.exp %241 : vector<1x160xf32>
    %cst_74 = arith.constant 1.000000e+00 : f32
    %243 = vector.broadcast %cst_74 : f32 to vector<1x160xf32>
    %244 = arith.addf %243, %242 : vector<1x160xf32>
    %245 = arith.divf %243, %244 : vector<1x160xf32>
    %246 = vector.extract_strided_slice %237 {offsets = [0, 256], sizes = [1, 160], strides = [1, 1]} : vector<1x768xf32> to vector<1x160xf32>
    %247 = vector.extract_strided_slice %236 {offsets = [0, 256], sizes = [1, 160], strides = [1, 1]} : vector<1x768xf32> to vector<1x160xf32>
    %248 = arith.addf %246, %247 : vector<1x160xf32>
    %249 = arith.negf %248 : vector<1x160xf32>
    %250 = math.exp %249 : vector<1x160xf32>
    %cst_75 = arith.constant 1.000000e+00 : f32
    %251 = vector.broadcast %cst_75 : f32 to vector<1x160xf32>
    %252 = arith.addf %251, %250 : vector<1x160xf32>
    %253 = arith.divf %251, %252 : vector<1x160xf32>
    %254 = vector.extract_strided_slice %237 {offsets = [0, 512], sizes = [1, 160], strides = [1, 1]} : vector<1x768xf32> to vector<1x160xf32>
    %255 = vector.extract_strided_slice %236 {offsets = [0, 512], sizes = [1, 160], strides = [1, 1]} : vector<1x768xf32> to vector<1x160xf32>
    %256 = arith.mulf %245, %255 : vector<1x160xf32>
    %257 = arith.addf %254, %256 : vector<1x160xf32>
    %258 = math.tanh %257 : vector<1x160xf32>
    %cst_76 = arith.constant 1.000000e+00 : f32
    %259 = vector.broadcast %cst_76 : f32 to vector<1x160xf32>
    %260 = arith.subf %259, %253 : vector<1x160xf32>
    %261 = arith.mulf %260, %258 : vector<1x160xf32>
    %262 = arith.mulf %253, %232 : vector<1x160xf32>
    %263 = arith.addf %261, %262 : vector<1x160xf32>
    %c4 = arith.constant 4 : index
    %c0_77 = arith.constant 0 : index
    %264 = vector.load %arg20[%c4, %c0_77] : memref<8x160xf32, #tpu.memory_space<vmem>>, vector<1x160xf32>
    tpu.vector_store %arg20[%c4, %c0_77], %263 {strides = array<i32>} : memref<8x160xf32, #tpu.memory_space<vmem>>, vector<1x160xf32>,
    %265 = arith.truncf %263 : vector<1x160xf32> to vector<1x160xbf16>
    %cst_78 = arith.constant dense<0.000000e+00> : vector<1x768xf32>
    %266 = tpu.matmul %265, %107, %cst_78 {dimension_numbers = #tpu.dot_dimension_numbers<[1], [0], [0], [1], [0, 0, 1, 1], [], []>} : vector<1x160xbf16>, vector<160x768xbf16>, vector<1x768xf32> -> vector<1x768xf32>
    %267 = arith.addf %266, %108 : vector<1x768xf32>
    %268 = vector.extract_strided_slice %106 {offsets = [5, 0], sizes = [1, 768], strides = [1, 1]} : vector<8x768xf32> to vector<1x768xf32>
    %269 = vector.extract_strided_slice %268 {offsets = [0, 0], sizes = [1, 160], strides = [1, 1]} : vector<1x768xf32> to vector<1x160xf32>
    %270 = vector.extract_strided_slice %267 {offsets = [0, 0], sizes = [1, 160], strides = [1, 1]} : vector<1x768xf32> to vector<1x160xf32>
    %271 = arith.addf %269, %270 : vector<1x160xf32>
    %272 = arith.negf %271 : vector<1x160xf32>
    %273 = math.exp %272 : vector<1x160xf32>
    %cst_79 = arith.constant 1.000000e+00 : f32
    %274 = vector.broadcast %cst_79 : f32 to vector<1x160xf32>
    %275 = arith.addf %274, %273 : vector<1x160xf32>
    %276 = arith.divf %274, %275 : vector<1x160xf32>
    %277 = vector.extract_strided_slice %268 {offsets = [0, 256], sizes = [1, 160], strides = [1, 1]} : vector<1x768xf32> to vector<1x160xf32>
    %278 = vector.extract_strided_slice %267 {offsets = [0, 256], sizes = [1, 160], strides = [1, 1]} : vector<1x768xf32> to vector<1x160xf32>
    %279 = arith.addf %277, %278 : vector<1x160xf32>
    %280 = arith.negf %279 : vector<1x160xf32>
    %281 = math.exp %280 : vector<1x160xf32>
    %cst_80 = arith.constant 1.000000e+00 : f32
    %282 = vector.broadcast %cst_80 : f32 to vector<1x160xf32>
    %283 = arith.addf %282, %281 : vector<1x160xf32>
    %284 = arith.divf %282, %283 : vector<1x160xf32>
    %285 = vector.extract_strided_slice %268 {offsets = [0, 512], sizes = [1, 160], strides = [1, 1]} : vector<1x768xf32> to vector<1x160xf32>
    %286 = vector.extract_strided_slice %267 {offsets = [0, 512], sizes = [1, 160], strides = [1, 1]} : vector<1x768xf32> to vector<1x160xf32>
    %287 = arith.mulf %276, %286 : vector<1x160xf32>
    %288 = arith.addf %285, %287 : vector<1x160xf32>
    %289 = math.tanh %288 : vector<1x160xf32>
    %cst_81 = arith.constant 1.000000e+00 : f32
    %290 = vector.broadcast %cst_81 : f32 to vector<1x160xf32>
    %291 = arith.subf %290, %284 : vector<1x160xf32>
    %292 = arith.mulf %291, %289 : vector<1x160xf32>
    %293 = arith.mulf %284, %263 : vector<1x160xf32>
    %294 = arith.addf %292, %293 : vector<1x160xf32>
    %c5 = arith.constant 5 : index
    %c0_82 = arith.constant 0 : index
    %295 = vector.load %arg20[%c5, %c0_82] : memref<8x160xf32, #tpu.memory_space<vmem>>, vector<1x160xf32>
    tpu.vector_store %arg20[%c5, %c0_82], %294 {strides = array<i32>} : memref<8x160xf32, #tpu.memory_space<vmem>>, vector<1x160xf32>,
    %296 = arith.truncf %294 : vector<1x160xf32> to vector<1x160xbf16>
    %cst_83 = arith.constant dense<0.000000e+00> : vector<1x768xf32>
    %297 = tpu.matmul %296, %107, %cst_83 {dimension_numbers = #tpu.dot_dimension_numbers<[1], [0], [0], [1], [0, 0, 1, 1], [], []>} : vector<1x160xbf16>, vector<160x768xbf16>, vector<1x768xf32> -> vector<1x768xf32>
    %298 = arith.addf %297, %108 : vector<1x768xf32>
    %299 = vector.extract_strided_slice %106 {offsets = [6, 0], sizes = [1, 768], strides = [1, 1]} : vector<8x768xf32> to vector<1x768xf32>
    %300 = vector.extract_strided_slice %299 {offsets = [0, 0], sizes = [1, 160], strides = [1, 1]} : vector<1x768xf32> to vector<1x160xf32>
    %301 = vector.extract_strided_slice %298 {offsets = [0, 0], sizes = [1, 160], strides = [1, 1]} : vector<1x768xf32> to vector<1x160xf32>
    %302 = arith.addf %300, %301 : vector<1x160xf32>
    %303 = arith.negf %302 : vector<1x160xf32>
    %304 = math.exp %303 : vector<1x160xf32>
    %cst_84 = arith.constant 1.000000e+00 : f32
    %305 = vector.broadcast %cst_84 : f32 to vector<1x160xf32>
    %306 = arith.addf %305, %304 : vector<1x160xf32>
    %307 = arith.divf %305, %306 : vector<1x160xf32>
    %308 = vector.extract_strided_slice %299 {offsets = [0, 256], sizes = [1, 160], strides = [1, 1]} : vector<1x768xf32> to vector<1x160xf32>
    %309 = vector.extract_strided_slice %298 {offsets = [0, 256], sizes = [1, 160], strides = [1, 1]} : vector<1x768xf32> to vector<1x160xf32>
    %310 = arith.addf %308, %309 : vector<1x160xf32>
    %311 = arith.negf %310 : vector<1x160xf32>
    %312 = math.exp %311 : vector<1x160xf32>
    %cst_85 = arith.constant 1.000000e+00 : f32
    %313 = vector.broadcast %cst_85 : f32 to vector<1x160xf32>
    %314 = arith.addf %313, %312 : vector<1x160xf32>
    %315 = arith.divf %313, %314 : vector<1x160xf32>
    %316 = vector.extract_strided_slice %299 {offsets = [0, 512], sizes = [1, 160], strides = [1, 1]} : vector<1x768xf32> to vector<1x160xf32>
    %317 = vector.extract_strided_slice %298 {offsets = [0, 512], sizes = [1, 160], strides = [1, 1]} : vector<1x768xf32> to vector<1x160xf32>
    %318 = arith.mulf %307, %317 : vector<1x160xf32>
    %319 = arith.addf %316, %318 : vector<1x160xf32>
    %320 = math.tanh %319 : vector<1x160xf32>
    %cst_86 = arith.constant 1.000000e+00 : f32
    %321 = vector.broadcast %cst_86 : f32 to vector<1x160xf32>
    %322 = arith.subf %321, %315 : vector<1x160xf32>
    %323 = arith.mulf %322, %320 : vector<1x160xf32>
    %324 = arith.mulf %315, %294 : vector<1x160xf32>
    %325 = arith.addf %323, %324 : vector<1x160xf32>
    %c6 = arith.constant 6 : index
    %c0_87 = arith.constant 0 : index
    %326 = vector.load %arg20[%c6, %c0_87] : memref<8x160xf32, #tpu.memory_space<vmem>>, vector<1x160xf32>
    tpu.vector_store %arg20[%c6, %c0_87], %325 {strides = array<i32>} : memref<8x160xf32, #tpu.memory_space<vmem>>, vector<1x160xf32>,
    %327 = arith.truncf %325 : vector<1x160xf32> to vector<1x160xbf16>
    %cst_88 = arith.constant dense<0.000000e+00> : vector<1x768xf32>
    %328 = tpu.matmul %327, %107, %cst_88 {dimension_numbers = #tpu.dot_dimension_numbers<[1], [0], [0], [1], [0, 0, 1, 1], [], []>} : vector<1x160xbf16>, vector<160x768xbf16>, vector<1x768xf32> -> vector<1x768xf32>
    %329 = arith.addf %328, %108 : vector<1x768xf32>
    %330 = vector.extract_strided_slice %106 {offsets = [7, 0], sizes = [1, 768], strides = [1, 1]} : vector<8x768xf32> to vector<1x768xf32>
    %331 = vector.extract_strided_slice %330 {offsets = [0, 0], sizes = [1, 160], strides = [1, 1]} : vector<1x768xf32> to vector<1x160xf32>
    %332 = vector.extract_strided_slice %329 {offsets = [0, 0], sizes = [1, 160], strides = [1, 1]} : vector<1x768xf32> to vector<1x160xf32>
    %333 = arith.addf %331, %332 : vector<1x160xf32>
    %334 = arith.negf %333 : vector<1x160xf32>
    %335 = math.exp %334 : vector<1x160xf32>
    %cst_89 = arith.constant 1.000000e+00 : f32
    %336 = vector.broadcast %cst_89 : f32 to vector<1x160xf32>
    %337 = arith.addf %336, %335 : vector<1x160xf32>
    %338 = arith.divf %336, %337 : vector<1x160xf32>
    %339 = vector.extract_strided_slice %330 {offsets = [0, 256], sizes = [1, 160], strides = [1, 1]} : vector<1x768xf32> to vector<1x160xf32>
    %340 = vector.extract_strided_slice %329 {offsets = [0, 256], sizes = [1, 160], strides = [1, 1]} : vector<1x768xf32> to vector<1x160xf32>
    %341 = arith.addf %339, %340 : vector<1x160xf32>
    %342 = arith.negf %341 : vector<1x160xf32>
    %343 = math.exp %342 : vector<1x160xf32>
    %cst_90 = arith.constant 1.000000e+00 : f32
    %344 = vector.broadcast %cst_90 : f32 to vector<1x160xf32>
    %345 = arith.addf %344, %343 : vector<1x160xf32>
    %346 = arith.divf %344, %345 : vector<1x160xf32>
    %347 = vector.extract_strided_slice %330 {offsets = [0, 512], sizes = [1, 160], strides = [1, 1]} : vector<1x768xf32> to vector<1x160xf32>
    %348 = vector.extract_strided_slice %329 {offsets = [0, 512], sizes = [1, 160], strides = [1, 1]} : vector<1x768xf32> to vector<1x160xf32>
    %349 = arith.mulf %338, %348 : vector<1x160xf32>
    %350 = arith.addf %347, %349 : vector<1x160xf32>
    %351 = math.tanh %350 : vector<1x160xf32>
    %cst_91 = arith.constant 1.000000e+00 : f32
    %352 = vector.broadcast %cst_91 : f32 to vector<1x160xf32>
    %353 = arith.subf %352, %346 : vector<1x160xf32>
    %354 = arith.mulf %353, %351 : vector<1x160xf32>
    %355 = arith.mulf %346, %325 : vector<1x160xf32>
    %356 = arith.addf %354, %355 : vector<1x160xf32>
    %c7 = arith.constant 7 : index
    %c0_92 = arith.constant 0 : index
    %357 = vector.load %arg20[%c7, %c0_92] : memref<8x160xf32, #tpu.memory_space<vmem>>, vector<1x160xf32>
    tpu.vector_store %arg20[%c7, %c0_92], %356 {strides = array<i32>} : memref<8x160xf32, #tpu.memory_space<vmem>>, vector<1x160xf32>,
    %c0_93 = arith.constant 0 : index
    %c0_94 = arith.constant 0 : index
    %358 = vector.load %arg20[%c0_93, %c0_94] : memref<8x160xf32, #tpu.memory_space<vmem>>, vector<8x160xf32>
    %359 = vector.shape_cast %101 : vector<2x160xf32> to vector<2x1x160xf32>
    %360 = vector.shape_cast %358 : vector<8x160xf32> to vector<1x8x160xf32>
    %361 = vector.broadcast %359 : vector<2x1x160xf32> to vector<2x8x160xf32>
    %362 = vector.broadcast %360 : vector<1x8x160xf32> to vector<2x8x160xf32>
    %363 = arith.mulf %361, %362 : vector<2x8x160xf32>
    %cst_95 = arith.constant dense<0.000000e+00> : vector<2x8xf32>
    %364 = vector.multi_reduction <add>, %363, %cst_95 [2] : vector<2x8x160xf32> to vector<2x8xf32>
    %cst_96 = arith.constant dense<0xFF800000> : vector<2xf32>
    %365 = vector.multi_reduction <maximumf>, %364, %cst_96 [1] : vector<2x8xf32> to vector<2xf32>
    %366 = vector.shape_cast %365 : vector<2xf32> to vector<2x1xf32>
    %367 = vector.broadcast %366 : vector<2x1xf32> to vector<2x8xf32>
    %368 = arith.subf %364, %367 : vector<2x8xf32>
    %369 = math.exp %368 : vector<2x8xf32>
    %cst_97 = arith.constant dense<0.000000e+00> : vector<2xf32>
    %370 = vector.multi_reduction <add>, %369, %cst_97 [1] : vector<2x8xf32> to vector<2xf32>
    %371 = vector.shape_cast %370 : vector<2xf32> to vector<2x1xf32>
    %372 = tpu.reciprocal %371 {approx = true} : vector<2x1xf32> -> vector<2x1xf32>
    %373 = vector.broadcast %372 : vector<2x1xf32> to vector<2x8xf32>
    %374 = arith.mulf %369, %373 : vector<2x8xf32>
    %375 = arith.truncf %374 : vector<2x8xf32> to vector<2x8xbf16>
    %376 = arith.truncf %358 : vector<8x160xf32> to vector<8x160xbf16>
    %cst_98 = arith.constant dense<0.000000e+00> : vector<2x160xf32>
    %377 = tpu.matmul %375, %376, %cst_98 {dimension_numbers = #tpu.dot_dimension_numbers<[1], [0], [0], [1], [0, 0, 1, 1], [], []>} : vector<2x8xbf16>, vector<8x160xbf16>, vector<2x160xf32> -> vector<2x160xf32>
    %c0_99 = arith.constant 0 : index
    %c0_100 = arith.constant 0 : index
    %378 = vector.load %arg17[%c0_99, %c0_100] : memref<1x160xf32, #tpu.memory_space<vmem>>, vector<1x160xf32>
    %c0_101 = arith.constant 0 : index
    %c0_102 = arith.constant 0 : index
    %379 = vector.load %arg18[%c0_101, %c0_102] : memref<1x160xf32, #tpu.memory_space<vmem>>, vector<1x160xf32>
    %cst_103 = arith.constant dense<0.000000e+00> : vector<2xf32>
    %380 = vector.multi_reduction <add>, %377, %cst_103 [1] : vector<2x160xf32> to vector<2xf32>
    %381 = vector.shape_cast %380 : vector<2xf32> to vector<2x1xf32>
    %cst_104 = arith.constant 1.600000e+02 : f32
    %382 = vector.broadcast %cst_104 : f32 to vector<2x1xf32>
    %383 = arith.divf %381, %382 : vector<2x1xf32>
    %384 = vector.broadcast %383 : vector<2x1xf32> to vector<2x160xf32>
    %385 = arith.subf %377, %384 : vector<2x160xf32>
    %386 = arith.mulf %385, %385 : vector<2x160xf32>
    %cst_105 = arith.constant dense<0.000000e+00> : vector<2xf32>
    %387 = vector.multi_reduction <add>, %386, %cst_105 [1] : vector<2x160xf32> to vector<2xf32>
    %388 = vector.shape_cast %387 : vector<2xf32> to vector<2x1xf32>
    %cst_106 = arith.constant 1.600000e+02 : f32
    %389 = vector.broadcast %cst_106 : f32 to vector<2x1xf32>
    %390 = arith.divf %388, %389 : vector<2x1xf32>
    %391 = vector.broadcast %383 : vector<2x1xf32> to vector<2x160xf32>
    %392 = arith.subf %377, %391 : vector<2x160xf32>
    %cst_107 = arith.constant 9.99999974E-6 : f32
    %393 = vector.broadcast %cst_107 : f32 to vector<2x1xf32>
    %394 = arith.addf %390, %393 : vector<2x1xf32>
    %395 = math.rsqrt %394 : vector<2x1xf32>
    %396 = vector.broadcast %395 : vector<2x1xf32> to vector<2x160xf32>
    %397 = arith.mulf %392, %396 : vector<2x160xf32>
    %398 = vector.broadcast %378 : vector<1x160xf32> to vector<2x160xf32>
    %399 = arith.mulf %397, %398 : vector<2x160xf32>
    %400 = vector.broadcast %379 : vector<1x160xf32> to vector<2x160xf32>
    %401 = arith.addf %399, %400 : vector<2x160xf32>
    %c0_108 = arith.constant 0 : index
    %c0_109 = arith.constant 0 : index
    %c0_110 = arith.constant 0 : index
    %402 = vector.load %arg19[%c0_108, %c0_109, %c0_110] : memref<1x2x160xf32, #tpu.memory_space<vmem>>, vector<1x2x160xf32>
    %403 = vector.shape_cast %402 : vector<1x2x160xf32> to vector<2x160xf32>
    %404 = vector.shape_cast %401 : vector<2x160xf32> to vector<1x2x160xf32>
    tpu.vector_store %arg19[%c0_108, %c0_109, %c0_110], %404 {strides = array<i32>} : memref<1x2x160xf32, #tpu.memory_space<vmem>>, vector<1x2x160xf32>,
    return
  }
  func.func @transform_0(%arg0: i32) -> (i32, i32, i32) {
    %c0_i32 = arith.constant 0 : i32
    %c0_i32_0 = arith.constant 0 : i32
    %c0_i32_1 = arith.constant 0 : i32
    return %arg0, %c0_i32, %c0_i32_0 : i32, i32, i32
  }
  func.func @transform_1(%arg0: i32) -> (i32, i32) {
    %c0_i32 = arith.constant 0 : i32
    %c0_i32_0 = arith.constant 0 : i32
    %c0_i32_1 = arith.constant 0 : i32
    return %c0_i32, %c0_i32_0 : i32, i32
  }
  func.func @transform_2(%arg0: i32) -> (i32, i32) {
    %c0_i32 = arith.constant 0 : i32
    %c0_i32_0 = arith.constant 0 : i32
    %c0_i32_1 = arith.constant 0 : i32
    return %c0_i32, %c0_i32_0 : i32, i32
  }
  func.func @transform_3(%arg0: i32) -> (i32, i32) {
    %c0_i32 = arith.constant 0 : i32
    %c0_i32_0 = arith.constant 0 : i32
    %c0_i32_1 = arith.constant 0 : i32
    return %c0_i32, %c0_i32_0 : i32, i32
  }
  func.func @transform_4(%arg0: i32) -> (i32, i32) {
    %c0_i32 = arith.constant 0 : i32
    %c0_i32_0 = arith.constant 0 : i32
    %c0_i32_1 = arith.constant 0 : i32
    return %c0_i32, %c0_i32_0 : i32, i32
  }
  func.func @transform_5(%arg0: i32) -> (i32, i32) {
    %c0_i32 = arith.constant 0 : i32
    %c0_i32_0 = arith.constant 0 : i32
    %c0_i32_1 = arith.constant 0 : i32
    return %c0_i32, %c0_i32_0 : i32, i32
  }
  func.func @transform_6(%arg0: i32) -> (i32, i32) {
    %c0_i32 = arith.constant 0 : i32
    %c0_i32_0 = arith.constant 0 : i32
    %c0_i32_1 = arith.constant 0 : i32
    return %c0_i32, %c0_i32_0 : i32, i32
  }
  func.func @transform_7(%arg0: i32) -> (i32, i32, i32) {
    %c0_i32 = arith.constant 0 : i32
    %c0_i32_0 = arith.constant 0 : i32
    %c0_i32_1 = arith.constant 0 : i32
    return %arg0, %c0_i32, %c0_i32_0 : i32, i32, i32
  }
  func.func @transform_8(%arg0: i32) -> (i32, i32) {
    %c0_i32 = arith.constant 0 : i32
    %c0_i32_0 = arith.constant 0 : i32
    %c0_i32_1 = arith.constant 0 : i32
    return %c0_i32, %c0_i32_0 : i32, i32
  }
  func.func @transform_9(%arg0: i32) -> (i32, i32) {
    %c0_i32 = arith.constant 0 : i32
    %c0_i32_0 = arith.constant 0 : i32
    %c0_i32_1 = arith.constant 0 : i32
    return %c0_i32, %c0_i32_0 : i32, i32
  }
  func.func @transform_10(%arg0: i32) -> (i32, i32) {
    %c0_i32 = arith.constant 0 : i32
    %c0_i32_0 = arith.constant 0 : i32
    %c0_i32_1 = arith.constant 0 : i32
    return %c0_i32, %c0_i32_0 : i32, i32
  }
  func.func @transform_11(%arg0: i32) -> (i32, i32) {
    %c0_i32 = arith.constant 0 : i32
    %c0_i32_0 = arith.constant 0 : i32
    %c0_i32_1 = arith.constant 0 : i32
    return %c0_i32, %c0_i32_0 : i32, i32
  }
  func.func @transform_12(%arg0: i32) -> (i32, i32) {
    %c0_i32 = arith.constant 0 : i32
    %c0_i32_0 = arith.constant 0 : i32
    %c0_i32_1 = arith.constant 0 : i32
    return %c0_i32, %c0_i32_0 : i32, i32
  }
  func.func @transform_13(%arg0: i32) -> (i32, i32) {
    %c0_i32 = arith.constant 0 : i32
    %c0_i32_0 = arith.constant 0 : i32
    %c0_i32_1 = arith.constant 0 : i32
    return %c0_i32, %c0_i32_0 : i32, i32
  }
  func.func @transform_14(%arg0: i32) -> (i32, i32) {
    %c0_i32 = arith.constant 0 : i32
    %c0_i32_0 = arith.constant 0 : i32
    %c0_i32_1 = arith.constant 0 : i32
    return %c0_i32, %c0_i32_0 : i32, i32
  }
  func.func @transform_15(%arg0: i32) -> (i32, i32) {
    %c0_i32 = arith.constant 0 : i32
    %c0_i32_0 = arith.constant 0 : i32
    %c0_i32_1 = arith.constant 0 : i32
    return %c0_i32, %c0_i32_0 : i32, i32
  }
  func.func @transform_16(%arg0: i32) -> (i32, i32) {
    %c0_i32 = arith.constant 0 : i32
    %c0_i32_0 = arith.constant 0 : i32
    %c0_i32_1 = arith.constant 0 : i32
    return %c0_i32, %c0_i32_0 : i32, i32
  }
  func.func @transform_17(%arg0: i32) -> (i32, i32) {
    %c0_i32 = arith.constant 0 : i32
    %c0_i32_0 = arith.constant 0 : i32
    %c0_i32_1 = arith.constant 0 : i32
    return %c0_i32, %c0_i32_0 : i32, i32
  }
  func.func @transform_18(%arg0: i32) -> (i32, i32, i32) {
    %c0_i32 = arith.constant 0 : i32
    %c0_i32_0 = arith.constant 0 : i32
    %c0_i32_1 = arith.constant 0 : i32
    return %arg0, %c0_i32, %c0_i32_0 : i32, i32, i32
  }
}

</mosaic_0001>

<llo_original>
// kernel: tpu_custom_call.1
$region0: #{tpu_custom_call.1}
  #allocation0 [shape = 'u32[]', space=smem, size = 0x4, offset = 0x4, fixed_abs, tag = 'smem constant byte address 0x4 - core index']
  #allocation1 [shape = 'u32[72,128]{1,0:T(1,128)}', space=vmem, size = 0x9000, scoped, tag = 'internal scratch']
  #allocation2 [shape = 'f32[8,160]{1,0:T(8,128)}', space=vmem, size = 0x2000, scoped, tag = 'scratch operand']
  %s0 = inlined_call_operand.hbm [shape: bf16[2,48,144], index: 0, kind: input, shape index: {}]
  %s1 = inlined_call_operand.hbm [shape: bf16[144,160], index: 1, kind: input, shape index: {}]
  %s2 = inlined_call_operand.hbm [shape: f32[1,160], index: 2, kind: input, shape index: {}]
  %s3 = inlined_call_operand.hbm [shape: f32[1,160], index: 3, kind: input, shape index: {}]
  %s4 = inlined_call_operand.hbm [shape: f32[1,160], index: 4, kind: input, shape index: {}]
  %s5 = inlined_call_operand.hbm [shape: f32[1,160], index: 5, kind: input, shape index: {}]
  %s6 = inlined_call_operand.hbm [shape: f32[1,160], index: 6, kind: input, shape index: {}]
  %s7 = inlined_call_operand.hbm [shape: bf16[2,2,160], index: 7, kind: input, shape index: {}]
  %s8 = inlined_call_operand.hbm [shape: bf16[160,128], index: 8, kind: input, shape index: {}]
  %s9 = inlined_call_operand.hbm [shape: bf16[160,128], index: 9, kind: input, shape index: {}]
  %s10 = inlined_call_operand.hbm [shape: f32[1,128], index: 10, kind: input, shape index: {}]
  %s11 = inlined_call_operand.hbm [shape: f32[1,128], index: 11, kind: input, shape index: {}]
  %s12 = inlined_call_operand.hbm [shape: bf16[160,768], index: 12, kind: input, shape index: {}]
  %s13 = inlined_call_operand.hbm [shape: bf16[160,768], index: 13, kind: input, shape index: {}]
  %s14 = inlined_call_operand.vmem [shape: f32[1,768], index: 14, kind: input, shape index: {}]
  %s15 = inlined_call_operand.vmem [shape: f32[1,768], index: 15, kind: input, shape index: {}]
  %s16 = inlined_call_operand.vmem [shape: f32[1,160], index: 16, kind: input, shape index: {}]
  %s17 = inlined_call_operand.vmem [shape: f32[1,160], index: 17, kind: input, shape index: {}]
  %s18 = inlined_call_operand.hbm [shape: f32[2,2,160], index: 18, kind: output, shape index: {}]
  %s19 = sld [smem:[#allocation0]]
  $region161: #{tpu_custom_call.1} parent=0
    _
  %s21 = ssub.s32 1, %s19
  %s22 = scalar_select 0, %s21, %s19
  $region1: #{tpu_custom_call.1} parent=0
    #allocation3 [shape = 'u8[49152]{0}', space=vmem, size = 0xc000, scoped, tag = 'input window, operand 0']
    #allocation4 [shape = 's32[2]{0}', space=sflag, size = 0x8, scoped, tag = 'scoped memory for tpu_custom_call.1']
    #allocation5 [shape = 's32[2]{0}', space=sflag, size = 0x8, scoped, tag = 'scoped memory for tpu_custom_call.1']
    #allocation6 [shape = 'u8[73728]{0}', space=vmem, size = 0x12000, scoped, tag = 'input window, operand 1, single buffered']
    #allocation7 [shape = 's32[1]{0}', space=sflag, size = 0x4, scoped, tag = 'scoped memory for tpu_custom_call.1']
    #allocation8 [shape = 'u8[1024]{0}', space=vmem, size = 0x400, scoped, tag = 'input window, operand 2, single buffered']
    #allocation9 [shape = 'u8[1024]{0}', space=vmem, size = 0x400, scoped, tag = 'input window, operand 3, single buffered']
    #allocation10 [shape = 's32[1]{0}', space=sflag, size = 0x4, scoped, tag = 'scoped memory for tpu_custom_call.1']
    #allocation11 [shape = 'u8[1024]{0}', space=vmem, size = 0x400, scoped, tag = 'input window, operand 4, single buffered']
    #allocation12 [shape = 'u8[1024]{0}', space=vmem, size = 0x400, scoped, tag = 'input window, operand 5, single buffered']
    #allocation13 [shape = 's32[1]{0}', space=sflag, size = 0x4, scoped, tag = 'scoped memory for tpu_custom_call.1']
    #allocation14 [shape = 'u8[1024]{0}', space=vmem, size = 0x400, scoped, tag = 'input window, operand 6, single buffered']
    #allocation15 [shape = 'u8[2048]{0}', space=vmem, size = 0x800, scoped, tag = 'input window, operand 7']
    #allocation16 [shape = 's32[2]{0}', space=sflag, size = 0x8, scoped, tag = 'scoped memory for tpu_custom_call.1']
    #allocation17 [shape = 'u8[40960]{0}', space=vmem, size = 0xa000, scoped, tag = 'input window, operand 8, single buffered']
    #allocation18 [shape = 'u8[40960]{0}', space=vmem, size = 0xa000, scoped, tag = 'input window, operand 9, single buffered']
    #allocation19 [shape = 's32[1]{0}', space=sflag, size = 0x4, scoped, tag = 'scoped memory for tpu_custom_call.1']
    #allocation20 [shape = 'u8[512]{0}', space=vmem, size = 0x400, scoped, tag = 'input window, operand 10, single buffered']
    #allocation21 [shape = 'u8[512]{0}', space=vmem, size = 0x400, scoped, tag = 'input window, operand 11, single buffered']
    #allocation22 [shape = 's32[1]{0}', space=sflag, size = 0x4, scoped, tag = 'scoped memory for tpu_custom_call.1']
    #allocation23 [shape = 'u8[245760]{0}', space=vmem, size = 0x3c000, scoped, tag = 'input window, operand 12, single buffered']
    #allocation24 [shape = 'u8[245760]{0}', space=vmem, size = 0x3c000, scoped, tag = 'input window, operand 13, single buffered']
    #allocation25 [shape = 's32[1]{0}', space=sflag, size = 0x4, scoped, tag = 'scoped memory for tpu_custom_call.1']
    #allocation26 [shape = 'u8[4096]{0}', space=vmem, size = 0x1000, scoped, tag = 'output window, operand 0']
    %23 = vsyncpa [#allocation4], 0
    %s24 = scalar_lea.sflag [#allocation4], 1
    %25 = vsyncpa %s24, 0
    %26 = vsyncpa [#allocation7], 0
    %27 = vsyncpa [#allocation10], 0
    %28 = vsyncpa [#allocation13], 0
    %29 = vsyncpa [#allocation16], 0
    %s30 = scalar_lea.sflag [#allocation16], 1
    %31 = vsyncpa %s30, 0
    %32 = vsyncpa [#allocation19], 0
    %33 = vsyncpa [#allocation22], 0
    %34 = vsyncpa [#allocation25], 0
    %35 = vsyncpa [#allocation5], 0
    %s36 = scalar_lea.sflag [#allocation5], 1
    %37 = vsyncpa %s36, 0
    loop: start=0, step=1, limit=4
    $region2: #{tpu_custom_call.1} parent=1 // loop_pre_header
      _
    $region3: #{tpu_custom_call.1} parent=1 // loop_header
      %s39 = sphi 0, %s43
      %p40 = scmp.ge.s32.totalorder %s39, 4
      %s49 = sphi 0, %s51
      %s52 = sphi 0, %s49
      %s53 = sphi 0, %s52
      %s69 = sphi 0, %s53
      %s73 = sphi 0, %s73
      %s75 = sphi 0, %s73
      %s76 = sphi 0, %s75
      %s90 = sphi 0, %s76
      %s94 = sphi 0, %s94
      %s96 = sphi 0, %s94
      %s97 = sphi 0, %s96
      %s111 = sphi 0, %s97
      %s115 = sphi 0, %s115
      %s117 = sphi 0, %s115
      %s118 = sphi 0, %s117
      %s132 = sphi 0, %s118
      %s136 = sphi 0, %s136
      %s138 = sphi 0, %s136
      %s139 = sphi 0, %s138
      %s153 = sphi 0, %s139
      %s157 = sphi 0, %s157
      %s159 = sphi 0, %s157
      %s160 = sphi 0, %s159
      %s174 = sphi 0, %s160
      %s178 = sphi 0, %s178
      %s180 = sphi 0, %s178
      %s181 = sphi 0, %s180
      %s195 = sphi 0, %s181
      %s201 = sphi 0, %s203
      %s204 = sphi 0, %s201
      %s205 = sphi 0, %s204
      %s221 = sphi 0, %s205
      %s225 = sphi 0, %s225
      %s227 = sphi 0, %s225
      %s228 = sphi 0, %s227
      %s242 = sphi 0, %s228
      %s246 = sphi 0, %s246
      %s248 = sphi 0, %s246
      %s249 = sphi 0, %s248
      %s263 = sphi 0, %s249
      %s267 = sphi 0, %s267
      %s269 = sphi 0, %s267
      %s270 = sphi 0, %s269
      %s284 = sphi 0, %s270
      %s288 = sphi 0, %s288
      %s290 = sphi 0, %s288
      %s291 = sphi 0, %s290
      %s305 = sphi 0, %s291
      %s309 = sphi 0, %s309
      %s311 = sphi 0, %s309
      %s312 = sphi 0, %s311
      %s326 = sphi 0, %s312
      %s330 = sphi 0, %s330
      %s332 = sphi 0, %s330
      %s333 = sphi 0, %s332
      %s347 = sphi 0, %s333
      %s351 = sphi 0, %s351
      %s353 = sphi 0, %s351
      %s354 = sphi 0, %s353
      %s368 = sphi 0, %s354
      %s372 = sphi 0, %s372
      %s374 = sphi 0, %s372
      %s375 = sphi 0, %s374
      %s389 = sphi 0, %s375
      %s393 = sphi 0, %s393
      %s395 = sphi 0, %s393
      %s396 = sphi 0, %s395
      %s410 = sphi 0, %s396
      %s414 = sphi 0, %s414
      %s416 = sphi 0, %s414
      %s417 = sphi 0, %s416
      %s431 = sphi 0, %s417
      %s437 = sphi 0, %s439
      %s440 = sphi 0, %s437
      %s441 = sphi 0, %s440
      %s457 = sphi 0, %s441
    $region4: #{tpu_custom_call.1} parent=1 // loop_header_branch
      %42 = sbr.rel (%p40) target = $region8
    $region5: #{tpu_custom_call.1} parent=1 // loop_body
      %s44 = ssub.s32 %s39, 1
      %s45 = ssub.s32 %s39, 2
      %s46 = sadd.s32 %s39, 1
      %s47 = ssub.s32 %s39, %s46
      %p48 = scmp.eq.s32.totalorder %s47, 0
      %s50 = sadd.s32 %s49, 1
      %s51 = scalar_select %p48, %s49, %s50
      %p54 = pneg %p48
      %p55 = scmp.eq.s32.totalorder %s39, 1
      %p56 = por %p54, %p55
      %p57 = scmp.ne.s32.totalorder %s49, %s52
      %p58 = scmp.eq.s32.totalorder %s39, 0
      %p59 = por %p57, %p58
      %p60 = scmp.ne.s32.totalorder %s49, %s52
      %p61 = scmp.eq.s32.totalorder %s44, 1
      %p62 = por %p60, %p61
      %p63 = scmp.ne.s32.totalorder %s52, %s53
      %p64 = scmp.eq.s32.totalorder %s44, 0
      %p65 = por %p63, %p64
      %p66 = scmp.ne.s32.totalorder %s52, %s53
      %p67 = scmp.eq.s32.totalorder %s45, 1
      %p68 = por %p66, %p67
      %p70 = scmp.ne.s32.totalorder %s53, %s69
      %p71 = scmp.eq.s32.totalorder %s45, 0
      %p72 = por %p70, %p71
      %s74 = sadd.s32 %s73, 1
      %p77 = scmp.eq.s32.totalorder %s39, 1
      %p78 = scmp.ne.s32.totalorder %s73, %s75
      %p79 = scmp.eq.s32.totalorder %s39, 0
      %p80 = por %p78, %p79
      %p81 = scmp.ne.s32.totalorder %s73, %s75
      %p82 = scmp.eq.s32.totalorder %s44, 1
      %p83 = por %p81, %p82
      %p84 = scmp.ne.s32.totalorder %s75, %s76
      %p85 = scmp.eq.s32.totalorder %s44, 0
      %p86 = por %p84, %p85
      %p87 = scmp.ne.s32.totalorder %s75, %s76
      %p88 = scmp.eq.s32.totalorder %s45, 1
      %p89 = por %p87, %p88
      %p91 = scmp.ne.s32.totalorder %s76, %s90
      %p92 = scmp.eq.s32.totalorder %s45, 0
      %p93 = por %p91, %p92
      %s95 = sadd.s32 %s94, 1
      %p98 = scmp.eq.s32.totalorder %s39, 1
      %p99 = scmp.ne.s32.totalorder %s94, %s96
      %p100 = scmp.eq.s32.totalorder %s39, 0
      %p101 = por %p99, %p100
      %p102 = scmp.ne.s32.totalorder %s94, %s96
      %p103 = scmp.eq.s32.totalorder %s44, 1
      %p104 = por %p102, %p103
      %p105 = scmp.ne.s32.totalorder %s96, %s97
      %p106 = scmp.eq.s32.totalorder %s44, 0
      %p107 = por %p105, %p106
      %p108 = scmp.ne.s32.totalorder %s96, %s97
      %p109 = scmp.eq.s32.totalorder %s45, 1
      %p110 = por %p108, %p109
      %p112 = scmp.ne.s32.totalorder %s97, %s111
      %p113 = scmp.eq.s32.totalorder %s45, 0
      %p114 = por %p112, %p113
      %s116 = sadd.s32 %s115, 1
      %p119 = scmp.eq.s32.totalorder %s39, 1
      %p120 = scmp.ne.s32.totalorder %s115, %s117
      %p121 = scmp.eq.s32.totalorder %s39, 0
      %p122 = por %p120, %p121
      %p123 = scmp.ne.s32.totalorder %s115, %s117
      %p124 = scmp.eq.s32.totalorder %s44, 1
      %p125 = por %p123, %p124
      %p126 = scmp.ne.s32.totalorder %s117, %s118
      %p127 = scmp.eq.s32.totalorder %s44, 0
      %p128 = por %p126, %p127
      %p129 = scmp.ne.s32.totalorder %s117, %s118
      %p130 = scmp.eq.s32.totalorder %s45, 1
      %p131 = por %p129, %p130
      %p133 = scmp.ne.s32.totalorder %s118, %s132
      %p134 = scmp.eq.s32.totalorder %s45, 0
      %p135 = por %p133, %p134
      %s137 = sadd.s32 %s136, 1
      %p140 = scmp.eq.s32.totalorder %s39, 1
      %p141 = scmp.ne.s32.totalorder %s136, %s138
      %p142 = scmp.eq.s32.totalorder %s39, 0
      %p143 = por %p141, %p142
      %p144 = scmp.ne.s32.totalorder %s136, %s138
      %p145 = scmp.eq.s32.totalorder %s44, 1
      %p146 = por %p144, %p145
      %p147 = scmp.ne.s32.totalorder %s138, %s139
      %p148 = scmp.eq.s32.totalorder %s44, 0
      %p149 = por %p147, %p148
      %p150 = scmp.ne.s32.totalorder %s138, %s139
      %p151 = scmp.eq.s32.totalorder %s45, 1
      %p152 = por %p150, %p151
      %p154 = scmp.ne.s32.totalorder %s139, %s153
      %p155 = scmp.eq.s32.totalorder %s45, 0
      %p156 = por %p154, %p155
      %s158 = sadd.s32 %s157, 1
      %p161 = scmp.eq.s32.totalorder %s39, 1
      %p162 = scmp.ne.s32.totalorder %s157, %s159
      %p163 = scmp.eq.s32.totalorder %s39, 0
      %p164 = por %p162, %p163
      %p165 = scmp.ne.s32.totalorder %s157, %s159
      %p166 = scmp.eq.s32.totalorder %s44, 1
      %p167 = por %p165, %p166
      %p168 = scmp.ne.s32.totalorder %s159, %s160
      %p169 = scmp.eq.s32.totalorder %s44, 0
      %p170 = por %p168, %p169
      %p171 = scmp.ne.s32.totalorder %s159, %s160
      %p172 = scmp.eq.s32.totalorder %s45, 1
      %p173 = por %p171, %p172
      %p175 = scmp.ne.s32.totalorder %s160, %s174
      %p176 = scmp.eq.s32.totalorder %s45, 0
      %p177 = por %p175, %p176
      %s179 = sadd.s32 %s178, 1
      %p182 = scmp.eq.s32.totalorder %s39, 1
      %p183 = scmp.ne.s32.totalorder %s178, %s180
      %p184 = scmp.eq.s32.totalorder %s39, 0
      %p185 = por %p183, %p184
      %p186 = scmp.ne.s32.totalorder %s178, %s180
      %p187 = scmp.eq.s32.totalorder %s44, 1
      %p188 = por %p186, %p187
      %p189 = scmp.ne.s32.totalorder %s180, %s181
      %p190 = scmp.eq.s32.totalorder %s44, 0
      %p191 = por %p189, %p190
      %p192 = scmp.ne.s32.totalorder %s180, %s181
      %p193 = scmp.eq.s32.totalorder %s45, 1
      %p194 = por %p192, %p193
      %p196 = scmp.ne.s32.totalorder %s181, %s195
      %p197 = scmp.eq.s32.totalorder %s45, 0
      %p198 = por %p196, %p197
      %s199 = ssub.s32 %s39, %s46
      %p200 = scmp.eq.s32.totalorder %s199, 0
      %s202 = sadd.s32 %s201, 1
      %s203 = scalar_select %p200, %s201, %s202
      %p206 = pneg %p200
      %p207 = scmp.eq.s32.totalorder %s39, 1
      %p208 = por %p206, %p207
      %p209 = scmp.ne.s32.totalorder %s201, %s204
      %p210 = scmp.eq.s32.totalorder %s39, 0
      %p211 = por %p209, %p210
      %p212 = scmp.ne.s32.totalorder %s201, %s204
      %p213 = scmp.eq.s32.totalorder %s44, 1
      %p214 = por %p212, %p213
      %p215 = scmp.ne.s32.totalorder %s204, %s205
      %p216 = scmp.eq.s32.totalorder %s44, 0
      %p217 = por %p215, %p216
      %p218 = scmp.ne.s32.totalorder %s204, %s205
      %p219 = scmp.eq.s32.totalorder %s45, 1
      %p220 = por %p218, %p219
      %p222 = scmp.ne.s32.totalorder %s205, %s221
      %p223 = scmp.eq.s32.totalorder %s45, 0
      %p224 = por %p222, %p223
      %s226 = sadd.s32 %s225, 1
      %p229 = scmp.eq.s32.totalorder %s39, 1
      %p230 = scmp.ne.s32.totalorder %s225, %s227
      %p231 = scmp.eq.s32.totalorder %s39, 0
      %p232 = por %p230, %p231
      %p233 = scmp.ne.s32.totalorder %s225, %s227
      %p234 = scmp.eq.s32.totalorder %s44, 1
      %p235 = por %p233, %p234
      %p236 = scmp.ne.s32.totalorder %s227, %s228
      %p237 = scmp.eq.s32.totalorder %s44, 0
      %p238 = por %p236, %p237
      %p239 = scmp.ne.s32.totalorder %s227, %s228
      %p240 = scmp.eq.s32.totalorder %s45, 1
      %p241 = por %p239, %p240
      %p243 = scmp.ne.s32.totalorder %s228, %s242
      %p244 = scmp.eq.s32.totalorder %s45, 0
      %p245 = por %p243, %p244
      %s247 = sadd.s32 %s246, 1
      %p250 = scmp.eq.s32.totalorder %s39, 1
      %p251 = scmp.ne.s32.totalorder %s246, %s248
      %p252 = scmp.eq.s32.totalorder %s39, 0
      %p253 = por %p251, %p252
      %p254 = scmp.ne.s32.totalorder %s246, %s248
      %p255 = scmp.eq.s32.totalorder %s44, 1
      %p256 = por %p254, %p255
      %p257 = scmp.ne.s32.totalorder %s248, %s249
      %p258 = scmp.eq.s32.totalorder %s44, 0
      %p259 = por %p257, %p258
      %p260 = scmp.ne.s32.totalorder %s248, %s249
      %p261 = scmp.eq.s32.totalorder %s45, 1
      %p262 = por %p260, %p261
      %p264 = scmp.ne.s32.totalorder %s249, %s263
      %p265 = scmp.eq.s32.totalorder %s45, 0
      %p266 = por %p264, %p265
      %s268 = sadd.s32 %s267, 1
      %p271 = scmp.eq.s32.totalorder %s39, 1
      %p272 = scmp.ne.s32.totalorder %s267, %s269
      %p273 = scmp.eq.s32.totalorder %s39, 0
      %p274 = por %p272, %p273
      %p275 = scmp.ne.s32.totalorder %s267, %s269
      %p276 = scmp.eq.s32.totalorder %s44, 1
      %p277 = por %p275, %p276
      %p278 = scmp.ne.s32.totalorder %s269, %s270
      %p279 = scmp.eq.s32.totalorder %s44, 0
      %p280 = por %p278, %p279
      %p281 = scmp.ne.s32.totalorder %s269, %s270
      %p282 = scmp.eq.s32.totalorder %s45, 1
      %p283 = por %p281, %p282
      %p285 = scmp.ne.s32.totalorder %s270, %s284
      %p286 = scmp.eq.s32.totalorder %s45, 0
      %p287 = por %p285, %p286
      %s289 = sadd.s32 %s288, 1
      %p292 = scmp.eq.s32.totalorder %s39, 1
      %p293 = scmp.ne.s32.totalorder %s288, %s290
      %p294 = scmp.eq.s32.totalorder %s39, 0
      %p295 = por %p293, %p294
      %p296 = scmp.ne.s32.totalorder %s288, %s290
      %p297 = scmp.eq.s32.totalorder %s44, 1
      %p298 = por %p296, %p297
      %p299 = scmp.ne.s32.totalorder %s290, %s291
      %p300 = scmp.eq.s32.totalorder %s44, 0
      %p301 = por %p299, %p300
      %p302 = scmp.ne.s32.totalorder %s290, %s291
      %p303 = scmp.eq.s32.totalorder %s45, 1
      %p304 = por %p302, %p303
      %p306 = scmp.ne.s32.totalorder %s291, %s305
      %p307 = scmp.eq.s32.totalorder %s45, 0
      %p308 = por %p306, %p307
      %s310 = sadd.s32 %s309, 1
      %p313 = scmp.eq.s32.totalorder %s39, 1
      %p314 = scmp.ne.s32.totalorder %s309, %s311
      %p315 = scmp.eq.s32.totalorder %s39, 0
      %p316 = por %p314, %p315
      %p317 = scmp.ne.s32.totalorder %s309, %s311
      %p318 = scmp.eq.s32.totalorder %s44, 1
      %p319 = por %p317, %p318
      %p320 = scmp.ne.s32.totalorder %s311, %s312
      %p321 = scmp.eq.s32.totalorder %s44, 0
      %p322 = por %p320, %p321
      %p323 = scmp.ne.s32.totalorder %s311, %s312
      %p324 = scmp.eq.s32.totalorder %s45, 1
      %p325 = por %p323, %p324
      %p327 = scmp.ne.s32.totalorder %s312, %s326
      %p328 = scmp.eq.s32.totalorder %s45, 0
      %p329 = por %p327, %p328
      %s331 = sadd.s32 %s330, 1
      %p334 = scmp.eq.s32.totalorder %s39, 1
      %p335 = scmp.ne.s32.totalorder %s330, %s332
      %p336 = scmp.eq.s32.totalorder %s39, 0
      %p337 = por %p335, %p336
      %p338 = scmp.ne.s32.totalorder %s330, %s332
      %p339 = scmp.eq.s32.totalorder %s44, 1
      %p340 = por %p338, %p339
      %p341 = scmp.ne.s32.totalorder %s332, %s333
      %p342 = scmp.eq.s32.totalorder %s44, 0
      %p343 = por %p341, %p342
      %p344 = scmp.ne.s32.totalorder %s332, %s333
      %p345 = scmp.eq.s32.totalorder %s45, 1
      %p346 = por %p344, %p345
      %p348 = scmp.ne.s32.totalorder %s333, %s347
      %p349 = scmp.eq.s32.totalorder %s45, 0
      %p350 = por %p348, %p349
      %s352 = sadd.s32 %s351, 1
      %p355 = scmp.eq.s32.totalorder %s39, 1
      %p356 = scmp.ne.s32.totalorder %s351, %s353
      %p357 = scmp.eq.s32.totalorder %s39, 0
      %p358 = por %p356, %p357
      %p359 = scmp.ne.s32.totalorder %s351, %s353
      %p360 = scmp.eq.s32.totalorder %s44, 1
      %p361 = por %p359, %p360
      %p362 = scmp.ne.s32.totalorder %s353, %s354
      %p363 = scmp.eq.s32.totalorder %s44, 0
      %p364 = por %p362, %p363
      %p365 = scmp.ne.s32.totalorder %s353, %s354
      %p366 = scmp.eq.s32.totalorder %s45, 1
      %p367 = por %p365, %p366
      %p369 = scmp.ne.s32.totalorder %s354, %s368
      %p370 = scmp.eq.s32.totalorder %s45, 0
      %p371 = por %p369, %p370
      %s373 = sadd.s32 %s372, 1
      %p376 = scmp.eq.s32.totalorder %s39, 1
      %p377 = scmp.ne.s32.totalorder %s372, %s374
      %p378 = scmp.eq.s32.totalorder %s39, 0
      %p379 = por %p377, %p378
      %p380 = scmp.ne.s32.totalorder %s372, %s374
      %p381 = scmp.eq.s32.totalorder %s44, 1
      %p382 = por %p380, %p381
      %p383 = scmp.ne.s32.totalorder %s374, %s375
      %p384 = scmp.eq.s32.totalorder %s44, 0
      %p385 = por %p383, %p384
      %p386 = scmp.ne.s32.totalorder %s374, %s375
      %p387 = scmp.eq.s32.totalorder %s45, 1
      %p388 = por %p386, %p387
      %p390 = scmp.ne.s32.totalorder %s375, %s389
      %p391 = scmp.eq.s32.totalorder %s45, 0
      %p392 = por %p390, %p391
      %s394 = sadd.s32 %s393, 1
      %p397 = scmp.eq.s32.totalorder %s39, 1
      %p398 = scmp.ne.s32.totalorder %s393, %s395
      %p399 = scmp.eq.s32.totalorder %s39, 0
      %p400 = por %p398, %p399
      %p401 = scmp.ne.s32.totalorder %s393, %s395
      %p402 = scmp.eq.s32.totalorder %s44, 1
      %p403 = por %p401, %p402
      %p404 = scmp.ne.s32.totalorder %s395, %s396
      %p405 = scmp.eq.s32.totalorder %s44, 0
      %p406 = por %p404, %p405
      %p407 = scmp.ne.s32.totalorder %s395, %s396
      %p408 = scmp.eq.s32.totalorder %s45, 1
      %p409 = por %p407, %p408
      %p411 = scmp.ne.s32.totalorder %s396, %s410
      %p412 = scmp.eq.s32.totalorder %s45, 0
      %p413 = por %p411, %p412
      %s415 = sadd.s32 %s414, 1
      %p418 = scmp.eq.s32.totalorder %s39, 1
      %p419 = scmp.ne.s32.totalorder %s414, %s416
      %p420 = scmp.eq.s32.totalorder %s39, 0
      %p421 = por %p419, %p420
      %p422 = scmp.ne.s32.totalorder %s414, %s416
      %p423 = scmp.eq.s32.totalorder %s44, 1
      %p424 = por %p422, %p423
      %p425 = scmp.ne.s32.totalorder %s416, %s417
      %p426 = scmp.eq.s32.totalorder %s44, 0
      %p427 = por %p425, %p426
      %p428 = scmp.ne.s32.totalorder %s416, %s417
      %p429 = scmp.eq.s32.totalorder %s45, 1
      %p430 = por %p428, %p429
      %p432 = scmp.ne.s32.totalorder %s417, %s431
      %p433 = scmp.eq.s32.totalorder %s45, 0
      %p434 = por %p432, %p433
      %s435 = ssub.s32 %s39, %s46
      %p436 = scmp.eq.s32.totalorder %s435, 0
      %s438 = sadd.s32 %s437, 1
      %s439 = scalar_select %p436, %s437, %s438
      %p442 = pneg %p436
      %p443 = scmp.eq.s32.totalorder %s39, 1
      %p444 = por %p442, %p443
      %p445 = scmp.ne.s32.totalorder %s437, %s440
      %p446 = scmp.eq.s32.totalorder %s39, 0
      %p447 = por %p445, %p446
      %p448 = scmp.ne.s32.totalorder %s437, %s440
      %p449 = scmp.eq.s32.totalorder %s44, 1
      %p450 = por %p448, %p449
      %p451 = scmp.ne.s32.totalorder %s440, %s441
      %p452 = scmp.eq.s32.totalorder %s44, 0
      %p453 = por %p451, %p452
      %p454 = scmp.ne.s32.totalorder %s440, %s441
      %p455 = scmp.eq.s32.totalorder %s45, 1
      %p456 = por %p454, %p455
      %p458 = scmp.ne.s32.totalorder %s441, %s457
      %p459 = scmp.eq.s32.totalorder %s45, 0
      %p460 = por %p458, %p459
      %p461 = scmp.le.s32.totalorder 1, %s39
      %p462 = scmp.lt.s32.totalorder %s39, 3
      %p463 = pnand %p461, %p462
      %p464 = pneg %p463
      // Predicated region
      $region9: #{tpu_custom_call.1} parent=5 // pred_check
        _
      $region10: #{tpu_custom_call.1} parent=5 // pred_check_branch
        %466 = sbr.rel (%p463) target = $region12
      $region11: #{tpu_custom_call.1} parent=5 // pred_region
        %s467 = ssub.s32 %s39, 1
        // Predicated region
        $region13: #{tpu_custom_call.1} parent=11 // pred_check
          %p468 = pneg %p86
        $region14: #{tpu_custom_call.1} parent=11 // pred_check_branch
          %470 = sbr.rel (%p468) target = $region16
        $region15: #{tpu_custom_call.1} parent=11 // pred_region
          %472 = vsyncadd [#allocation7], 0
          %s473 = sshll.u32 %s1, 4
          %s474 = int_to_ptr.hbm [resolvable:$true] %s473
          %s475 = sshll.u32 [#allocation6], 4
          %s476 = int_to_ptr.vmem [resolvable:$true] %s475
          %481 = dma.hbm_to_vmem [thread:$0]  %s474, 2304, %s476, [#allocation7], 128, 128, 8
        $region16: #{tpu_custom_call.1} parent=11 // pred_fallthru
          _
        // Predicated region
        $region17: #{tpu_custom_call.1} parent=11 // pred_check
          %p482 = pneg %p107
        $region18: #{tpu_custom_call.1} parent=11 // pred_check_branch
          %484 = sbr.rel (%p482) target = $region20
        $region19: #{tpu_custom_call.1} parent=11 // pred_region
          %486 = vsyncadd [#allocation7], 0
          %s488 = sshll.u32 %s2, 4
          %s489 = int_to_ptr.hbm [resolvable:$true] %s488
          %s490 = sshll.u32 [#allocation8], 4
          %s491 = int_to_ptr.vmem [resolvable:$true] %s490
          %493 = dma.hbm_to_vmem [thread:$0]  %s489, 32, %s491, [#allocation7]
        $region20: #{tpu_custom_call.1} parent=11 // pred_fallthru
          _
        // Predicated region
        $region21: #{tpu_custom_call.1} parent=11 // pred_check
          %p494 = pneg %p128
        $region22: #{tpu_custom_call.1} parent=11 // pred_check_branch
          %496 = sbr.rel (%p494) target = $region24
        $region23: #{tpu_custom_call.1} parent=11 // pred_region
          %498 = vsyncadd [#allocation10], 0
          %s500 = sshll.u32 %s3, 4
          %s501 = int_to_ptr.hbm [resolvable:$true] %s500
          %s502 = sshll.u32 [#allocation9], 4
          %s503 = int_to_ptr.vmem [resolvable:$true] %s502
          %505 = dma.hbm_to_vmem [thread:$0]  %s501, 32, %s503, [#allocation10]
        $region24: #{tpu_custom_call.1} parent=11 // pred_fallthru
          _
        // Predicated region
        $region25: #{tpu_custom_call.1} parent=11 // pred_check
          %p506 = pneg %p149
        $region26: #{tpu_custom_call.1} parent=11 // pred_check_branch
          %508 = sbr.rel (%p506) target = $region28
        $region27: #{tpu_custom_call.1} parent=11 // pred_region
          %510 = vsyncadd [#allocation10], 0
          %s512 = sshll.u32 %s4, 4
          %s513 = int_to_ptr.hbm [resolvable:$true] %s512
          %s514 = sshll.u32 [#allocation11], 4
          %s515 = int_to_ptr.vmem [resolvable:$true] %s514
          %517 = dma.hbm_to_vmem [thread:$0]  %s513, 32, %s515, [#allocation10]
        $region28: #{tpu_custom_call.1} parent=11 // pred_fallthru
          _
        // Predicated region
        $region29: #{tpu_custom_call.1} parent=11 // pred_check
          %p518 = pneg %p170
        $region30: #{tpu_custom_call.1} parent=11 // pred_check_branch
          %520 = sbr.rel (%p518) target = $region32
        $region31: #{tpu_custom_call.1} parent=11 // pred_region
          %522 = vsyncadd [#allocation13], 0
          %s524 = sshll.u32 %s5, 4
          %s525 = int_to_ptr.hbm [resolvable:$true] %s524
          %s526 = sshll.u32 [#allocation12], 4
          %s527 = int_to_ptr.vmem [resolvable:$true] %s526
          %529 = dma.hbm_to_vmem [thread:$0]  %s525, 32, %s527, [#allocation13]
        $region32: #{tpu_custom_call.1} parent=11 // pred_fallthru
          _
        // Predicated region
        $region33: #{tpu_custom_call.1} parent=11 // pred_check
          %p530 = pneg %p191
        $region34: #{tpu_custom_call.1} parent=11 // pred_check_branch
          %532 = sbr.rel (%p530) target = $region36
        $region35: #{tpu_custom_call.1} parent=11 // pred_region
          %534 = vsyncadd [#allocation13], 0
          %s536 = sshll.u32 %s6, 4
          %s537 = int_to_ptr.hbm [resolvable:$true] %s536
          %s538 = sshll.u32 [#allocation14], 4
          %s539 = int_to_ptr.vmem [resolvable:$true] %s538
          %541 = dma.hbm_to_vmem [thread:$0]  %s537, 32, %s539, [#allocation13]
        $region36: #{tpu_custom_call.1} parent=11 // pred_fallthru
          _
        // Predicated region
        $region37: #{tpu_custom_call.1} parent=11 // pred_check
          %p542 = pneg %p238
        $region38: #{tpu_custom_call.1} parent=11 // pred_check_branch
          %544 = sbr.rel (%p542) target = $region40
        $region39: #{tpu_custom_call.1} parent=11 // pred_region
          %546 = vsyncadd [#allocation16], 0
          %s547 = sshll.u32 %s8, 4
          %s548 = int_to_ptr.hbm [resolvable:$true] %s547
          %s549 = sshll.u32 [#allocation17], 4
          %s550 = int_to_ptr.vmem [resolvable:$true] %s549
          %555 = dma.hbm_to_vmem [thread:$0]  %s548, 1280, %s550, [#allocation16], 64, 64, 4
        $region40: #{tpu_custom_call.1} parent=11 // pred_fallthru
          _
        // Predicated region
        $region41: #{tpu_custom_call.1} parent=11 // pred_check
          %p556 = pneg %p259
        $region42: #{tpu_custom_call.1} parent=11 // pred_check_branch
          %558 = sbr.rel (%p556) target = $region44
        $region43: #{tpu_custom_call.1} parent=11 // pred_region
          %560 = vsyncadd [#allocation19], 0
          %s561 = sshll.u32 %s9, 4
          %s562 = int_to_ptr.hbm [resolvable:$true] %s561
          %s563 = sshll.u32 [#allocation18], 4
          %s564 = int_to_ptr.vmem [resolvable:$true] %s563
          %569 = dma.hbm_to_vmem [thread:$0]  %s562, 1280, %s564, [#allocation19], 64, 64, 4
        $region44: #{tpu_custom_call.1} parent=11 // pred_fallthru
          _
        // Predicated region
        $region45: #{tpu_custom_call.1} parent=11 // pred_check
          %p570 = pneg %p280
        $region46: #{tpu_custom_call.1} parent=11 // pred_check_branch
          %572 = sbr.rel (%p570) target = $region48
        $region47: #{tpu_custom_call.1} parent=11 // pred_region
          %574 = vsyncadd [#allocation19], 0
          %s576 = sshll.u32 %s10, 4
          %s577 = int_to_ptr.hbm [resolvable:$true] %s576
          %s578 = sshll.u32 [#allocation20], 4
          %s579 = int_to_ptr.vmem [resolvable:$true] %s578
          %581 = dma.hbm_to_vmem [thread:$0]  %s577, 16, %s579, [#allocation19]
        $region48: #{tpu_custom_call.1} parent=11 // pred_fallthru
          _
        // Predicated region
        $region49: #{tpu_custom_call.1} parent=11 // pred_check
          %p582 = pneg %p301
        $region50: #{tpu_custom_call.1} parent=11 // pred_check_branch
          %584 = sbr.rel (%p582) target = $region52
        $region51: #{tpu_custom_call.1} parent=11 // pred_region
          %586 = vsyncadd [#allocation22], 0
          %s588 = sshll.u32 %s11, 4
          %s589 = int_to_ptr.hbm [resolvable:$true] %s588
          %s590 = sshll.u32 [#allocation21], 4
          %s591 = int_to_ptr.vmem [resolvable:$true] %s590
          %593 = dma.hbm_to_vmem [thread:$0]  %s589, 16, %s591, [#allocation22]
        $region52: #{tpu_custom_call.1} parent=11 // pred_fallthru
          _
        // Predicated region
        $region53: #{tpu_custom_call.1} parent=11 // pred_check
          %p594 = pneg %p322
        $region54: #{tpu_custom_call.1} parent=11 // pred_check_branch
          %596 = sbr.rel (%p594) target = $region56
        $region55: #{tpu_custom_call.1} parent=11 // pred_region
          %598 = vsyncadd [#allocation22], 0
          %s599 = sshll.u32 %s12, 4
          %s600 = int_to_ptr.hbm [resolvable:$true] %s599
          %s601 = sshll.u32 [#allocation23], 4
          %s602 = int_to_ptr.vmem [resolvable:$true] %s601
          %607 = dma.hbm_to_vmem [thread:$0]  %s600, 7680, %s602, [#allocation22], 384, 384, 24
        $region56: #{tpu_custom_call.1} parent=11 // pred_fallthru
          _
        // Predicated region
        $region57: #{tpu_custom_call.1} parent=11 // pred_check
          %p608 = pneg %p343
        $region58: #{tpu_custom_call.1} parent=11 // pred_check_branch
          %610 = sbr.rel (%p608) target = $region60
        $region59: #{tpu_custom_call.1} parent=11 // pred_region
          %612 = vsyncadd [#allocation25], 0
          %s613 = sshll.u32 %s13, 4
          %s614 = int_to_ptr.hbm [resolvable:$true] %s613
          %s615 = sshll.u32 [#allocation24], 4
          %s616 = int_to_ptr.vmem [resolvable:$true] %s615
          %621 = dma.hbm_to_vmem [thread:$0]  %s614, 7680, %s616, [#allocation25], 384, 384, 24
        $region60: #{tpu_custom_call.1} parent=11 // pred_fallthru
          _
        // Predicated region
        $region61: #{tpu_custom_call.1} parent=11 // pred_check
          %p622 = pneg %p364
        $region62: #{tpu_custom_call.1} parent=11 // pred_check_branch
          %624 = sbr.rel (%p622) target = $region64
        $region63: #{tpu_custom_call.1} parent=11 // pred_region
          _
        $region64: #{tpu_custom_call.1} parent=11 // pred_fallthru
          _
        // Predicated region
        $region65: #{tpu_custom_call.1} parent=11 // pred_check
          %p625 = pneg %p385
        $region66: #{tpu_custom_call.1} parent=11 // pred_check_branch
          %627 = sbr.rel (%p625) target = $region68
        $region67: #{tpu_custom_call.1} parent=11 // pred_region
          _
        $region68: #{tpu_custom_call.1} parent=11 // pred_fallthru
          _
        // Predicated region
        $region69: #{tpu_custom_call.1} parent=11 // pred_check
          %p628 = pneg %p406
        $region70: #{tpu_custom_call.1} parent=11 // pred_check_branch
          %630 = sbr.rel (%p628) target = $region72
        $region71: #{tpu_custom_call.1} parent=11 // pred_region
          _
        $region72: #{tpu_custom_call.1} parent=11 // pred_fallthru
          _
        // Predicated region
        $region73: #{tpu_custom_call.1} parent=11 // pred_check
          %p631 = pneg %p427
        $region74: #{tpu_custom_call.1} parent=11 // pred_check_branch
          %633 = sbr.rel (%p631) target = $region76
        $region75: #{tpu_custom_call.1} parent=11 // pred_region
          _
        $region76: #{tpu_custom_call.1} parent=11 // pred_fallthru
          _
      $region12: #{tpu_custom_call.1} parent=5 // pred_fallthru
        _
      %p634 = scmp.lt.s32.totalorder %s39, 2
      // Predicated region
      $region77: #{tpu_custom_call.1} parent=5 // pred_check
        %p635 = pneg %p634
      $region78: #{tpu_custom_call.1} parent=5 // pred_check_branch
        %637 = sbr.rel (%p635) target = $region80
      $region79: #{tpu_custom_call.1} parent=5 // pred_region
        // Predicated region
        $region81: #{tpu_custom_call.1} parent=79 // pred_check
          %p638 = pneg %p59
        $region82: #{tpu_custom_call.1} parent=79 // pred_check_branch
          %640 = sbr.rel (%p638) target = $region84
        $region83: #{tpu_custom_call.1} parent=79 // pred_region
          %s641 = sand.u32 %s49, 1
          %s642 = scalar_lea.sflag [#allocation4], %s641
          %s643 = sand.u32 %s49, 1
          %s644 = smul.addr %s643, 48
          %s645 = scalar_lea.vmem [#allocation3], %s644
          %647 = vsyncadd %s642, 0
          %s648 = smul.addr %s39, 12
          %s649 = smul.addr %s648, 4
          %s650 = scalar_lea.hbm %s0, %s649
          %s651 = sshll.u32 %s650, 4
          %s652 = int_to_ptr.hbm [resolvable:$true] %s651
          %s653 = sshll.u32 %s645, 4
          %s654 = int_to_ptr.vmem [resolvable:$true] %s653
          %659 = dma.hbm_to_vmem [thread:$0]  %s652, 768, %s654, %s642, 128, 128, 8
        $region84: #{tpu_custom_call.1} parent=79 // pred_fallthru
          _
        // Predicated region
        $region85: #{tpu_custom_call.1} parent=79 // pred_check
          %p660 = pneg %p211
        $region86: #{tpu_custom_call.1} parent=79 // pred_check_branch
          %662 = sbr.rel (%p660) target = $region88
        $region87: #{tpu_custom_call.1} parent=79 // pred_region
          %s663 = sand.u32 %s39, 1
          %s664 = scalar_lea.sflag [#allocation16], %s663
          %s665 = sand.u32 %s201, 1
          %s666 = smul.addr %s665, 2
          %s667 = scalar_lea.vmem [#allocation15], %s666
          %669 = vsyncadd %s664, 0
          %s670 = smul.addr %s39, 2
          %s671 = scalar_lea.hbm %s7, %s670
          %s673 = sshll.u32 %s671, 4
          %s674 = int_to_ptr.hbm [resolvable:$true] %s673
          %s675 = sshll.u32 %s667, 4
          %s676 = int_to_ptr.vmem [resolvable:$true] %s675
          %678 = dma.hbm_to_vmem [thread:$0]  %s674, 32, %s676, %s664
        $region88: #{tpu_custom_call.1} parent=79 // pred_fallthru
          _
      $region80: #{tpu_custom_call.1} parent=5 // pred_fallthru
        _
      %p679 = scmp.le.s32.totalorder 1, %s39
      %p680 = scmp.lt.s32.totalorder %s39, 3
      %p681 = pnand %p679, %p680
      %p682 = pneg %p681
      // Predicated region
      $region89: #{tpu_custom_call.1} parent=5 // pred_check
        _
      $region90: #{tpu_custom_call.1} parent=5 // pred_check_branch
        %684 = sbr.rel (%p681) target = $region92
      $region91: #{tpu_custom_call.1} parent=5 // pred_region
        %s685 = ssub.s32 %s39, 1
        %s686 = sand.u32 %s52, 1
        %s687 = scalar_lea.sflag [#allocation4], %s686
        %s688 = sand.u32 %s52, 1
        %s689 = smul.addr %s688, 48
        %s690 = scalar_lea.vmem [#allocation3], %s689
        // Predicated region
        $region93: #{tpu_custom_call.1} parent=91 // pred_check
          %p691 = pneg %p65
        $region94: #{tpu_custom_call.1} parent=91 // pred_check_branch
          %693 = sbr.rel (%p691) target = $region96
        $region95: #{tpu_custom_call.1} parent=91 // pred_region
          %695 = dma.done %s687, 768
        $region96: #{tpu_custom_call.1} parent=91 // pred_fallthru
          _
        // Predicated region
        $region97: #{tpu_custom_call.1} parent=91 // pred_check
          %p696 = pneg %p86
        $region98: #{tpu_custom_call.1} parent=91 // pred_check_branch
          %698 = sbr.rel (%p696) target = $region100
        $region99: #{tpu_custom_call.1} parent=91 // pred_region
          %700 = dma.done [#allocation7], 2304
        $region100: #{tpu_custom_call.1} parent=91 // pred_fallthru
          _
        // Predicated region
        $region101: #{tpu_custom_call.1} parent=91 // pred_check
          %p701 = pneg %p107
        $region102: #{tpu_custom_call.1} parent=91 // pred_check_branch
          %703 = sbr.rel (%p701) target = $region104
        $region103: #{tpu_custom_call.1} parent=91 // pred_region
          %705 = dma.done [#allocation7], 32
        $region104: #{tpu_custom_call.1} parent=91 // pred_fallthru
          _
        // Predicated region
        $region105: #{tpu_custom_call.1} parent=91 // pred_check
          %p706 = pneg %p128
        $region106: #{tpu_custom_call.1} parent=91 // pred_check_branch
          %708 = sbr.rel (%p706) target = $region108
        $region107: #{tpu_custom_call.1} parent=91 // pred_region
          %710 = dma.done [#allocation10], 32
        $region108: #{tpu_custom_call.1} parent=91 // pred_fallthru
          _
        // Predicated region
        $region109: #{tpu_custom_call.1} parent=91 // pred_check
          %p711 = pneg %p149
        $region110: #{tpu_custom_call.1} parent=91 // pred_check_branch
          %713 = sbr.rel (%p711) target = $region112
        $region111: #{tpu_custom_call.1} parent=91 // pred_region
          %715 = dma.done [#allocation10], 32
        $region112: #{tpu_custom_call.1} parent=91 // pred_fallthru
          _
        // Predicated region
        $region113: #{tpu_custom_call.1} parent=91 // pred_check
          %p716 = pneg %p170
        $region114: #{tpu_custom_call.1} parent=91 // pred_check_branch
          %718 = sbr.rel (%p716) target = $region116
        $region115: #{tpu_custom_call.1} parent=91 // pred_region
          %720 = dma.done [#allocation13], 32
        $region116: #{tpu_custom_call.1} parent=91 // pred_fallthru
          _
        // Predicated region
        $region117: #{tpu_custom_call.1} parent=91 // pred_check
          %p721 = pneg %p191
        $region118: #{tpu_custom_call.1} parent=91 // pred_check_branch
          %723 = sbr.rel (%p721) target = $region120
        $region119: #{tpu_custom_call.1} parent=91 // pred_region
          %725 = dma.done [#allocation13], 32
        $region120: #{tpu_custom_call.1} parent=91 // pred_fallthru
          _
        %s726 = sand.u32 %s44, 1
        %s727 = scalar_lea.sflag [#allocation16], %s726
        %s728 = sand.u32 %s204, 1
        %s729 = smul.addr %s728, 2
        %s730 = scalar_lea.vmem [#allocation15], %s729
        // Predicated region
        $region121: #{tpu_custom_call.1} parent=91 // pred_check
          %p731 = pneg %p217
        $region122: #{tpu_custom_call.1} parent=91 // pred_check_branch
          %733 = sbr.rel (%p731) target = $region124
        $region123: #{tpu_custom_call.1} parent=91 // pred_region
          %735 = dma.done %s727, 32
        $region124: #{tpu_custom_call.1} parent=91 // pred_fallthru
          _
        // Predicated region
        $region125: #{tpu_custom_call.1} parent=91 // pred_check
          %p736 = pneg %p238
        $region126: #{tpu_custom_call.1} parent=91 // pred_check_branch
          %738 = sbr.rel (%p736) target = $region128
        $region127: #{tpu_custom_call.1} parent=91 // pred_region
          %740 = dma.done [#allocation16], 1280
        $region128: #{tpu_custom_call.1} parent=91 // pred_fallthru
          _
        // Predicated region
        $region129: #{tpu_custom_call.1} parent=91 // pred_check
          %p741 = pneg %p259
        $region130: #{tpu_custom_call.1} parent=91 // pred_check_branch
          %743 = sbr.rel (%p741) target = $region132
        $region131: #{tpu_custom_call.1} parent=91 // pred_region
          %745 = dma.done [#allocation19], 1280
        $region132: #{tpu_custom_call.1} parent=91 // pred_fallthru
          _
        // Predicated region
        $region133: #{tpu_custom_call.1} parent=91 // pred_check
          %p746 = pneg %p280
        $region134: #{tpu_custom_call.1} parent=91 // pred_check_branch
          %748 = sbr.rel (%p746) target = $region136
        $region135: #{tpu_custom_call.1} parent=91 // pred_region
          %750 = dma.done [#allocation19], 16
        $region136: #{tpu_custom_call.1} parent=91 // pred_fallthru
          _
        // Predicated region
        $region137: #{tpu_custom_call.1} parent=91 // pred_check
          %p751 = pneg %p301
        $region138: #{tpu_custom_call.1} parent=91 // pred_check_branch
          %753 = sbr.rel (%p751) target = $region140
        $region139: #{tpu_custom_call.1} parent=91 // pred_region
          %755 = dma.done [#allocation22], 16
        $region140: #{tpu_custom_call.1} parent=91 // pred_fallthru
          _
        // Predicated region
        $region141: #{tpu_custom_call.1} parent=91 // pred_check
          %p756 = pneg %p322
        $region142: #{tpu_custom_call.1} parent=91 // pred_check_branch
          %758 = sbr.rel (%p756) target = $region144
        $region143: #{tpu_custom_call.1} parent=91 // pred_region
          %760 = dma.done [#allocation22], 7680
        $region144: #{tpu_custom_call.1} parent=91 // pred_fallthru
          _
        // Predicated region
        $region145: #{tpu_custom_call.1} parent=91 // pred_check
          %p761 = pneg %p343
        $region146: #{tpu_custom_call.1} parent=91 // pred_check_branch
          %763 = sbr.rel (%p761) target = $region148
        $region147: #{tpu_custom_call.1} parent=91 // pred_region
          %765 = dma.done [#allocation25], 7680
        $region148: #{tpu_custom_call.1} parent=91 // pred_fallthru
          _
        %s766 = sand.u32 %s52, 1
        %s767 = scalar_lea.sflag [#allocation4], %s766
        %s768 = sand.u32 %s52, 1
        %s769 = smul.addr %s768, 48
        %s770 = scalar_lea.vmem [#allocation3], %s769
        %p771 = pneg %p65
        %p772 = pneg %p62
        %p773 = pneg %p86
        %p774 = pneg %p83
        %p775 = pneg %p107
        %p776 = pneg %p104
        %p777 = pneg %p128
        %p778 = pneg %p125
        %p779 = pneg %p149
        %p780 = pneg %p146
        %p781 = pneg %p170
        %p782 = pneg %p167
        %p783 = pneg %p191
        %p784 = pneg %p188
        %s785 = sand.u32 %s44, 1
        %s786 = scalar_lea.sflag [#allocation16], %s785
        %s787 = sand.u32 %s204, 1
        %s788 = smul.addr %s787, 2
        %s789 = scalar_lea.vmem [#allocation15], %s788
        %p790 = pneg %p217
        %p791 = pneg %p214
        %p792 = pneg %p238
        %p793 = pneg %p235
        %p794 = pneg %p259
        %p795 = pneg %p256
        %p796 = pneg %p280
        %p797 = pneg %p277
        %p798 = pneg %p301
        %p799 = pneg %p298
        %p800 = pneg %p322
        %p801 = pneg %p319
        %p802 = pneg %p343
        %p803 = pneg %p340
        %p804 = pneg %p364
        %p805 = pneg %p361
        %p806 = pneg %p385
        %p807 = pneg %p382
        %p808 = pneg %p406
        %p809 = pneg %p403
        %p810 = pneg %p427
        %p811 = pneg %p424
        %p812 = pneg %p453
        %p813 = pneg %p450
        %s814 = sand.u32 %s440, 1
        %s815 = scalar_lea.sflag [#allocation5], %s814
        %s816 = sand.u32 %s440, 1
        %s817 = smul.addr %s816, 4
        %s818 = scalar_lea.vmem [#allocation26], %s817
        %v820 = vld [vmem:[%s690] sm:$0xff]
        %v821 = vld [vmem:[%s690 + $0x8] sm:$0xff]
        %v822 = vld [vmem:[%s690 + $0x10] sm:$0xff]
        %v823 = vld [vmem:[%s690 + $0x18] sm:$0xff]
        %v824 = vld [vmem:[%s690 + $0x20] sm:$0xff]
        %v825 = vld [vmem:[%s690 + $0x28] sm:$0xff]
        %v826 = vld [vmem:[#allocation6] sm:$0xff]
        %v827 = vld [vmem:[#allocation6 + $0x8] sm:$0xff]
        %v828 = vld [vmem:[#allocation6 + $0x10] sm:$0xff]
        %v829 = vld [vmem:[#allocation6 + $0x18] sm:$0xff]
        %v830 = vld [vmem:[#allocation6 + $0x20] sm:$0xff]
        %v831 = vld [vmem:[#allocation6 + $0x28] sm:$0xff]
        %v832 = vld [vmem:[#allocation6 + $0x30] sm:$0xff]
        %v833 = vld [vmem:[#allocation6 + $0x38] sm:$0xff]
        %v834 = vld [vmem:[#allocation6 + $0x40] sm:$0xff]
        %v835 = vld [vmem:[#allocation6 + $0x48] sm:$0xff]
        %v836 = vld [vmem:[#allocation6 + $0x50] sm:$0xff]
        %v837 = vld [vmem:[#allocation6 + $0x58] sm:$0xff]
        %v838 = vld [vmem:[#allocation6 + $0x60] sm:$0xff]
        %v839 = vld [vmem:[#allocation6 + $0x68] sm:$0xff]
        %v840 = vld [vmem:[#allocation6 + $0x70] sm:$0xff]
        %v841 = vld [vmem:[#allocation6 + $0x78] sm:$0xff]
        %v842 = vld [vmem:[#allocation6 + $0x80] sm:$0xff]
        %v843 = vld [vmem:[#allocation6 + $0x88] sm:$0xff]
        %v844 = vld [vmem:[#allocation8] sm:$0x3]
        %v846 = vperm.slane %v844, 0
        %v847 = vperm.slane %v844, 1
        %v856 = vunpack.c.l.b16 %v820
        %v857 = vunpack.c.h.b16 %v820
        %v858 = vunpack.c.l.b16 %v821
        %v859 = vunpack.c.h.b16 %v821
        %v860 = vunpack.c.l.b16 %v822
        %v861 = vunpack.c.h.b16 %v822
        %v862 = vunpack.c.l.b16 %v823
        %v863 = vunpack.c.h.b16 %v823
        %v864 = vunpack.c.l.b16 %v824
        %v865 = vunpack.c.h.b16 %v824
        %v866 = vunpack.c.l.b16 %v825
        %v867 = vunpack.c.h.b16 %v825
        %v868 = vpack.c.b16 %v858, %v856
        %v869 = vpack.c.b16 %v859, %v857
        %v870 = vpack.c.b16 %v862, %v860
        %v871 = vpack.c.b16 %v863, %v861
        %v872 = vpack.c.b16 %v866, %v864
        %v873 = vpack.c.b16 %v867, %v865
        %v895 = vunpack.c.l.b16 %v826
        %v896 = vunpack.c.h.b16 %v826
        %v897 = vunpack.c.l.b16 %v827
        %v898 = vunpack.c.h.b16 %v827
        %v899 = vunpack.c.l.b16 %v828
        %v900 = vunpack.c.h.b16 %v828
        %v901 = vunpack.c.l.b16 %v829
        %v902 = vunpack.c.h.b16 %v829
        %v903 = vunpack.c.l.b16 %v830
        %v904 = vunpack.c.h.b16 %v830
        %v905 = vunpack.c.l.b16 %v831
        %v906 = vunpack.c.h.b16 %v831
        %v907 = vunpack.c.l.b16 %v832
        %v908 = vunpack.c.h.b16 %v832
        %v909 = vunpack.c.l.b16 %v833
        %v910 = vunpack.c.h.b16 %v833
        %v911 = vunpack.c.l.b16 %v834
        %v912 = vunpack.c.h.b16 %v834
        %v913 = vunpack.c.l.b16 %v835
        %v914 = vunpack.c.h.b16 %v835
        %v915 = vunpack.c.l.b16 %v836
        %v916 = vunpack.c.h.b16 %v836
        %v917 = vunpack.c.l.b16 %v837
        %v918 = vunpack.c.h.b16 %v837
        %v919 = vunpack.c.l.b16 %v838
        %v920 = vunpack.c.h.b16 %v838
        %v921 = vunpack.c.l.b16 %v839
        %v922 = vunpack.c.h.b16 %v839
        %v923 = vunpack.c.l.b16 %v840
        %v924 = vunpack.c.h.b16 %v840
        %v925 = vunpack.c.l.b16 %v841
        %v926 = vunpack.c.h.b16 %v841
        %v927 = vunpack.c.l.b16 %v842
        %v928 = vunpack.c.h.b16 %v842
        %v929 = vunpack.c.l.b16 %v843
        %v930 = vunpack.c.h.b16 %v843
        %v931 = vpack.c.b16 %v897, %v895
        %v932 = vpack.c.b16 %v898, %v896
        %v933 = vpack.c.b16 %v901, %v899
        %v934 = vpack.c.b16 %v902, %v900
        %v935 = vpack.c.b16 %v905, %v903
        %v936 = vpack.c.b16 %v906, %v904
        %v937 = vpack.c.b16 %v909, %v907
        %v938 = vpack.c.b16 %v910, %v908
        %v939 = vpack.c.b16 %v913, %v911
        %v940 = vpack.c.b16 %v914, %v912
        %v941 = vpack.c.b16 %v917, %v915
        %v942 = vpack.c.b16 %v918, %v916
        %v943 = vpack.c.b16 %v921, %v919
        %v944 = vpack.c.b16 %v922, %v920
        %v945 = vpack.c.b16 %v925, %v923
        %v946 = vpack.c.b16 %v926, %v924
        %v947 = vpack.c.b16 %v929, %v927
        %v948 = vpack.c.b16 %v930, %v928
        %vm967 = vcmask 130048
        %v969 = vsel %vm967, %v869, 0
        %v972 = vsel %vm967, %v871, 0
        %v975 = vsel %vm967, %v873, 0
        %977 = vmatpush.bf16.msra.mxu0 %v945
        %978 = vmatpush.bf16.msra.mxu0 %v943
        %979 = vmatpush.bf16.msra.mxu0 %v941
        %980 = vmatpush.bf16.msra.mxu0 %v939
        %981 = vmatpush.bf16.msra.mxu0 %v937
        %982 = vmatpush.bf16.msra.mxu0 %v935
        %983 = vmatpush.bf16.msra.mxu0 %v933
        %984 = vmatpush.bf16.msra.mxu0 %v931
        %985 = vmatmul.bf16.gmra.mxu0 %v868
        %v986 = vpop.f32.mrf.mxu0
        %v987 = vadd.f32 %v846, %v986
        %v988 = vpop.f32.mrf.mxu0
        %v989 = vadd.f32 %v846, %v988
        %990 = vmatmul.bf16.gmra.mxu0 %v870
        %v991 = vpop.f32.mrf.mxu0
        %v992 = vadd.f32 %v846, %v991
        %v993 = vpop.f32.mrf.mxu0
        %v994 = vadd.f32 %v846, %v993
        %995 = vmatmul.bf16.gmra.mxu0 %v872
        %v996 = vpop.f32.mrf.mxu0
        %v997 = vadd.f32 %v846, %v996
        %v998 = vpop.f32.mrf.mxu0
        %v999 = vadd.f32 %v846, %v998
        %1000 = vdwg.mxu0
        %1001 = vmatpush.bf16.msra.mxu0 0
        %1002 = vmatpush.bf16.msra.mxu0 0
        %1003 = vmatpush.bf16.msra.mxu0 0
        %1004 = vmatpush.bf16.msra.mxu0 0
        %1005 = vmatpush.bf16.msra.mxu0 0
        %1006 = vmatpush.bf16.msra.mxu0 0
        %1007 = vmatpush.bf16.msra.mxu0 0
        %1008 = vmatpush.bf16.msra.mxu0 %v947
        %1009 = vmatmul.bf16.gmra.mxu0 %v969
        %v1010 = vpop.f32.mrf.mxu0
        %v1011 = vadd.f32 %v987, %v1010
        %v1012 = vpop.f32.mrf.mxu0
        %v1013 = vadd.f32 %v989, %v1012
        %1014 = vmatmul.bf16.gmra.mxu0 %v972
        %v1015 = vpop.f32.mrf.mxu0
        %v1016 = vadd.f32 %v992, %v1015
        %v1017 = vpop.f32.mrf.mxu0
        %v1018 = vadd.f32 %v994, %v1017
        %1019 = vmatmul.bf16.gmra.mxu0 %v975
        %v1020 = vpop.f32.mrf.mxu0
        %v1021 = vadd.f32 %v997, %v1020
        %v1022 = vpop.f32.mrf.mxu0
        %v1023 = vadd.f32 %v999, %v1022
        %1024 = vdwg.mxu0
        %1025 = vmatpush.bf16.msra.mxu0 %v946
        %1026 = vmatpush.bf16.msra.mxu0 %v944
        %1027 = vmatpush.bf16.msra.mxu0 %v942
        %1028 = vmatpush.bf16.msra.mxu0 %v940
        %1029 = vmatpush.bf16.msra.mxu0 %v938
        %1030 = vmatpush.bf16.msra.mxu0 %v936
        %1031 = vmatpush.bf16.msra.mxu0 %v934
        %1032 = vmatpush.bf16.msra.mxu0 %v932
        %1033 = vmatmul.bf16.gmra.mxu0 %v868
        %v1034 = vpop.f32.mrf.mxu0
        %v1035 = vadd.f32 %v847, %v1034
        %v1036 = vpop.f32.mrf.mxu0
        %v1037 = vadd.f32 %v847, %v1036
        %1038 = vmatmul.bf16.gmra.mxu0 %v870
        %v1039 = vpop.f32.mrf.mxu0
        %v1040 = vadd.f32 %v847, %v1039
        %v1041 = vpop.f32.mrf.mxu0
        %v1042 = vadd.f32 %v847, %v1041
        %1043 = vmatmul.bf16.gmra.mxu0 %v872
        %v1044 = vpop.f32.mrf.mxu0
        %v1045 = vadd.f32 %v847, %v1044
        %v1046 = vpop.f32.mrf.mxu0
        %v1047 = vadd.f32 %v847, %v1046
        %1048 = vdwg.mxu0
        %1049 = vmatpush.bf16.msra.mxu0 0
        %1050 = vmatpush.bf16.msra.mxu0 0
        %1051 = vmatpush.bf16.msra.mxu0 0
        %1052 = vmatpush.bf16.msra.mxu0 0
        %1053 = vmatpush.bf16.msra.mxu0 0
        %1054 = vmatpush.bf16.msra.mxu0 0
        %1055 = vmatpush.bf16.msra.mxu0 0
        %1056 = vmatpush.bf16.msra.mxu0 %v948
        %1057 = vmatmul.bf16.gmra.mxu0 %v969
        %v1058 = vpop.f32.mrf.mxu0
        %v1059 = vadd.f32 %v1035, %v1058
        %v1060 = vpop.f32.mrf.mxu0
        %v1061 = vadd.f32 %v1037, %v1060
        %1062 = vmatmul.bf16.gmra.mxu0 %v972
        %v1063 = vpop.f32.mrf.mxu0
        %v1064 = vadd.f32 %v1040, %v1063
        %v1065 = vpop.f32.mrf.mxu0
        %v1066 = vadd.f32 %v1042, %v1065
        %1067 = vmatmul.bf16.gmra.mxu0 %v975
        %v1068 = vpop.f32.mrf.mxu0
        %v1069 = vadd.f32 %v1045, %v1068
        %v1070 = vpop.f32.mrf.mxu0
        %v1071 = vadd.f32 %v1047, %v1070
        %1072 = vdwg.mxu0
        %v1073 = vmax.f32 %v1011, 0.0
        %v1074 = vmax.f32 %v1059, 0.0
        %v1075 = vmax.f32 %v1013, 0.0
        %v1076 = vmax.f32 %v1061, 0.0
        %v1077 = vmax.f32 %v1016, 0.0
        %v1078 = vmax.f32 %v1064, 0.0
        %v1079 = vmax.f32 %v1018, 0.0
        %v1080 = vmax.f32 %v1066, 0.0
        %v1081 = vmax.f32 %v1021, 0.0
        %v1082 = vmax.f32 %v1069, 0.0
        %v1083 = vmax.f32 %v1023, 0.0
        %v1084 = vmax.f32 %v1071, 0.0
        %v1085 = vmax.f32 %v1073, %v1075
        %v1086 = vmax.f32 %v1074, %v1076
        %v1087 = vmax.f32 %v1085, %v1077
        %v1088 = vmax.f32 %v1086, %v1078
        %v1089 = vmax.f32 %v1087, %v1079
        %v1090 = vmax.f32 %v1088, %v1080
        %v1091 = vmax.f32 %v1089, %v1081
        %v1092 = vmax.f32 %v1090, %v1082
        %v1093 = vmax.f32 %v1091, %v1083
        %v1094 = vmax.f32 %v1092, %v1084
        %v1095 = vld [vmem:[#allocation9] sm:$0x3]
        %v1096 = vld [vmem:[#allocation11] sm:$0x3]
        %vm1097 = vcmask 261120
        %v1098 = vsel %vm1097, %v1094, 0.0
        %v1099 = vadd.f32 %v1093, %v1098
        %1100 = vadd.xlane.f32.xlu0 %v1099
        %v1101 = vpop.xlane.xlu0 %1100
        %v1102 = vrcp.pop 160.0
        %v1103 = vmul.f32 160.0, %v1102
        %v1104 = vsub.f32 1.0, %v1103
        %v1105 = vmul.f32 %v1102, %v1104
        %v1106 = vadd.f32 %v1102, %v1105
        %vm1107 = vweird.f32 %v1102
        %v1108 = vsel %vm1107, %v1102, %v1106
        %v1109 = vmul.f32 %v1101, %v1108
        %v1110 = vsub.f32 %v1093, %v1109
        %v1111 = vsub.f32 %v1094, %v1109
        %v1112 = vmul.f32 %v1110, %v1110
        %v1113 = vmul.f32 %v1111, %v1111
        %v1114 = vsel %vm1097, %v1113, 0.0
        %v1115 = vadd.f32 %v1112, %v1114
        %1116 = vadd.xlane.f32.xlu0 %v1115
        %v1117 = vpop.xlane.xlu0 %1116
        %v1118 = vmul.f32 %v1117, %v1108
        %v1119 = vadd.f32 %v1118, 1e-05
        %v1120 = vrsqrt.pop %v1119
        %v1121 = vmul.f32 %v1120, %v1119
        %v1122 = vmul.f32 %v1121, %v1120
        %v1123 = vmul.f32 0.5, %v1122
        %v1124 = vsub.f32 1.5, %v1123
        %v1125 = vmul.f32 %v1120, %v1124
        %vm1126 = vweird.f32 %v1119
        %vm1127 = vweird.f32 %v1120
        %vm1128 = vmor %vm1126, %vm1127
        %v1129 = vsel %vm1128, %v1120, %v1125
        %v1130 = vmul.f32 %v1110, %v1129
        %v1131 = vmul.f32 %v1111, %v1129
        %v1133 = vperm.slane %v1095, 0
        %v1134 = vperm.slane %v1095, 1
        %v1137 = vmul.f32 %v1130, %v1133
        %v1138 = vmul.f32 %v1131, %v1134
        %v1140 = vperm.slane %v1096, 0
        %v1141 = vperm.slane %v1096, 1
        %v1144 = vadd.f32 %v1137, %v1140
        %v1145 = vadd.f32 %v1138, %v1141
        %v1146 = vld [vmem:[#allocation12] sm:$0x3]
        %v1147 = vld [vmem:[#allocation14] sm:$0x3]
        %v1148 = vsel %vm1097, %v1145, 0.0
        %v1149 = vadd.f32 %v1144, %v1148
        %1150 = vadd.xlane.f32.xlu0 %v1149
        %v1151 = vpop.xlane.xlu0 %1150
        %v1152 = vmul.f32 %v1151, %v1108
        %v1153 = vsub.f32 %v1144, %v1152
        %v1154 = vsub.f32 %v1145, %v1152
        %v1155 = vmul.f32 %v1153, %v1153
        %v1156 = vmul.f32 %v1154, %v1154
        %v1157 = vsel %vm1097, %v1156, 0.0
        %v1158 = vadd.f32 %v1155, %v1157
        %1159 = vadd.xlane.f32.xlu0 %v1158
        %v1160 = vpop.xlane.xlu0 %1159
        %v1161 = vmul.f32 %v1160, %v1108
        %v1162 = vadd.f32 %v1161, 1e-05
        %v1163 = vrsqrt.pop %v1162
        %v1164 = vmul.f32 %v1163, %v1162
        %v1165 = vmul.f32 %v1164, %v1163
        %v1166 = vmul.f32 0.5, %v1165
        %v1167 = vsub.f32 1.5, %v1166
        %v1168 = vmul.f32 %v1163, %v1167
        %vm1169 = vweird.f32 %v1162
        %vm1170 = vweird.f32 %v1163
        %vm1171 = vmor %vm1169, %vm1170
        %v1172 = vsel %vm1171, %v1163, %v1168
        %v1173 = vmul.f32 %v1153, %v1172
        %v1174 = vmul.f32 %v1154, %v1172
        %v1176 = vperm.slane %v1146, 0
        %v1177 = vperm.slane %v1146, 1
        %v1180 = vmul.f32 %v1173, %v1176
        %v1181 = vmul.f32 %v1174, %v1177
        %v1183 = vperm.slane %v1147, 0
        %v1184 = vperm.slane %v1147, 1
        %v1187 = vadd.f32 %v1180, %v1183
        %v1188 = vadd.f32 %v1181, %v1184
        %v1189 = vpack.c.bf16 %v1187, %v1187
        %v1190 = vpack.c.bf16 %v1188, %v1188
        %v1191 = vld [vmem:[%s730] sm:$0x3]
        %v1192 = vld [vmem:[#allocation17] sm:$0xf]
        %v1193 = vld [vmem:[#allocation17 + $0x4] sm:$0xf]
        %v1194 = vld [vmem:[#allocation17 + $0x8] sm:$0xf]
        %v1195 = vld [vmem:[#allocation17 + $0xc] sm:$0xf]
        %v1196 = vld [vmem:[#allocation17 + $0x10] sm:$0xf]
        %v1197 = vld [vmem:[#allocation17 + $0x14] sm:$0xf]
        %v1198 = vld [vmem:[#allocation17 + $0x18] sm:$0xf]
        %v1199 = vld [vmem:[#allocation17 + $0x1c] sm:$0xf]
        %v1200 = vld [vmem:[#allocation17 + $0x20] sm:$0xf]
        %v1201 = vld [vmem:[#allocation17 + $0x24] sm:$0xf]
        %v1202 = vld [vmem:[#allocation17 + $0x28] sm:$0xf]
        %v1203 = vld [vmem:[#allocation17 + $0x2c] sm:$0xf]
        %v1204 = vld [vmem:[#allocation17 + $0x30] sm:$0xf]
        %v1205 = vld [vmem:[#allocation17 + $0x34] sm:$0xf]
        %v1206 = vld [vmem:[#allocation17 + $0x38] sm:$0xf]
        %v1207 = vld [vmem:[#allocation17 + $0x3c] sm:$0xf]
        %v1208 = vld [vmem:[#allocation17 + $0x40] sm:$0xf]
        %v1209 = vld [vmem:[#allocation17 + $0x44] sm:$0xf]
        %v1210 = vld [vmem:[#allocation17 + $0x48] sm:$0xf]
        %v1211 = vld [vmem:[#allocation17 + $0x4c] sm:$0xf]
        %1213 = vst [vmem:[#allocation1] ss:$9 sm:$0xff] %v1191
        %v1214 = vld [vmem:[#allocation1] sm:$0xff]
        %v1215 = vld [vmem:[#allocation1 + $0x9] sm:$0xff]
        %v1237 = vunpack.c.l.b16 %v1192
        %v1238 = vunpack.c.l.b16 %v1193
        %v1239 = vunpack.c.l.b16 %v1194
        %v1240 = vunpack.c.l.b16 %v1195
        %v1241 = vunpack.c.l.b16 %v1196
        %v1242 = vunpack.c.l.b16 %v1197
        %v1243 = vunpack.c.l.b16 %v1198
        %v1244 = vunpack.c.l.b16 %v1199
        %v1245 = vunpack.c.l.b16 %v1200
        %v1246 = vunpack.c.l.b16 %v1201
        %v1247 = vunpack.c.l.b16 %v1202
        %v1248 = vunpack.c.l.b16 %v1203
        %v1249 = vunpack.c.l.b16 %v1204
        %v1250 = vunpack.c.l.b16 %v1205
        %v1251 = vunpack.c.l.b16 %v1206
        %v1252 = vunpack.c.l.b16 %v1207
        %v1253 = vunpack.c.l.b16 %v1208
        %v1254 = vunpack.c.l.b16 %v1209
        %v1255 = vunpack.c.l.b16 %v1210
        %v1256 = vunpack.c.l.b16 %v1211
        %v1257 = vpack.c.b16 %v1238, %v1237
        %v1258 = vpack.c.b16 %v1240, %v1239
        %v1259 = vpack.c.b16 %v1242, %v1241
        %v1260 = vpack.c.b16 %v1244, %v1243
        %v1261 = vpack.c.b16 %v1246, %v1245
        %v1262 = vpack.c.b16 %v1248, %v1247
        %v1263 = vpack.c.b16 %v1250, %v1249
        %v1264 = vpack.c.b16 %v1252, %v1251
        %v1265 = vpack.c.b16 %v1254, %v1253
        %v1266 = vpack.c.b16 %v1256, %v1255
        %v1277 = vsel %vm1097, %v1215, 0
        %1279 = vmatpush.bf16.msra.mxu0 %v1264
        %1280 = vmatpush.bf16.msra.mxu0 %v1263
        %1281 = vmatpush.bf16.msra.mxu0 %v1262
        %1282 = vmatpush.bf16.msra.mxu0 %v1261
        %1283 = vmatpush.bf16.msra.mxu0 %v1260
        %1284 = vmatpush.bf16.msra.mxu0 %v1259
        %1285 = vmatpush.bf16.msra.mxu0 %v1258
        %1286 = vmatpush.bf16.msra.mxu0 %v1257
        %1287 = vmatmul.bf16.gmra.mxu0 %v1214
        %v1288 = vpop.f32.mrf.mxu0
        %v1289 = vadd.f32 0.0, %v1288
        %v1290 = vpop.f32.mrf.mxu0
        %1291 = vdwg.mxu0
        %1292 = vmatpush.bf16.msra.mxu0 0
        %1293 = vmatpush.bf16.msra.mxu0 0
        %1294 = vmatpush.bf16.msra.mxu0 0
        %1295 = vmatpush.bf16.msra.mxu0 0
        %1296 = vmatpush.bf16.msra.mxu0 0
        %1297 = vmatpush.bf16.msra.mxu0 0
        %1298 = vmatpush.bf16.msra.mxu0 %v1266
        %1299 = vmatpush.bf16.msra.mxu0 %v1265
        %1300 = vmatmul.bf16.gmra.mxu0 %v1277
        %v1301 = vpop.f32.mrf.mxu0
        %v1302 = vadd.f32 %v1289, %v1301
        %v1303 = vpop.f32.mrf.mxu0
        %1304 = vdwg.mxu0
        %v1305 = vld [vmem:[#allocation18] sm:$0xf]
        %v1306 = vld [vmem:[#allocation18 + $0x4] sm:$0xf]
        %v1307 = vld [vmem:[#allocation18 + $0x8] sm:$0xf]
        %v1308 = vld [vmem:[#allocation18 + $0xc] sm:$0xf]
        %v1309 = vld [vmem:[#allocation18 + $0x10] sm:$0xf]
        %v1310 = vld [vmem:[#allocation18 + $0x14] sm:$0xf]
        %v1311 = vld [vmem:[#allocation18 + $0x18] sm:$0xf]
        %v1312 = vld [vmem:[#allocation18 + $0x1c] sm:$0xf]
        %v1313 = vld [vmem:[#allocation18 + $0x20] sm:$0xf]
        %v1314 = vld [vmem:[#allocation18 + $0x24] sm:$0xf]
        %v1315 = vld [vmem:[#allocation18 + $0x28] sm:$0xf]
        %v1316 = vld [vmem:[#allocation18 + $0x2c] sm:$0xf]
        %v1317 = vld [vmem:[#allocation18 + $0x30] sm:$0xf]
        %v1318 = vld [vmem:[#allocation18 + $0x34] sm:$0xf]
        %v1319 = vld [vmem:[#allocation18 + $0x38] sm:$0xf]
        %v1320 = vld [vmem:[#allocation18 + $0x3c] sm:$0xf]
        %v1321 = vld [vmem:[#allocation18 + $0x40] sm:$0xf]
        %v1322 = vld [vmem:[#allocation18 + $0x44] sm:$0xf]
        %v1323 = vld [vmem:[#allocation18 + $0x48] sm:$0xf]
        %v1324 = vld [vmem:[#allocation18 + $0x4c] sm:$0xf]
        %v1345 = vunpack.c.l.b16 %v1305
        %v1346 = vunpack.c.l.b16 %v1306
        %v1347 = vunpack.c.l.b16 %v1307
        %v1348 = vunpack.c.l.b16 %v1308
        %v1349 = vunpack.c.l.b16 %v1309
        %v1350 = vunpack.c.l.b16 %v1310
        %v1351 = vunpack.c.l.b16 %v1311
        %v1352 = vunpack.c.l.b16 %v1312
        %v1353 = vunpack.c.l.b16 %v1313
        %v1354 = vunpack.c.l.b16 %v1314
        %v1355 = vunpack.c.l.b16 %v1315
        %v1356 = vunpack.c.l.b16 %v1316
        %v1357 = vunpack.c.l.b16 %v1317
        %v1358 = vunpack.c.l.b16 %v1318
        %v1359 = vunpack.c.l.b16 %v1319
        %v1360 = vunpack.c.l.b16 %v1320
        %v1361 = vunpack.c.l.b16 %v1321
        %v1362 = vunpack.c.l.b16 %v1322
        %v1363 = vunpack.c.l.b16 %v1323
        %v1364 = vunpack.c.l.b16 %v1324
        %v1365 = vpack.c.b16 %v1346, %v1345
        %v1366 = vpack.c.b16 %v1348, %v1347
        %v1367 = vpack.c.b16 %v1350, %v1349
        %v1368 = vpack.c.b16 %v1352, %v1351
        %v1369 = vpack.c.b16 %v1354, %v1353
        %v1370 = vpack.c.b16 %v1356, %v1355
        %v1371 = vpack.c.b16 %v1358, %v1357
        %v1372 = vpack.c.b16 %v1360, %v1359
        %v1373 = vpack.c.b16 %v1362, %v1361
        %v1374 = vpack.c.b16 %v1364, %v1363
        %v1386 = vsel %vm1097, %v1190, 0
        %1388 = vmatpush.bf16.msra.mxu0 %v1372
        %1389 = vmatpush.bf16.msra.mxu0 %v1371
        %1390 = vmatpush.bf16.msra.mxu0 %v1370
        %1391 = vmatpush.bf16.msra.mxu0 %v1369
        %1392 = vmatpush.bf16.msra.mxu0 %v1368
        %1393 = vmatpush.bf16.msra.mxu0 %v1367
        %1394 = vmatpush.bf16.msra.mxu0 %v1366
        %1395 = vmatpush.bf16.msra.mxu0 %v1365
        %1396 = vmatmul.bf16.gmra.mxu0 %v1189
        %v1397 = vpop.f32.mrf.mxu0
        %v1398 = vadd.f32 0.0, %v1397
        %v1399 = vpop.f32.mrf.mxu0
        %1400 = vdwg.mxu0
        %1401 = vmatpush.bf16.msra.mxu0 0
        %1402 = vmatpush.bf16.msra.mxu0 0
        %1403 = vmatpush.bf16.msra.mxu0 0
        %1404 = vmatpush.bf16.msra.mxu0 0
        %1405 = vmatpush.bf16.msra.mxu0 0
        %1406 = vmatpush.bf16.msra.mxu0 0
        %1407 = vmatpush.bf16.msra.mxu0 %v1374
        %1408 = vmatpush.bf16.msra.mxu0 %v1373
        %1409 = vmatmul.bf16.gmra.mxu0 %v1386
        %v1410 = vpop.f32.mrf.mxu0
        %v1411 = vadd.f32 %v1398, %v1410
        %v1412 = vpop.f32.mrf.mxu0
        %1413 = vdwg.mxu0
        %v1415 = vrot.slane %v1302, 1
        %v1416 = vperm.slane %v1302, 0
        %v1417 = vperm.slane %v1415, 0
        %v1420 = vadd.f32 %v1416, %v1411
        %v1421 = vadd.f32 %v1417, %v1411
        %v1422 = vld [vmem:[#allocation20] sm:$0x1]
        %v1424 = vperm.slane %v1422, 0
        %v1426 = vadd.f32 %v1420, %v1424
        %v1427 = vadd.f32 %v1421, %v1424
        %v1428 = vtanh.pop %v1426
        %v1429 = vtanh.pop %v1427
        %v1430 = vld [vmem:[#allocation21] sm:$0x1]
        %v1432 = vperm.slane %v1430, 0
        %v1434 = vmul.f32 %v1428, %v1432
        %v1435 = vmul.f32 %v1429, %v1432
        %1436 = vadd.xlane.f32.xlu0 %v1434
        %v1437 = vpop.xlane.xlu0 %1436
        %1438 = vadd.xlane.f32.xlu0 %v1435
        %v1439 = vpop.xlane.xlu0 %1438
        %v1442 = vlaneseq
        %v1443 = vand.u32 %v1442, 127
        %v1444 = vperm.slane %v1437, %v1443
        %v1445 = vperm.slane %v1439, %v1443
        %vm1446 = vcmask 1041409
        %v1447 = vsel %vm1446, %v1445, %v1444
        %vm1449 = vcmask 58368
        %v1450 = vsel %vm1449, %v1447, -inf
        %1451 = vmax.xlane.f32.xlu0 %v1450
        %v1452 = vpop.xlane.xlu0 %1451
        %v1454 = vperm.slane %v1452, 0
        %v1455 = vperm.slane %v1452, 1
        %v1458 = vsub.f32 %v1437, %v1454
        %v1459 = vsub.f32 %v1439, %v1455
        %v1460 = vmul.f32 %v1458, 1.442695
        %v1461 = vpow.pop %v1460
        %v1462 = vmul.f32 %v1459, 1.442695
        %v1463 = vpow.pop %v1462
        %1466 = vset.pattern.permute.xlu0 0
        %1467 = vperm.xlu0 %1466, %v1461
        %v1468 = vpop.permute.xlu0 %1467
        %1469 = vset.pattern.permute.xlu0 0
        %1470 = vperm.xlu0 %1469, %v1463
        %v1471 = vpop.permute.xlu0 %1470
        %v1472 = vperm.slane %v1468, %v1443
        %v1473 = vperm.slane %v1471, %v1443
        %v1474 = vsel %vm1446, %v1473, %v1472
        %v1476 = vsel %vm1449, %v1474, 0.0
        %1477 = vadd.xlane.f32.xlu0 %v1476
        %v1478 = vpop.xlane.xlu0 %1477
        %v1479 = vrcp.pop %v1478
        %v1481 = vperm.slane %v1479, 0
        %v1482 = vperm.slane %v1479, 1
        %v1485 = vmul.f32 %v1461, %v1481
        %v1486 = vmul.f32 %v1463, %v1482
        %v1487 = vpack.c.bf16 %v1485, %v1485
        %v1488 = vpack.c.bf16 %v1486, %v1486
        %v1491 = vunpack.c.l.b16 %v1487
        %v1492 = vunpack.c.l.b16 %v1488
        %1493 = vset.pattern.permute.xlu0 0
        %1494 = vperm.xlu0 %1493, %v1491
        %v1495 = vpop.permute.xlu0 %1494
        %1496 = vset.pattern.permute.xlu0 0
        %1497 = vperm.xlu0 %1496, %v1492
        %v1498 = vpop.permute.xlu0 %1497
        %v1499 = vperm.slane %v1495, %v1443
        %v1500 = vperm.slane %v1498, %v1443
        %v1501 = vsel %vm1446, %v1500, %v1499
        %v1502 = vpack.c.b16 %v1501, %v1501
        %vm1503 = vcmask 64512
        %v1505 = vsel %vm1503, %v1502, 0
        %vm1507 = vcmask 1043456
        %v1509 = vsel %vm1507, %v1189, 0
        %v1511 = vsel %vm1507, %v1190, 0
        %1513 = vmatpush.bf16.msra.mxu0 0
        %1514 = vmatpush.bf16.msra.mxu0 0
        %1515 = vmatpush.bf16.msra.mxu0 0
        %1516 = vmatpush.bf16.msra.mxu0 0
        %1517 = vmatpush.bf16.msra.mxu0 0
        %1518 = vmatpush.bf16.msra.mxu0 0
        %1519 = vmatpush.bf16.msra.mxu0 0
        %1520 = vmatpush.bf16.msra.mxu0 %v1509
        %1521 = vmatmul.bf16.gmra.mxu0 %v1505
        %v1522 = vpop.f32.mrf.mxu0
        %v1523 = vadd.f32 0.0, %v1522
        %v1524 = vpop.f32.mrf.mxu0
        %1525 = vdwg.mxu0
        %1526 = vmatpush.bf16.msra.mxu0 0
        %1527 = vmatpush.bf16.msra.mxu0 0
        %1528 = vmatpush.bf16.msra.mxu0 0
        %1529 = vmatpush.bf16.msra.mxu0 0
        %1530 = vmatpush.bf16.msra.mxu0 0
        %1531 = vmatpush.bf16.msra.mxu0 0
        %1532 = vmatpush.bf16.msra.mxu0 0
        %1533 = vmatpush.bf16.msra.mxu0 %v1511
        %1534 = vmatmul.bf16.gmra.mxu0 %v1505
        %v1535 = vpop.f32.mrf.mxu0
        %v1536 = vadd.f32 0.0, %v1535
        %v1537 = vpop.f32.mrf.mxu0
        %1538 = vdwg.mxu0
        %v1539 = vld [vmem:[#allocation23] sm:$0xff]
        %v1540 = vld [vmem:[#allocation23 + $0x8] sm:$0xff]
        %v1541 = vld [vmem:[#allocation23 + $0x10] sm:$0xff]
        %v1542 = vld [vmem:[#allocation23 + $0x18] sm:$0xff]
        %v1543 = vld [vmem:[#allocation23 + $0x20] sm:$0xff]
        %v1544 = vld [vmem:[#allocation23 + $0x28] sm:$0xff]
        %v1545 = vld [vmem:[#allocation23 + $0x30] sm:$0xff]
        %v1546 = vld [vmem:[#allocation23 + $0x38] sm:$0xff]
        %v1547 = vld [vmem:[#allocation23 + $0x40] sm:$0xff]
        %v1548 = vld [vmem:[#allocation23 + $0x48] sm:$0xff]
        %v1549 = vld [vmem:[#allocation23 + $0x50] sm:$0xff]
        %v1550 = vld [vmem:[#allocation23 + $0x58] sm:$0xff]
        %v1551 = vld [vmem:[#allocation23 + $0x60] sm:$0xff]
        %v1552 = vld [vmem:[#allocation23 + $0x68] sm:$0xff]
        %v1553 = vld [vmem:[#allocation23 + $0x70] sm:$0xff]
        %v1554 = vld [vmem:[#allocation23 + $0x78] sm:$0xff]
        %v1555 = vld [vmem:[#allocation23 + $0x80] sm:$0xff]
        %v1556 = vld [vmem:[#allocation23 + $0x88] sm:$0xff]
        %v1557 = vld [vmem:[#allocation23 + $0x90] sm:$0xff]
        %v1558 = vld [vmem:[#allocation23 + $0x98] sm:$0xff]
        %v1559 = vld [vmem:[#allocation23 + $0xa0] sm:$0xff]
        %v1560 = vld [vmem:[#allocation23 + $0xa8] sm:$0xff]
        %v1561 = vld [vmem:[#allocation23 + $0xb0] sm:$0xff]
        %v1562 = vld [vmem:[#allocation23 + $0xb8] sm:$0xff]
        %v1563 = vld [vmem:[#allocation23 + $0xc0] sm:$0xff]
        %v1564 = vld [vmem:[#allocation23 + $0xc8] sm:$0xff]
        %v1565 = vld [vmem:[#allocation23 + $0xd0] sm:$0xff]
        %v1566 = vld [vmem:[#allocation23 + $0xd8] sm:$0xff]
        %v1567 = vld [vmem:[#allocation23 + $0xe0] sm:$0xff]
        %v1568 = vld [vmem:[#allocation23 + $0xe8] sm:$0xff]
        %v1569 = vld [vmem:[#allocation23 + $0xf0] sm:$0xff]
        %v1570 = vld [vmem:[#allocation23 + $0xf8] sm:$0xff]
        %v1571 = vld [vmem:[#allocation23 + $0x100] sm:$0xff]
        %v1572 = vld [vmem:[#allocation23 + $0x108] sm:$0xff]
        %v1573 = vld [vmem:[#allocation23 + $0x110] sm:$0xff]
        %v1574 = vld [vmem:[#allocation23 + $0x118] sm:$0xff]
        %v1575 = vld [vmem:[#allocation23 + $0x120] sm:$0xff]
        %v1576 = vld [vmem:[#allocation23 + $0x128] sm:$0xff]
        %v1577 = vld [vmem:[#allocation23 + $0x130] sm:$0xff]
        %v1578 = vld [vmem:[#allocation23 + $0x138] sm:$0xff]
        %v1579 = vld [vmem:[#allocation23 + $0x140] sm:$0xff]
        %v1580 = vld [vmem:[#allocation23 + $0x148] sm:$0xff]
        %v1581 = vld [vmem:[#allocation23 + $0x150] sm:$0xff]
        %v1582 = vld [vmem:[#allocation23 + $0x158] sm:$0xff]
        %v1583 = vld [vmem:[#allocation23 + $0x160] sm:$0xff]
        %v1584 = vld [vmem:[#allocation23 + $0x168] sm:$0xff]
        %v1585 = vld [vmem:[#allocation23 + $0x170] sm:$0xff]
        %v1586 = vld [vmem:[#allocation23 + $0x178] sm:$0xff]
        %v1587 = vld [vmem:[#allocation23 + $0x180] sm:$0xff]
        %v1588 = vld [vmem:[#allocation23 + $0x188] sm:$0xff]
        %v1589 = vld [vmem:[#allocation23 + $0x190] sm:$0xff]
        %v1590 = vld [vmem:[#allocation23 + $0x198] sm:$0xff]
        %v1591 = vld [vmem:[#allocation23 + $0x1a0] sm:$0xff]
        %v1592 = vld [vmem:[#allocation23 + $0x1a8] sm:$0xff]
        %v1593 = vld [vmem:[#allocation23 + $0x1b0] sm:$0xff]
        %v1594 = vld [vmem:[#allocation23 + $0x1b8] sm:$0xff]
        %v1595 = vld [vmem:[#allocation23 + $0x1c0] sm:$0xff]
        %v1596 = vld [vmem:[#allocation23 + $0x1c8] sm:$0xff]
        %v1597 = vld [vmem:[#allocation23 + $0x1d0] sm:$0xff]
        %v1598 = vld [vmem:[#allocation23 + $0x1d8] sm:$0xff]
        %v1599 = vld [vmem:[%s14] sm:$0x3f]
        %v1601 = vperm.slane %v1599, 0
        %v1602 = vperm.slane %v1599, 1
        %v1603 = vperm.slane %v1599, 2
        %v1604 = vperm.slane %v1599, 3
        %v1605 = vperm.slane %v1599, 4
        %v1606 = vperm.slane %v1599, 5
        %v1673 = vunpack.c.l.b16 %v1539
        %v1674 = vunpack.c.h.b16 %v1539
        %v1675 = vunpack.c.l.b16 %v1540
        %v1676 = vunpack.c.h.b16 %v1540
        %v1677 = vunpack.c.l.b16 %v1541
        %v1678 = vunpack.c.h.b16 %v1541
        %v1679 = vunpack.c.l.b16 %v1542
        %v1680 = vunpack.c.h.b16 %v1542
        %v1681 = vunpack.c.l.b16 %v1543
        %v1682 = vunpack.c.h.b16 %v1543
        %v1683 = vunpack.c.l.b16 %v1544
        %v1684 = vunpack.c.h.b16 %v1544
        %v1685 = vunpack.c.l.b16 %v1545
        %v1686 = vunpack.c.h.b16 %v1545
        %v1687 = vunpack.c.l.b16 %v1546
        %v1688 = vunpack.c.h.b16 %v1546
        %v1689 = vunpack.c.l.b16 %v1547
        %v1690 = vunpack.c.h.b16 %v1547
        %v1691 = vunpack.c.l.b16 %v1548
        %v1692 = vunpack.c.h.b16 %v1548
        %v1693 = vunpack.c.l.b16 %v1549
        %v1694 = vunpack.c.h.b16 %v1549
        %v1695 = vunpack.c.l.b16 %v1550
        %v1696 = vunpack.c.h.b16 %v1550
        %v1697 = vunpack.c.l.b16 %v1551
        %v1698 = vunpack.c.h.b16 %v1551
        %v1699 = vunpack.c.l.b16 %v1552
        %v1700 = vunpack.c.h.b16 %v1552
        %v1701 = vunpack.c.l.b16 %v1553
        %v1702 = vunpack.c.h.b16 %v1553
        %v1703 = vunpack.c.l.b16 %v1554
        %v1704 = vunpack.c.h.b16 %v1554
        %v1705 = vunpack.c.l.b16 %v1555
        %v1706 = vunpack.c.h.b16 %v1555
        %v1707 = vunpack.c.l.b16 %v1556
        %v1708 = vunpack.c.h.b16 %v1556
        %v1709 = vunpack.c.l.b16 %v1557
        %v1710 = vunpack.c.h.b16 %v1557
        %v1711 = vunpack.c.l.b16 %v1558
        %v1712 = vunpack.c.h.b16 %v1558
        %v1713 = vunpack.c.l.b16 %v1559
        %v1714 = vunpack.c.h.b16 %v1559
        %v1715 = vunpack.c.l.b16 %v1560
        %v1716 = vunpack.c.h.b16 %v1560
        %v1717 = vunpack.c.l.b16 %v1561
        %v1718 = vunpack.c.h.b16 %v1561
        %v1719 = vunpack.c.l.b16 %v1562
        %v1720 = vunpack.c.h.b16 %v1562
        %v1721 = vunpack.c.l.b16 %v1563
        %v1722 = vunpack.c.h.b16 %v1563
        %v1723 = vunpack.c.l.b16 %v1564
        %v1724 = vunpack.c.h.b16 %v1564
        %v1725 = vunpack.c.l.b16 %v1565
        %v1726 = vunpack.c.h.b16 %v1565
        %v1727 = vunpack.c.l.b16 %v1566
        %v1728 = vunpack.c.h.b16 %v1566
        %v1729 = vunpack.c.l.b16 %v1567
        %v1730 = vunpack.c.h.b16 %v1567
        %v1731 = vunpack.c.l.b16 %v1568
        %v1732 = vunpack.c.h.b16 %v1568
        %v1733 = vunpack.c.l.b16 %v1569
        %v1734 = vunpack.c.h.b16 %v1569
        %v1735 = vunpack.c.l.b16 %v1570
        %v1736 = vunpack.c.h.b16 %v1570
        %v1737 = vunpack.c.l.b16 %v1571
        %v1738 = vunpack.c.h.b16 %v1571
        %v1739 = vunpack.c.l.b16 %v1572
        %v1740 = vunpack.c.h.b16 %v1572
        %v1741 = vunpack.c.l.b16 %v1573
        %v1742 = vunpack.c.h.b16 %v1573
        %v1743 = vunpack.c.l.b16 %v1574
        %v1744 = vunpack.c.h.b16 %v1574
        %v1745 = vunpack.c.l.b16 %v1575
        %v1746 = vunpack.c.h.b16 %v1575
        %v1747 = vunpack.c.l.b16 %v1576
        %v1748 = vunpack.c.h.b16 %v1576
        %v1749 = vunpack.c.l.b16 %v1577
        %v1750 = vunpack.c.h.b16 %v1577
        %v1751 = vunpack.c.l.b16 %v1578
        %v1752 = vunpack.c.h.b16 %v1578
        %v1753 = vunpack.c.l.b16 %v1579
        %v1754 = vunpack.c.h.b16 %v1579
        %v1755 = vunpack.c.l.b16 %v1580
        %v1756 = vunpack.c.h.b16 %v1580
        %v1757 = vunpack.c.l.b16 %v1581
        %v1758 = vunpack.c.h.b16 %v1581
        %v1759 = vunpack.c.l.b16 %v1582
        %v1760 = vunpack.c.h.b16 %v1582
        %v1761 = vunpack.c.l.b16 %v1583
        %v1762 = vunpack.c.h.b16 %v1583
        %v1763 = vunpack.c.l.b16 %v1584
        %v1764 = vunpack.c.h.b16 %v1584
        %v1765 = vunpack.c.l.b16 %v1585
        %v1766 = vunpack.c.h.b16 %v1585
        %v1767 = vunpack.c.l.b16 %v1586
        %v1768 = vunpack.c.h.b16 %v1586
        %v1769 = vunpack.c.l.b16 %v1587
        %v1770 = vunpack.c.h.b16 %v1587
        %v1771 = vunpack.c.l.b16 %v1588
        %v1772 = vunpack.c.h.b16 %v1588
        %v1773 = vunpack.c.l.b16 %v1589
        %v1774 = vunpack.c.h.b16 %v1589
        %v1775 = vunpack.c.l.b16 %v1590
        %v1776 = vunpack.c.h.b16 %v1590
        %v1777 = vunpack.c.l.b16 %v1591
        %v1778 = vunpack.c.h.b16 %v1591
        %v1779 = vunpack.c.l.b16 %v1592
        %v1780 = vunpack.c.h.b16 %v1592
        %v1781 = vunpack.c.l.b16 %v1593
        %v1782 = vunpack.c.h.b16 %v1593
        %v1783 = vunpack.c.l.b16 %v1594
        %v1784 = vunpack.c.h.b16 %v1594
        %v1785 = vunpack.c.l.b16 %v1595
        %v1786 = vunpack.c.h.b16 %v1595
        %v1787 = vunpack.c.l.b16 %v1596
        %v1788 = vunpack.c.h.b16 %v1596
        %v1789 = vunpack.c.l.b16 %v1597
        %v1790 = vunpack.c.h.b16 %v1597
        %v1791 = vunpack.c.l.b16 %v1598
        %v1792 = vunpack.c.h.b16 %v1598
        %v1793 = vpack.c.b16 %v1679, %v1673
        %v1794 = vpack.c.b16 %v1680, %v1674
        %v1795 = vpack.c.b16 %v1681, %v1675
        %v1796 = vpack.c.b16 %v1682, %v1676
        %v1797 = vpack.c.b16 %v1683, %v1677
        %v1798 = vpack.c.b16 %v1684, %v1678
        %v1799 = vpack.c.b16 %v1691, %v1685
        %v1800 = vpack.c.b16 %v1692, %v1686
        %v1801 = vpack.c.b16 %v1693, %v1687
        %v1802 = vpack.c.b16 %v1694, %v1688
        %v1803 = vpack.c.b16 %v1695, %v1689
        %v1804 = vpack.c.b16 %v1696, %v1690
        %v1805 = vpack.c.b16 %v1703, %v1697
        %v1806 = vpack.c.b16 %v1704, %v1698
        %v1807 = vpack.c.b16 %v1705, %v1699
        %v1808 = vpack.c.b16 %v1706, %v1700
        %v1809 = vpack.c.b16 %v1707, %v1701
        %v1810 = vpack.c.b16 %v1708, %v1702
        %v1811 = vpack.c.b16 %v1715, %v1709
        %v1812 = vpack.c.b16 %v1716, %v1710
        %v1813 = vpack.c.b16 %v1717, %v1711
        %v1814 = vpack.c.b16 %v1718, %v1712
        %v1815 = vpack.c.b16 %v1719, %v1713
        %v1816 = vpack.c.b16 %v1720, %v1714
        %v1817 = vpack.c.b16 %v1727, %v1721
        %v1818 = vpack.c.b16 %v1728, %v1722
        %v1819 = vpack.c.b16 %v1729, %v1723
        %v1820 = vpack.c.b16 %v1730, %v1724
        %v1821 = vpack.c.b16 %v1731, %v1725
        %v1822 = vpack.c.b16 %v1732, %v1726
        %v1823 = vpack.c.b16 %v1739, %v1733
        %v1824 = vpack.c.b16 %v1740, %v1734
        %v1825 = vpack.c.b16 %v1741, %v1735
        %v1826 = vpack.c.b16 %v1742, %v1736
        %v1827 = vpack.c.b16 %v1743, %v1737
        %v1828 = vpack.c.b16 %v1744, %v1738
        %v1829 = vpack.c.b16 %v1751, %v1745
        %v1830 = vpack.c.b16 %v1752, %v1746
        %v1831 = vpack.c.b16 %v1753, %v1747
        %v1832 = vpack.c.b16 %v1754, %v1748
        %v1833 = vpack.c.b16 %v1755, %v1749
        %v1834 = vpack.c.b16 %v1756, %v1750
        %v1835 = vpack.c.b16 %v1763, %v1757
        %v1836 = vpack.c.b16 %v1764, %v1758
        %v1837 = vpack.c.b16 %v1765, %v1759
        %v1838 = vpack.c.b16 %v1766, %v1760
        %v1839 = vpack.c.b16 %v1767, %v1761
        %v1840 = vpack.c.b16 %v1768, %v1762
        %v1841 = vpack.c.b16 %v1775, %v1769
        %v1842 = vpack.c.b16 %v1776, %v1770
        %v1843 = vpack.c.b16 %v1777, %v1771
        %v1844 = vpack.c.b16 %v1778, %v1772
        %v1845 = vpack.c.b16 %v1779, %v1773
        %v1846 = vpack.c.b16 %v1780, %v1774
        %v1847 = vpack.c.b16 %v1787, %v1781
        %v1848 = vpack.c.b16 %v1788, %v1782
        %v1849 = vpack.c.b16 %v1789, %v1783
        %v1850 = vpack.c.b16 %v1790, %v1784
        %v1851 = vpack.c.b16 %v1791, %v1785
        %v1852 = vpack.c.b16 %v1792, %v1786
        %1913 = vmatpush.bf16.msra.mxu0 %v1835
        %1914 = vmatpush.bf16.msra.mxu0 %v1829
        %1915 = vmatpush.bf16.msra.mxu0 %v1823
        %1916 = vmatpush.bf16.msra.mxu0 %v1817
        %1917 = vmatpush.bf16.msra.mxu0 %v1811
        %1918 = vmatpush.bf16.msra.mxu0 %v1805
        %1919 = vmatpush.bf16.msra.mxu0 %v1799
        %1920 = vmatpush.bf16.msra.mxu0 %v1793
        %1921 = vmatmul.bf16.gmra.mxu0 %v1189
        %v1922 = vpop.f32.mrf.mxu0
        %v1923 = vadd.f32 %v1601, %v1922
        %v1924 = vpop.f32.mrf.mxu0
        %1925 = vdwg.mxu0
        %1926 = vmatpush.bf16.msra.mxu0 0
        %1927 = vmatpush.bf16.msra.mxu0 0
        %1928 = vmatpush.bf16.msra.mxu0 0
        %1929 = vmatpush.bf16.msra.mxu0 0
        %1930 = vmatpush.bf16.msra.mxu0 0
        %1931 = vmatpush.bf16.msra.mxu0 0
        %1932 = vmatpush.bf16.msra.mxu0 %v1847
        %1933 = vmatpush.bf16.msra.mxu0 %v1841
        %1934 = vmatmul.bf16.gmra.mxu0 %v1386
        %v1935 = vpop.f32.mrf.mxu0
        %v1936 = vadd.f32 %v1923, %v1935
        %v1937 = vpop.f32.mrf.mxu0
        %1938 = vdwg.mxu0
        %1939 = vmatpush.bf16.msra.mxu0 %v1836
        %1940 = vmatpush.bf16.msra.mxu0 %v1830
        %1941 = vmatpush.bf16.msra.mxu0 %v1824
        %1942 = vmatpush.bf16.msra.mxu0 %v1818
        %1943 = vmatpush.bf16.msra.mxu0 %v1812
        %1944 = vmatpush.bf16.msra.mxu0 %v1806
        %1945 = vmatpush.bf16.msra.mxu0 %v1800
        %1946 = vmatpush.bf16.msra.mxu0 %v1794
        %1947 = vmatmul.bf16.gmra.mxu0 %v1189
        %v1948 = vpop.f32.mrf.mxu0
        %v1949 = vadd.f32 %v1602, %v1948
        %v1950 = vpop.f32.mrf.mxu0
        %1951 = vdwg.mxu0
        %1952 = vmatpush.bf16.msra.mxu0 0
        %1953 = vmatpush.bf16.msra.mxu0 0
        %1954 = vmatpush.bf16.msra.mxu0 0
        %1955 = vmatpush.bf16.msra.mxu0 0
        %1956 = vmatpush.bf16.msra.mxu0 0
        %1957 = vmatpush.bf16.msra.mxu0 0
        %1958 = vmatpush.bf16.msra.mxu0 %v1848
        %1959 = vmatpush.bf16.msra.mxu0 %v1842
        %1960 = vmatmul.bf16.gmra.mxu0 %v1386
        %v1961 = vpop.f32.mrf.mxu0
        %v1962 = vadd.f32 %v1949, %v1961
        %v1963 = vpop.f32.mrf.mxu0
        %1964 = vdwg.mxu0
        %1965 = vmatpush.bf16.msra.mxu0 %v1837
        %1966 = vmatpush.bf16.msra.mxu0 %v1831
        %1967 = vmatpush.bf16.msra.mxu0 %v1825
        %1968 = vmatpush.bf16.msra.mxu0 %v1819
        %1969 = vmatpush.bf16.msra.mxu0 %v1813
        %1970 = vmatpush.bf16.msra.mxu0 %v1807
        %1971 = vmatpush.bf16.msra.mxu0 %v1801
        %1972 = vmatpush.bf16.msra.mxu0 %v1795
        %1973 = vmatmul.bf16.gmra.mxu0 %v1189
        %v1974 = vpop.f32.mrf.mxu0
        %v1975 = vadd.f32 %v1603, %v1974
        %v1976 = vpop.f32.mrf.mxu0
        %1977 = vdwg.mxu0
        %1978 = vmatpush.bf16.msra.mxu0 0
        %1979 = vmatpush.bf16.msra.mxu0 0
        %1980 = vmatpush.bf16.msra.mxu0 0
        %1981 = vmatpush.bf16.msra.mxu0 0
        %1982 = vmatpush.bf16.msra.mxu0 0
        %1983 = vmatpush.bf16.msra.mxu0 0
        %1984 = vmatpush.bf16.msra.mxu0 %v1849
        %1985 = vmatpush.bf16.msra.mxu0 %v1843
        %1986 = vmatmul.bf16.gmra.mxu0 %v1386
        %v1987 = vpop.f32.mrf.mxu0
        %v1988 = vadd.f32 %v1975, %v1987
        %v1989 = vpop.f32.mrf.mxu0
        %1990 = vdwg.mxu0
        %1991 = vmatpush.bf16.msra.mxu0 %v1838
        %1992 = vmatpush.bf16.msra.mxu0 %v1832
        %1993 = vmatpush.bf16.msra.mxu0 %v1826
        %1994 = vmatpush.bf16.msra.mxu0 %v1820
        %1995 = vmatpush.bf16.msra.mxu0 %v1814
        %1996 = vmatpush.bf16.msra.mxu0 %v1808
        %1997 = vmatpush.bf16.msra.mxu0 %v1802
        %1998 = vmatpush.bf16.msra.mxu0 %v1796
        %1999 = vmatmul.bf16.gmra.mxu0 %v1189
        %v2000 = vpop.f32.mrf.mxu0
        %v2001 = vadd.f32 %v1604, %v2000
        %v2002 = vpop.f32.mrf.mxu0
        %2003 = vdwg.mxu0
        %2004 = vmatpush.bf16.msra.mxu0 0
        %2005 = vmatpush.bf16.msra.mxu0 0
        %2006 = vmatpush.bf16.msra.mxu0 0
        %2007 = vmatpush.bf16.msra.mxu0 0
        %2008 = vmatpush.bf16.msra.mxu0 0
        %2009 = vmatpush.bf16.msra.mxu0 0
        %2010 = vmatpush.bf16.msra.mxu0 %v1850
        %2011 = vmatpush.bf16.msra.mxu0 %v1844
        %2012 = vmatmul.bf16.gmra.mxu0 %v1386
        %v2013 = vpop.f32.mrf.mxu0
        %v2014 = vadd.f32 %v2001, %v2013
        %v2015 = vpop.f32.mrf.mxu0
        %2016 = vdwg.mxu0
        %2017 = vmatpush.bf16.msra.mxu0 %v1839
        %2018 = vmatpush.bf16.msra.mxu0 %v1833
        %2019 = vmatpush.bf16.msra.mxu0 %v1827
        %2020 = vmatpush.bf16.msra.mxu0 %v1821
        %2021 = vmatpush.bf16.msra.mxu0 %v1815
        %2022 = vmatpush.bf16.msra.mxu0 %v1809
        %2023 = vmatpush.bf16.msra.mxu0 %v1803
        %2024 = vmatpush.bf16.msra.mxu0 %v1797
        %2025 = vmatmul.bf16.gmra.mxu0 %v1189
        %v2026 = vpop.f32.mrf.mxu0
        %v2027 = vadd.f32 %v1605, %v2026
        %v2028 = vpop.f32.mrf.mxu0
        %2029 = vdwg.mxu0
        %2030 = vmatpush.bf16.msra.mxu0 0
        %2031 = vmatpush.bf16.msra.mxu0 0
        %2032 = vmatpush.bf16.msra.mxu0 0
        %2033 = vmatpush.bf16.msra.mxu0 0
        %2034 = vmatpush.bf16.msra.mxu0 0
        %2035 = vmatpush.bf16.msra.mxu0 0
        %2036 = vmatpush.bf16.msra.mxu0 %v1851
        %2037 = vmatpush.bf16.msra.mxu0 %v1845
        %2038 = vmatmul.bf16.gmra.mxu0 %v1386
        %v2039 = vpop.f32.mrf.mxu0
        %v2040 = vadd.f32 %v2027, %v2039
        %v2041 = vpop.f32.mrf.mxu0
        %2042 = vdwg.mxu0
        %2043 = vmatpush.bf16.msra.mxu0 %v1840
        %2044 = vmatpush.bf16.msra.mxu0 %v1834
        %2045 = vmatpush.bf16.msra.mxu0 %v1828
        %2046 = vmatpush.bf16.msra.mxu0 %v1822
        %2047 = vmatpush.bf16.msra.mxu0 %v1816
        %2048 = vmatpush.bf16.msra.mxu0 %v1810
        %2049 = vmatpush.bf16.msra.mxu0 %v1804
        %2050 = vmatpush.bf16.msra.mxu0 %v1798
        %2051 = vmatmul.bf16.gmra.mxu0 %v1189
        %v2052 = vpop.f32.mrf.mxu0
        %v2053 = vadd.f32 %v1606, %v2052
        %v2054 = vpop.f32.mrf.mxu0
        %2055 = vdwg.mxu0
        %2056 = vmatpush.bf16.msra.mxu0 0
        %2057 = vmatpush.bf16.msra.mxu0 0
        %2058 = vmatpush.bf16.msra.mxu0 0
        %2059 = vmatpush.bf16.msra.mxu0 0
        %2060 = vmatpush.bf16.msra.mxu0 0
        %2061 = vmatpush.bf16.msra.mxu0 0
        %2062 = vmatpush.bf16.msra.mxu0 %v1852
        %2063 = vmatpush.bf16.msra.mxu0 %v1846
        %2064 = vmatmul.bf16.gmra.mxu0 %v1386
        %v2065 = vpop.f32.mrf.mxu0
        %v2066 = vadd.f32 %v2053, %v2065
        %v2067 = vpop.f32.mrf.mxu0
        %2068 = vdwg.mxu0
        %v2069 = vld [vmem:[#allocation24] sm:$0xff]
        %v2070 = vld [vmem:[#allocation24 + $0x8] sm:$0xff]
        %v2071 = vld [vmem:[#allocation24 + $0x10] sm:$0xff]
        %v2072 = vld [vmem:[#allocation24 + $0x18] sm:$0xff]
        %v2073 = vld [vmem:[#allocation24 + $0x20] sm:$0xff]
        %v2074 = vld [vmem:[#allocation24 + $0x28] sm:$0xff]
        %v2075 = vld [vmem:[#allocation24 + $0x30] sm:$0xff]
        %v2076 = vld [vmem:[#allocation24 + $0x38] sm:$0xff]
        %v2077 = vld [vmem:[#allocation24 + $0x40] sm:$0xff]
        %v2078 = vld [vmem:[#allocation24 + $0x48] sm:$0xff]
        %v2079 = vld [vmem:[#allocation24 + $0x50] sm:$0xff]
        %v2080 = vld [vmem:[#allocation24 + $0x58] sm:$0xff]
        %v2081 = vld [vmem:[#allocation24 + $0x60] sm:$0xff]
        %v2082 = vld [vmem:[#allocation24 + $0x68] sm:$0xff]
        %v2083 = vld [vmem:[#allocation24 + $0x70] sm:$0xff]
        %v2084 = vld [vmem:[#allocation24 + $0x78] sm:$0xff]
        %v2085 = vld [vmem:[#allocation24 + $0x80] sm:$0xff]
        %v2086 = vld [vmem:[#allocation24 + $0x88] sm:$0xff]
        %v2087 = vld [vmem:[#allocation24 + $0x90] sm:$0xff]
        %v2088 = vld [vmem:[#allocation24 + $0x98] sm:$0xff]
        %v2089 = vld [vmem:[#allocation24 + $0xa0] sm:$0xff]
        %v2090 = vld [vmem:[#allocation24 + $0xa8] sm:$0xff]
        %v2091 = vld [vmem:[#allocation24 + $0xb0] sm:$0xff]
        %v2092 = vld [vmem:[#allocation24 + $0xb8] sm:$0xff]
        %v2093 = vld [vmem:[#allocation24 + $0xc0] sm:$0xff]
        %v2094 = vld [vmem:[#allocation24 + $0xc8] sm:$0xff]
        %v2095 = vld [vmem:[#allocation24 + $0xd0] sm:$0xff]
        %v2096 = vld [vmem:[#allocation24 + $0xd8] sm:$0xff]
        %v2097 = vld [vmem:[#allocation24 + $0xe0] sm:$0xff]
        %v2098 = vld [vmem:[#allocation24 + $0xe8] sm:$0xff]
        %v2099 = vld [vmem:[#allocation24 + $0xf0] sm:$0xff]
        %v2100 = vld [vmem:[#allocation24 + $0xf8] sm:$0xff]
        %v2101 = vld [vmem:[#allocation24 + $0x100] sm:$0xff]
        %v2102 = vld [vmem:[#allocation24 + $0x108] sm:$0xff]
        %v2103 = vld [vmem:[#allocation24 + $0x110] sm:$0xff]
        %v2104 = vld [vmem:[#allocation24 + $0x118] sm:$0xff]
        %v2105 = vld [vmem:[#allocation24 + $0x120] sm:$0xff]
        %v2106 = vld [vmem:[#allocation24 + $0x128] sm:$0xff]
        %v2107 = vld [vmem:[#allocation24 + $0x130] sm:$0xff]
        %v2108 = vld [vmem:[#allocation24 + $0x138] sm:$0xff]
        %v2109 = vld [vmem:[#allocation24 + $0x140] sm:$0xff]
        %v2110 = vld [vmem:[#allocation24 + $0x148] sm:$0xff]
        %v2111 = vld [vmem:[#allocation24 + $0x150] sm:$0xff]
        %v2112 = vld [vmem:[#allocation24 + $0x158] sm:$0xff]
        %v2113 = vld [vmem:[#allocation24 + $0x160] sm:$0xff]
        %v2114 = vld [vmem:[#allocation24 + $0x168] sm:$0xff]
        %v2115 = vld [vmem:[#allocation24 + $0x170] sm:$0xff]
        %v2116 = vld [vmem:[#allocation24 + $0x178] sm:$0xff]
        %v2117 = vld [vmem:[#allocation24 + $0x180] sm:$0xff]
        %v2118 = vld [vmem:[#allocation24 + $0x188] sm:$0xff]
        %v2119 = vld [vmem:[#allocation24 + $0x190] sm:$0xff]
        %v2120 = vld [vmem:[#allocation24 + $0x198] sm:$0xff]
        %v2121 = vld [vmem:[#allocation24 + $0x1a0] sm:$0xff]
        %v2122 = vld [vmem:[#allocation24 + $0x1a8] sm:$0xff]
        %v2123 = vld [vmem:[#allocation24 + $0x1b0] sm:$0xff]
        %v2124 = vld [vmem:[#allocation24 + $0x1b8] sm:$0xff]
        %v2125 = vld [vmem:[#allocation24 + $0x1c0] sm:$0xff]
        %v2126 = vld [vmem:[#allocation24 + $0x1c8] sm:$0xff]
        %v2127 = vld [vmem:[#allocation24 + $0x1d0] sm:$0xff]
        %v2128 = vld [vmem:[#allocation24 + $0x1d8] sm:$0xff]
        %v2129 = vld [vmem:[%s15] sm:$0x3f]
        %v2190 = vunpack.c.l.b16 %v2069
        %v2191 = vunpack.c.h.b16 %v2069
        %v2192 = vunpack.c.l.b16 %v2070
        %v2193 = vunpack.c.h.b16 %v2070
        %v2194 = vunpack.c.l.b16 %v2071
        %v2195 = vunpack.c.h.b16 %v2071
        %v2196 = vunpack.c.l.b16 %v2072
        %v2197 = vunpack.c.h.b16 %v2072
        %v2198 = vunpack.c.l.b16 %v2073
        %v2199 = vunpack.c.h.b16 %v2073
        %v2200 = vunpack.c.l.b16 %v2074
        %v2201 = vunpack.c.h.b16 %v2074
        %v2202 = vunpack.c.l.b16 %v2075
        %v2203 = vunpack.c.h.b16 %v2075
        %v2204 = vunpack.c.l.b16 %v2076
        %v2205 = vunpack.c.h.b16 %v2076
        %v2206 = vunpack.c.l.b16 %v2077
        %v2207 = vunpack.c.h.b16 %v2077
        %v2208 = vunpack.c.l.b16 %v2078
        %v2209 = vunpack.c.h.b16 %v2078
        %v2210 = vunpack.c.l.b16 %v2079
        %v2211 = vunpack.c.h.b16 %v2079
        %v2212 = vunpack.c.l.b16 %v2080
        %v2213 = vunpack.c.h.b16 %v2080
        %v2214 = vunpack.c.l.b16 %v2081
        %v2215 = vunpack.c.h.b16 %v2081
        %v2216 = vunpack.c.l.b16 %v2082
        %v2217 = vunpack.c.h.b16 %v2082
        %v2218 = vunpack.c.l.b16 %v2083
        %v2219 = vunpack.c.h.b16 %v2083
        %v2220 = vunpack.c.l.b16 %v2084
        %v2221 = vunpack.c.h.b16 %v2084
        %v2222 = vunpack.c.l.b16 %v2085
        %v2223 = vunpack.c.h.b16 %v2085
        %v2224 = vunpack.c.l.b16 %v2086
        %v2225 = vunpack.c.h.b16 %v2086
        %v2226 = vunpack.c.l.b16 %v2087
        %v2227 = vunpack.c.h.b16 %v2087
        %v2228 = vunpack.c.l.b16 %v2088
        %v2229 = vunpack.c.h.b16 %v2088
        %v2230 = vunpack.c.l.b16 %v2089
        %v2231 = vunpack.c.h.b16 %v2089
        %v2232 = vunpack.c.l.b16 %v2090
        %v2233 = vunpack.c.h.b16 %v2090
        %v2234 = vunpack.c.l.b16 %v2091
        %v2235 = vunpack.c.h.b16 %v2091
        %v2236 = vunpack.c.l.b16 %v2092
        %v2237 = vunpack.c.h.b16 %v2092
        %v2238 = vunpack.c.l.b16 %v2093
        %v2239 = vunpack.c.h.b16 %v2093
        %v2240 = vunpack.c.l.b16 %v2094
        %v2241 = vunpack.c.h.b16 %v2094
        %v2242 = vunpack.c.l.b16 %v2095
        %v2243 = vunpack.c.h.b16 %v2095
        %v2244 = vunpack.c.l.b16 %v2096
        %v2245 = vunpack.c.h.b16 %v2096
        %v2246 = vunpack.c.l.b16 %v2097
        %v2247 = vunpack.c.h.b16 %v2097
        %v2248 = vunpack.c.l.b16 %v2098
        %v2249 = vunpack.c.h.b16 %v2098
        %v2250 = vunpack.c.l.b16 %v2099
        %v2251 = vunpack.c.h.b16 %v2099
        %v2252 = vunpack.c.l.b16 %v2100
        %v2253 = vunpack.c.h.b16 %v2100
        %v2254 = vunpack.c.l.b16 %v2101
        %v2255 = vunpack.c.h.b16 %v2101
        %v2256 = vunpack.c.l.b16 %v2102
        %v2257 = vunpack.c.h.b16 %v2102
        %v2258 = vunpack.c.l.b16 %v2103
        %v2259 = vunpack.c.h.b16 %v2103
        %v2260 = vunpack.c.l.b16 %v2104
        %v2261 = vunpack.c.h.b16 %v2104
        %v2262 = vunpack.c.l.b16 %v2105
        %v2263 = vunpack.c.h.b16 %v2105
        %v2264 = vunpack.c.l.b16 %v2106
        %v2265 = vunpack.c.h.b16 %v2106
        %v2266 = vunpack.c.l.b16 %v2107
        %v2267 = vunpack.c.h.b16 %v2107
        %v2268 = vunpack.c.l.b16 %v2108
        %v2269 = vunpack.c.h.b16 %v2108
        %v2270 = vunpack.c.l.b16 %v2109
        %v2271 = vunpack.c.h.b16 %v2109
        %v2272 = vunpack.c.l.b16 %v2110
        %v2273 = vunpack.c.h.b16 %v2110
        %v2274 = vunpack.c.l.b16 %v2111
        %v2275 = vunpack.c.h.b16 %v2111
        %v2276 = vunpack.c.l.b16 %v2112
        %v2277 = vunpack.c.h.b16 %v2112
        %v2278 = vunpack.c.l.b16 %v2113
        %v2279 = vunpack.c.h.b16 %v2113
        %v2280 = vunpack.c.l.b16 %v2114
        %v2281 = vunpack.c.h.b16 %v2114
        %v2282 = vunpack.c.l.b16 %v2115
        %v2283 = vunpack.c.h.b16 %v2115
        %v2284 = vunpack.c.l.b16 %v2116
        %v2285 = vunpack.c.h.b16 %v2116
        %v2286 = vunpack.c.l.b16 %v2117
        %v2287 = vunpack.c.h.b16 %v2117
        %v2288 = vunpack.c.l.b16 %v2118
        %v2289 = vunpack.c.h.b16 %v2118
        %v2290 = vunpack.c.l.b16 %v2119
        %v2291 = vunpack.c.h.b16 %v2119
        %v2292 = vunpack.c.l.b16 %v2120
        %v2293 = vunpack.c.h.b16 %v2120
        %v2294 = vunpack.c.l.b16 %v2121
        %v2295 = vunpack.c.h.b16 %v2121
        %v2296 = vunpack.c.l.b16 %v2122
        %v2297 = vunpack.c.h.b16 %v2122
        %v2298 = vunpack.c.l.b16 %v2123
        %v2299 = vunpack.c.h.b16 %v2123
        %v2300 = vunpack.c.l.b16 %v2124
        %v2301 = vunpack.c.h.b16 %v2124
        %v2302 = vunpack.c.l.b16 %v2125
        %v2303 = vunpack.c.h.b16 %v2125
        %v2304 = vunpack.c.l.b16 %v2126
        %v2305 = vunpack.c.h.b16 %v2126
        %v2306 = vunpack.c.l.b16 %v2127
        %v2307 = vunpack.c.h.b16 %v2127
        %v2308 = vunpack.c.l.b16 %v2128
        %v2309 = vunpack.c.h.b16 %v2128
        %v2310 = vpack.c.b16 %v2196, %v2190
        %v2311 = vpack.c.b16 %v2197, %v2191
        %v2312 = vpack.c.b16 %v2198, %v2192
        %v2313 = vpack.c.b16 %v2199, %v2193
        %v2314 = vpack.c.b16 %v2200, %v2194
        %v2315 = vpack.c.b16 %v2201, %v2195
        %v2316 = vpack.c.b16 %v2208, %v2202
        %v2317 = vpack.c.b16 %v2209, %v2203
        %v2318 = vpack.c.b16 %v2210, %v2204
        %v2319 = vpack.c.b16 %v2211, %v2205
        %v2320 = vpack.c.b16 %v2212, %v2206
        %v2321 = vpack.c.b16 %v2213, %v2207
        %v2322 = vpack.c.b16 %v2220, %v2214
        %v2323 = vpack.c.b16 %v2221, %v2215
        %v2324 = vpack.c.b16 %v2222, %v2216
        %v2325 = vpack.c.b16 %v2223, %v2217
        %v2326 = vpack.c.b16 %v2224, %v2218
        %v2327 = vpack.c.b16 %v2225, %v2219
        %v2328 = vpack.c.b16 %v2232, %v2226
        %v2329 = vpack.c.b16 %v2233, %v2227
        %v2330 = vpack.c.b16 %v2234, %v2228
        %v2331 = vpack.c.b16 %v2235, %v2229
        %v2332 = vpack.c.b16 %v2236, %v2230
        %v2333 = vpack.c.b16 %v2237, %v2231
        %v2334 = vpack.c.b16 %v2244, %v2238
        %v2335 = vpack.c.b16 %v2245, %v2239
        %v2336 = vpack.c.b16 %v2246, %v2240
        %v2337 = vpack.c.b16 %v2247, %v2241
        %v2338 = vpack.c.b16 %v2248, %v2242
        %v2339 = vpack.c.b16 %v2249, %v2243
        %v2340 = vpack.c.b16 %v2256, %v2250
        %v2341 = vpack.c.b16 %v2257, %v2251
        %v2342 = vpack.c.b16 %v2258, %v2252
        %v2343 = vpack.c.b16 %v2259, %v2253
        %v2344 = vpack.c.b16 %v2260, %v2254
        %v2345 = vpack.c.b16 %v2261, %v2255
        %v2346 = vpack.c.b16 %v2268, %v2262
        %v2347 = vpack.c.b16 %v2269, %v2263
        %v2348 = vpack.c.b16 %v2270, %v2264
        %v2349 = vpack.c.b16 %v2271, %v2265
        %v2350 = vpack.c.b16 %v2272, %v2266
        %v2351 = vpack.c.b16 %v2273, %v2267
        %v2352 = vpack.c.b16 %v2280, %v2274
        %v2353 = vpack.c.b16 %v2281, %v2275
        %v2354 = vpack.c.b16 %v2282, %v2276
        %v2355 = vpack.c.b16 %v2283, %v2277
        %v2356 = vpack.c.b16 %v2284, %v2278
        %v2357 = vpack.c.b16 %v2285, %v2279
        %v2358 = vpack.c.b16 %v2292, %v2286
        %v2359 = vpack.c.b16 %v2293, %v2287
        %v2360 = vpack.c.b16 %v2294, %v2288
        %v2361 = vpack.c.b16 %v2295, %v2289
        %v2362 = vpack.c.b16 %v2296, %v2290
        %v2363 = vpack.c.b16 %v2297, %v2291
        %v2364 = vpack.c.b16 %v2304, %v2298
        %v2365 = vpack.c.b16 %v2305, %v2299
        %v2366 = vpack.c.b16 %v2306, %v2300
        %v2367 = vpack.c.b16 %v2307, %v2301
        %v2368 = vpack.c.b16 %v2308, %v2302
        %v2369 = vpack.c.b16 %v2309, %v2303
        %v2431 = vperm.slane %v2129, 0
        %v2432 = vperm.slane %v2129, 1
        %v2433 = vperm.slane %v2129, 2
        %v2434 = vperm.slane %v2129, 3
        %v2435 = vperm.slane %v2129, 4
        %v2436 = vperm.slane %v2129, 5
        %v2444 = vsel %vm1097, 0, 0
        %2446 = vmatpush.bf16.msra.mxu0 %v2352
        %2447 = vmatpush.bf16.msra.mxu0 %v2346
        %2448 = vmatpush.bf16.msra.mxu0 %v2340
        %2449 = vmatpush.bf16.msra.mxu0 %v2334
        %2450 = vmatpush.bf16.msra.mxu0 %v2328
        %2451 = vmatpush.bf16.msra.mxu0 %v2322
        %2452 = vmatpush.bf16.msra.mxu0 %v2316
        %2453 = vmatpush.bf16.msra.mxu0 %v2310
        %2454 = vmatmul.bf16.gmra.mxu0 0
        %v2455 = vpop.f32.mrf.mxu0
        %v2456 = vadd.f32 %v2431, %v2455
        %v2457 = vpop.f32.mrf.mxu0
        %2458 = vdwg.mxu0
        %2459 = vmatpush.bf16.msra.mxu0 0
        %2460 = vmatpush.bf16.msra.mxu0 0
        %2461 = vmatpush.bf16.msra.mxu0 0
        %2462 = vmatpush.bf16.msra.mxu0 0
        %2463 = vmatpush.bf16.msra.mxu0 0
        %2464 = vmatpush.bf16.msra.mxu0 0
        %2465 = vmatpush.bf16.msra.mxu0 %v2364
        %2466 = vmatpush.bf16.msra.mxu0 %v2358
        %2467 = vmatmul.bf16.gmra.mxu0 %v2444
        %v2468 = vpop.f32.mrf.mxu0
        %v2469 = vadd.f32 %v2456, %v2468
        %v2470 = vpop.f32.mrf.mxu0
        %2471 = vdwg.mxu0
        %2472 = vmatpush.bf16.msra.mxu0 %v2353
        %2473 = vmatpush.bf16.msra.mxu0 %v2347
        %2474 = vmatpush.bf16.msra.mxu0 %v2341
        %2475 = vmatpush.bf16.msra.mxu0 %v2335
        %2476 = vmatpush.bf16.msra.mxu0 %v2329
        %2477 = vmatpush.bf16.msra.mxu0 %v2323
        %2478 = vmatpush.bf16.msra.mxu0 %v2317
        %2479 = vmatpush.bf16.msra.mxu0 %v2311
        %2480 = vmatmul.bf16.gmra.mxu0 0
        %v2481 = vpop.f32.mrf.mxu0
        %v2482 = vadd.f32 %v2432, %v2481
        %v2483 = vpop.f32.mrf.mxu0
        %2484 = vdwg.mxu0
        %2485 = vmatpush.bf16.msra.mxu0 0
        %2486 = vmatpush.bf16.msra.mxu0 0
        %2487 = vmatpush.bf16.msra.mxu0 0
        %2488 = vmatpush.bf16.msra.mxu0 0
        %2489 = vmatpush.bf16.msra.mxu0 0
        %2490 = vmatpush.bf16.msra.mxu0 0
        %2491 = vmatpush.bf16.msra.mxu0 %v2365
        %2492 = vmatpush.bf16.msra.mxu0 %v2359
        %2493 = vmatmul.bf16.gmra.mxu0 %v2444
        %v2494 = vpop.f32.mrf.mxu0
        %v2495 = vadd.f32 %v2482, %v2494
        %v2496 = vpop.f32.mrf.mxu0
        %2497 = vdwg.mxu0
        %2498 = vmatpush.bf16.msra.mxu0 %v2354
        %2499 = vmatpush.bf16.msra.mxu0 %v2348
        %2500 = vmatpush.bf16.msra.mxu0 %v2342
        %2501 = vmatpush.bf16.msra.mxu0 %v2336
        %2502 = vmatpush.bf16.msra.mxu0 %v2330
        %2503 = vmatpush.bf16.msra.mxu0 %v2324
        %2504 = vmatpush.bf16.msra.mxu0 %v2318
        %2505 = vmatpush.bf16.msra.mxu0 %v2312
        %2506 = vmatmul.bf16.gmra.mxu0 0
        %v2507 = vpop.f32.mrf.mxu0
        %v2508 = vadd.f32 %v2433, %v2507
        %v2509 = vpop.f32.mrf.mxu0
        %2510 = vdwg.mxu0
        %2511 = vmatpush.bf16.msra.mxu0 0
        %2512 = vmatpush.bf16.msra.mxu0 0
        %2513 = vmatpush.bf16.msra.mxu0 0
        %2514 = vmatpush.bf16.msra.mxu0 0
        %2515 = vmatpush.bf16.msra.mxu0 0
        %2516 = vmatpush.bf16.msra.mxu0 0
        %2517 = vmatpush.bf16.msra.mxu0 %v2366
        %2518 = vmatpush.bf16.msra.mxu0 %v2360
        %2519 = vmatmul.bf16.gmra.mxu0 %v2444
        %v2520 = vpop.f32.mrf.mxu0
        %v2521 = vadd.f32 %v2508, %v2520
        %v2522 = vpop.f32.mrf.mxu0
        %2523 = vdwg.mxu0
        %2524 = vmatpush.bf16.msra.mxu0 %v2355
        %2525 = vmatpush.bf16.msra.mxu0 %v2349
        %2526 = vmatpush.bf16.msra.mxu0 %v2343
        %2527 = vmatpush.bf16.msra.mxu0 %v2337
        %2528 = vmatpush.bf16.msra.mxu0 %v2331
        %2529 = vmatpush.bf16.msra.mxu0 %v2325
        %2530 = vmatpush.bf16.msra.mxu0 %v2319
        %2531 = vmatpush.bf16.msra.mxu0 %v2313
        %2532 = vmatmul.bf16.gmra.mxu0 0
        %v2533 = vpop.f32.mrf.mxu0
        %v2534 = vadd.f32 %v2434, %v2533
        %v2535 = vpop.f32.mrf.mxu0
        %2536 = vdwg.mxu0
        %2537 = vmatpush.bf16.msra.mxu0 0
        %2538 = vmatpush.bf16.msra.mxu0 0
        %2539 = vmatpush.bf16.msra.mxu0 0
        %2540 = vmatpush.bf16.msra.mxu0 0
        %2541 = vmatpush.bf16.msra.mxu0 0
        %2542 = vmatpush.bf16.msra.mxu0 0
        %2543 = vmatpush.bf16.msra.mxu0 %v2367
        %2544 = vmatpush.bf16.msra.mxu0 %v2361
        %2545 = vmatmul.bf16.gmra.mxu0 %v2444
        %v2546 = vpop.f32.mrf.mxu0
        %v2547 = vadd.f32 %v2534, %v2546
        %v2548 = vpop.f32.mrf.mxu0
        %2549 = vdwg.mxu0
        %2550 = vmatpush.bf16.msra.mxu0 %v2356
        %2551 = vmatpush.bf16.msra.mxu0 %v2350
        %2552 = vmatpush.bf16.msra.mxu0 %v2344
        %2553 = vmatpush.bf16.msra.mxu0 %v2338
        %2554 = vmatpush.bf16.msra.mxu0 %v2332
        %2555 = vmatpush.bf16.msra.mxu0 %v2326
        %2556 = vmatpush.bf16.msra.mxu0 %v2320
        %2557 = vmatpush.bf16.msra.mxu0 %v2314
        %2558 = vmatmul.bf16.gmra.mxu0 0
        %v2559 = vpop.f32.mrf.mxu0
        %v2560 = vadd.f32 %v2435, %v2559
        %v2561 = vpop.f32.mrf.mxu0
        %2562 = vdwg.mxu0
        %2563 = vmatpush.bf16.msra.mxu0 0
        %2564 = vmatpush.bf16.msra.mxu0 0
        %2565 = vmatpush.bf16.msra.mxu0 0
        %2566 = vmatpush.bf16.msra.mxu0 0
        %2567 = vmatpush.bf16.msra.mxu0 0
        %2568 = vmatpush.bf16.msra.mxu0 0
        %2569 = vmatpush.bf16.msra.mxu0 %v2368
        %2570 = vmatpush.bf16.msra.mxu0 %v2362
        %2571 = vmatmul.bf16.gmra.mxu0 %v2444
        %v2572 = vpop.f32.mrf.mxu0
        %v2573 = vadd.f32 %v2560, %v2572
        %v2574 = vpop.f32.mrf.mxu0
        %2575 = vdwg.mxu0
        %2576 = vmatpush.bf16.msra.mxu0 %v2357
        %2577 = vmatpush.bf16.msra.mxu0 %v2351
        %2578 = vmatpush.bf16.msra.mxu0 %v2345
        %2579 = vmatpush.bf16.msra.mxu0 %v2339
        %2580 = vmatpush.bf16.msra.mxu0 %v2333
        %2581 = vmatpush.bf16.msra.mxu0 %v2327
        %2582 = vmatpush.bf16.msra.mxu0 %v2321
        %2583 = vmatpush.bf16.msra.mxu0 %v2315
        %2584 = vmatmul.bf16.gmra.mxu0 0
        %v2585 = vpop.f32.mrf.mxu0
        %v2586 = vadd.f32 %v2436, %v2585
        %v2587 = vpop.f32.mrf.mxu0
        %2588 = vdwg.mxu0
        %2589 = vmatpush.bf16.msra.mxu0 0
        %2590 = vmatpush.bf16.msra.mxu0 0
        %2591 = vmatpush.bf16.msra.mxu0 0
        %2592 = vmatpush.bf16.msra.mxu0 0
        %2593 = vmatpush.bf16.msra.mxu0 0
        %2594 = vmatpush.bf16.msra.mxu0 0
        %2595 = vmatpush.bf16.msra.mxu0 %v2369
        %2596 = vmatpush.bf16.msra.mxu0 %v2363
        %2597 = vmatmul.bf16.gmra.mxu0 %v2444
        %v2598 = vpop.f32.mrf.mxu0
        %v2599 = vadd.f32 %v2586, %v2598
        %v2600 = vpop.f32.mrf.mxu0
        %2601 = vdwg.mxu0
        %v2602 = vadd.f32 %v1936, %v2469
        %v2603 = vadd.f32 %v1962, %v2495
        %v2604 = vxor.u32 %v2602, 2147483648
        %v2605 = vxor.u32 %v2603, 2147483648
        %v2606 = vmul.f32 %v2604, 1.442695
        %v2607 = vpow.pop %v2606
        %v2608 = vmul.f32 %v2605, 1.442695
        %v2609 = vpow.pop %v2608
        %v2610 = vadd.f32 %v2607, 1.0
        %v2611 = vadd.f32 %v2609, 1.0
        %v2612 = vrcp.pop %v2610
        %v2613 = vmul.f32 %v2610, %v2612
        %v2614 = vsub.f32 1.0, %v2613
        %v2615 = vmul.f32 %v2612, %v2614
        %v2616 = vadd.f32 %v2612, %v2615
        %vm2617 = vweird.f32 %v2610
        %vm2618 = vweird.f32 %v2612
        %vm2619 = vmor %vm2617, %vm2618
        %v2620 = vsel %vm2619, %v2612, %v2616
        %v2621 = vand.u32 2147483647, %v2610
        %vm2622 = vcmp.eq.f32.partialorder %v2621, 8.507059e+37
        %v2623 = vand.u32 %v2610, 2147483648
        %v2624 = vor.u32 1.1754944e-38, %v2623
        %v2625 = vsel %vm2622, %v2624, %v2620
        %v2626 = vmul.f32 1.0, %v2625
        %v2627 = vrcp.pop %v2611
        %v2628 = vmul.f32 %v2611, %v2627
        %v2629 = vsub.f32 1.0, %v2628
        %v2630 = vmul.f32 %v2627, %v2629
        %v2631 = vadd.f32 %v2627, %v2630
        %vm2632 = vweird.f32 %v2611
        %vm2633 = vweird.f32 %v2627
        %vm2634 = vmor %vm2632, %vm2633
        %v2635 = vsel %vm2634, %v2627, %v2631
        %v2636 = vand.u32 2147483647, %v2611
        %vm2637 = vcmp.eq.f32.partialorder %v2636, 8.507059e+37
        %v2638 = vand.u32 %v2611, 2147483648
        %v2639 = vor.u32 1.1754944e-38, %v2638
        %v2640 = vsel %vm2637, %v2639, %v2635
        %v2641 = vmul.f32 1.0, %v2640
        %v2642 = vadd.f32 %v1988, %v2521
        %v2643 = vadd.f32 %v2014, %v2547
        %v2644 = vxor.u32 %v2642, 2147483648
        %v2645 = vxor.u32 %v2643, 2147483648
        %v2646 = vmul.f32 %v2644, 1.442695
        %v2647 = vpow.pop %v2646
        %v2648 = vmul.f32 %v2645, 1.442695
        %v2649 = vpow.pop %v2648
        %v2650 = vadd.f32 %v2647, 1.0
        %v2651 = vadd.f32 %v2649, 1.0
        %v2652 = vrcp.pop %v2650
        %v2653 = vmul.f32 %v2650, %v2652
        %v2654 = vsub.f32 1.0, %v2653
        %v2655 = vmul.f32 %v2652, %v2654
        %v2656 = vadd.f32 %v2652, %v2655
        %vm2657 = vweird.f32 %v2650
        %vm2658 = vweird.f32 %v2652
        %vm2659 = vmor %vm2657, %vm2658
        %v2660 = vsel %vm2659, %v2652, %v2656
        %v2661 = vand.u32 2147483647, %v2650
        %vm2662 = vcmp.eq.f32.partialorder %v2661, 8.507059e+37
        %v2663 = vand.u32 %v2650, 2147483648
        %v2664 = vor.u32 1.1754944e-38, %v2663
        %v2665 = vsel %vm2662, %v2664, %v2660
        %v2666 = vmul.f32 1.0, %v2665
        %v2667 = vrcp.pop %v2651
        %v2668 = vmul.f32 %v2651, %v2667
        %v2669 = vsub.f32 1.0, %v2668
        %v2670 = vmul.f32 %v2667, %v2669
        %v2671 = vadd.f32 %v2667, %v2670
        %vm2672 = vweird.f32 %v2651
        %vm2673 = vweird.f32 %v2667
        %vm2674 = vmor %vm2672, %vm2673
        %v2675 = vsel %vm2674, %v2667, %v2671
        %v2676 = vand.u32 2147483647, %v2651
        %vm2677 = vcmp.eq.f32.partialorder %v2676, 8.507059e+37
        %v2678 = vand.u32 %v2651, 2147483648
        %v2679 = vor.u32 1.1754944e-38, %v2678
        %v2680 = vsel %vm2677, %v2679, %v2675
        %v2681 = vmul.f32 1.0, %v2680
        %v2682 = vmul.f32 %v2626, %v2573
        %v2683 = vmul.f32 %v2641, %v2599
        %v2684 = vadd.f32 %v2040, %v2682
        %v2685 = vadd.f32 %v2066, %v2683
        %v2686 = vtanh.pop %v2684
        %v2687 = vtanh.pop %v2685
        %v2688 = vsub.f32 1.0, %v2666
        %v2689 = vsub.f32 1.0, %v2681
        %v2690 = vmul.f32 %v2688, %v2686
        %v2691 = vmul.f32 %v2689, %v2687
        %v2692 = vmul.f32 %v2666, 0.0
        %v2693 = vmul.f32 %v2681, 0.0
        %v2694 = vadd.f32 %v2690, %v2692
        %v2695 = vadd.f32 %v2691, %v2693
        %v2698 = vrot.slane %v2695, 7
        %vm2699 = vcmask 1040384
        %v2700 = vsel %vm2699, %v2694, %v2698
        %v2702 = vlaneseq
        %vm2703 = vcmp.ge.s32.totalorder %v2702, 0
        %vm2704 = vcmp.lt.s32.totalorder %v2702, 160
        %vm2705 = vmand %vm2703, %vm2704
        %2706 = vst.msk [vmem:[#allocation2] ss:$8 sm:$0x3] %vm2705, %v2700
        %2707 = vst.msk [vmem:[#allocation2] ss:$8 sm:$0x0] %vm2705, %v2700
        %v2708 = vpack.c.bf16 %v2694, %v2694
        %v2709 = vpack.c.bf16 %v2695, %v2695
        %v2711 = vsel %vm1097, %v2709, 0
        %2713 = vmatpush.bf16.msra.mxu0 %v2352
        %2714 = vmatpush.bf16.msra.mxu0 %v2346
        %2715 = vmatpush.bf16.msra.mxu0 %v2340
        %2716 = vmatpush.bf16.msra.mxu0 %v2334
        %2717 = vmatpush.bf16.msra.mxu0 %v2328
        %2718 = vmatpush.bf16.msra.mxu0 %v2322
        %2719 = vmatpush.bf16.msra.mxu0 %v2316
        %2720 = vmatpush.bf16.msra.mxu0 %v2310
        %2721 = vmatmul.bf16.gmra.mxu0 %v2708
        %v2722 = vpop.f32.mrf.mxu0
        %v2723 = vadd.f32 %v2431, %v2722
        %v2724 = vpop.f32.mrf.mxu0
        %2725 = vdwg.mxu0
        %2726 = vmatpush.bf16.msra.mxu0 0
        %2727 = vmatpush.bf16.msra.mxu0 0
        %2728 = vmatpush.bf16.msra.mxu0 0
        %2729 = vmatpush.bf16.msra.mxu0 0
        %2730 = vmatpush.bf16.msra.mxu0 0
        %2731 = vmatpush.bf16.msra.mxu0 0
        %2732 = vmatpush.bf16.msra.mxu0 %v2364
        %2733 = vmatpush.bf16.msra.mxu0 %v2358
        %2734 = vmatmul.bf16.gmra.mxu0 %v2711
        %v2735 = vpop.f32.mrf.mxu0
        %v2736 = vadd.f32 %v2723, %v2735
        %v2737 = vpop.f32.mrf.mxu0
        %2738 = vdwg.mxu0
        %2739 = vmatpush.bf16.msra.mxu0 %v2353
        %2740 = vmatpush.bf16.msra.mxu0 %v2347
        %2741 = vmatpush.bf16.msra.mxu0 %v2341
        %2742 = vmatpush.bf16.msra.mxu0 %v2335
        %2743 = vmatpush.bf16.msra.mxu0 %v2329
        %2744 = vmatpush.bf16.msra.mxu0 %v2323
        %2745 = vmatpush.bf16.msra.mxu0 %v2317
        %2746 = vmatpush.bf16.msra.mxu0 %v2311
        %2747 = vmatmul.bf16.gmra.mxu0 %v2708
        %v2748 = vpop.f32.mrf.mxu0
        %v2749 = vadd.f32 %v2432, %v2748
        %v2750 = vpop.f32.mrf.mxu0
        %2751 = vdwg.mxu0
        %2752 = vmatpush.bf16.msra.mxu0 0
        %2753 = vmatpush.bf16.msra.mxu0 0
        %2754 = vmatpush.bf16.msra.mxu0 0
        %2755 = vmatpush.bf16.msra.mxu0 0
        %2756 = vmatpush.bf16.msra.mxu0 0
        %2757 = vmatpush.bf16.msra.mxu0 0
        %2758 = vmatpush.bf16.msra.mxu0 %v2365
        %2759 = vmatpush.bf16.msra.mxu0 %v2359
        %2760 = vmatmul.bf16.gmra.mxu0 %v2711
        %v2761 = vpop.f32.mrf.mxu0
        %v2762 = vadd.f32 %v2749, %v2761
        %v2763 = vpop.f32.mrf.mxu0
        %2764 = vdwg.mxu0
        %2765 = vmatpush.bf16.msra.mxu0 %v2354
        %2766 = vmatpush.bf16.msra.mxu0 %v2348
        %2767 = vmatpush.bf16.msra.mxu0 %v2342
        %2768 = vmatpush.bf16.msra.mxu0 %v2336
        %2769 = vmatpush.bf16.msra.mxu0 %v2330
        %2770 = vmatpush.bf16.msra.mxu0 %v2324
        %2771 = vmatpush.bf16.msra.mxu0 %v2318
        %2772 = vmatpush.bf16.msra.mxu0 %v2312
        %2773 = vmatmul.bf16.gmra.mxu0 %v2708
        %v2774 = vpop.f32.mrf.mxu0
        %v2775 = vadd.f32 %v2433, %v2774
        %v2776 = vpop.f32.mrf.mxu0
        %2777 = vdwg.mxu0
        %2778 = vmatpush.bf16.msra.mxu0 0
        %2779 = vmatpush.bf16.msra.mxu0 0
        %2780 = vmatpush.bf16.msra.mxu0 0
        %2781 = vmatpush.bf16.msra.mxu0 0
        %2782 = vmatpush.bf16.msra.mxu0 0
        %2783 = vmatpush.bf16.msra.mxu0 0
        %2784 = vmatpush.bf16.msra.mxu0 %v2366
        %2785 = vmatpush.bf16.msra.mxu0 %v2360
        %2786 = vmatmul.bf16.gmra.mxu0 %v2711
        %v2787 = vpop.f32.mrf.mxu0
        %v2788 = vadd.f32 %v2775, %v2787
        %v2789 = vpop.f32.mrf.mxu0
        %2790 = vdwg.mxu0
        %2791 = vmatpush.bf16.msra.mxu0 %v2355
        %2792 = vmatpush.bf16.msra.mxu0 %v2349
        %2793 = vmatpush.bf16.msra.mxu0 %v2343
        %2794 = vmatpush.bf16.msra.mxu0 %v2337
        %2795 = vmatpush.bf16.msra.mxu0 %v2331
        %2796 = vmatpush.bf16.msra.mxu0 %v2325
        %2797 = vmatpush.bf16.msra.mxu0 %v2319
        %2798 = vmatpush.bf16.msra.mxu0 %v2313
        %2799 = vmatmul.bf16.gmra.mxu0 %v2708
        %v2800 = vpop.f32.mrf.mxu0
        %v2801 = vadd.f32 %v2434, %v2800
        %v2802 = vpop.f32.mrf.mxu0
        %2803 = vdwg.mxu0
        %2804 = vmatpush.bf16.msra.mxu0 0
        %2805 = vmatpush.bf16.msra.mxu0 0
        %2806 = vmatpush.bf16.msra.mxu0 0
        %2807 = vmatpush.bf16.msra.mxu0 0
        %2808 = vmatpush.bf16.msra.mxu0 0
        %2809 = vmatpush.bf16.msra.mxu0 0
        %2810 = vmatpush.bf16.msra.mxu0 %v2367
        %2811 = vmatpush.bf16.msra.mxu0 %v2361
        %2812 = vmatmul.bf16.gmra.mxu0 %v2711
        %v2813 = vpop.f32.mrf.mxu0
        %v2814 = vadd.f32 %v2801, %v2813
        %v2815 = vpop.f32.mrf.mxu0
        %2816 = vdwg.mxu0
        %2817 = vmatpush.bf16.msra.mxu0 %v2356
        %2818 = vmatpush.bf16.msra.mxu0 %v2350
        %2819 = vmatpush.bf16.msra.mxu0 %v2344
        %2820 = vmatpush.bf16.msra.mxu0 %v2338
        %2821 = vmatpush.bf16.msra.mxu0 %v2332
        %2822 = vmatpush.bf16.msra.mxu0 %v2326
        %2823 = vmatpush.bf16.msra.mxu0 %v2320
        %2824 = vmatpush.bf16.msra.mxu0 %v2314
        %2825 = vmatmul.bf16.gmra.mxu0 %v2708
        %v2826 = vpop.f32.mrf.mxu0
        %v2827 = vadd.f32 %v2435, %v2826
        %v2828 = vpop.f32.mrf.mxu0
        %2829 = vdwg.mxu0
        %2830 = vmatpush.bf16.msra.mxu0 0
        %2831 = vmatpush.bf16.msra.mxu0 0
        %2832 = vmatpush.bf16.msra.mxu0 0
        %2833 = vmatpush.bf16.msra.mxu0 0
        %2834 = vmatpush.bf16.msra.mxu0 0
        %2835 = vmatpush.bf16.msra.mxu0 0
        %2836 = vmatpush.bf16.msra.mxu0 %v2368
        %2837 = vmatpush.bf16.msra.mxu0 %v2362
        %2838 = vmatmul.bf16.gmra.mxu0 %v2711
        %v2839 = vpop.f32.mrf.mxu0
        %v2840 = vadd.f32 %v2827, %v2839
        %v2841 = vpop.f32.mrf.mxu0
        %2842 = vdwg.mxu0
        %2843 = vmatpush.bf16.msra.mxu0 %v2357
        %2844 = vmatpush.bf16.msra.mxu0 %v2351
        %2845 = vmatpush.bf16.msra.mxu0 %v2345
        %2846 = vmatpush.bf16.msra.mxu0 %v2339
        %2847 = vmatpush.bf16.msra.mxu0 %v2333
        %2848 = vmatpush.bf16.msra.mxu0 %v2327
        %2849 = vmatpush.bf16.msra.mxu0 %v2321
        %2850 = vmatpush.bf16.msra.mxu0 %v2315
        %2851 = vmatmul.bf16.gmra.mxu0 %v2708
        %v2852 = vpop.f32.mrf.mxu0
        %v2853 = vadd.f32 %v2436, %v2852
        %v2854 = vpop.f32.mrf.mxu0
        %2855 = vdwg.mxu0
        %2856 = vmatpush.bf16.msra.mxu0 0
        %2857 = vmatpush.bf16.msra.mxu0 0
        %2858 = vmatpush.bf16.msra.mxu0 0
        %2859 = vmatpush.bf16.msra.mxu0 0
        %2860 = vmatpush.bf16.msra.mxu0 0
        %2861 = vmatpush.bf16.msra.mxu0 0
        %2862 = vmatpush.bf16.msra.mxu0 %v2369
        %2863 = vmatpush.bf16.msra.mxu0 %v2363
        %2864 = vmatmul.bf16.gmra.mxu0 %v2711
        %v2865 = vpop.f32.mrf.mxu0
        %v2866 = vadd.f32 %v2853, %v2865
        %v2867 = vpop.f32.mrf.mxu0
        %2868 = vdwg.mxu0
        %v2871 = vrot.slane %v2736, 7
        %v2872 = vrot.slane %v2762, 7
        %v2875 = vadd.f32 %v1936, %v2871
        %v2876 = vadd.f32 %v1962, %v2872
        %v2877 = vxor.u32 %v2875, 2147483648
        %v2878 = vxor.u32 %v2876, 2147483648
        %v2879 = vmul.f32 %v2877, 1.442695
        %v2880 = vpow.pop %v2879
        %v2881 = vmul.f32 %v2878, 1.442695
        %v2882 = vpow.pop %v2881
        %v2883 = vadd.f32 %v2880, 1.0
        %v2884 = vadd.f32 %v2882, 1.0
        %v2885 = vrcp.pop %v2883
        %v2886 = vmul.f32 %v2883, %v2885
        %v2887 = vsub.f32 1.0, %v2886
        %v2888 = vmul.f32 %v2885, %v2887
        %v2889 = vadd.f32 %v2885, %v2888
        %vm2890 = vweird.f32 %v2883
        %vm2891 = vweird.f32 %v2885
        %vm2892 = vmor %vm2890, %vm2891
        %v2893 = vsel %vm2892, %v2885, %v2889
        %v2894 = vand.u32 2147483647, %v2883
        %vm2895 = vcmp.eq.f32.partialorder %v2894, 8.507059e+37
        %v2896 = vand.u32 %v2883, 2147483648
        %v2897 = vor.u32 1.1754944e-38, %v2896
        %v2898 = vsel %vm2895, %v2897, %v2893
        %v2899 = vmul.f32 1.0, %v2898
        %v2900 = vrcp.pop %v2884
        %v2901 = vmul.f32 %v2884, %v2900
        %v2902 = vsub.f32 1.0, %v2901
        %v2903 = vmul.f32 %v2900, %v2902
        %v2904 = vadd.f32 %v2900, %v2903
        %vm2905 = vweird.f32 %v2884
        %vm2906 = vweird.f32 %v2900
        %vm2907 = vmor %vm2905, %vm2906
        %v2908 = vsel %vm2907, %v2900, %v2904
        %v2909 = vand.u32 2147483647, %v2884
        %vm2910 = vcmp.eq.f32.partialorder %v2909, 8.507059e+37
        %v2911 = vand.u32 %v2884, 2147483648
        %v2912 = vor.u32 1.1754944e-38, %v2911
        %v2913 = vsel %vm2910, %v2912, %v2908
        %v2914 = vmul.f32 1.0, %v2913
        %v2917 = vrot.slane %v2788, 7
        %v2918 = vrot.slane %v2814, 7
        %v2921 = vadd.f32 %v1988, %v2917
        %v2922 = vadd.f32 %v2014, %v2918
        %v2923 = vxor.u32 %v2921, 2147483648
        %v2924 = vxor.u32 %v2922, 2147483648
        %v2925 = vmul.f32 %v2923, 1.442695
        %v2926 = vpow.pop %v2925
        %v2927 = vmul.f32 %v2924, 1.442695
        %v2928 = vpow.pop %v2927
        %v2929 = vadd.f32 %v2926, 1.0
        %v2930 = vadd.f32 %v2928, 1.0
        %v2931 = vrcp.pop %v2929
        %v2932 = vmul.f32 %v2929, %v2931
        %v2933 = vsub.f32 1.0, %v2932
        %v2934 = vmul.f32 %v2931, %v2933
        %v2935 = vadd.f32 %v2931, %v2934
        %vm2936 = vweird.f32 %v2929
        %vm2937 = vweird.f32 %v2931
        %vm2938 = vmor %vm2936, %vm2937
        %v2939 = vsel %vm2938, %v2931, %v2935
        %v2940 = vand.u32 2147483647, %v2929
        %vm2941 = vcmp.eq.f32.partialorder %v2940, 8.507059e+37
        %v2942 = vand.u32 %v2929, 2147483648
        %v2943 = vor.u32 1.1754944e-38, %v2942
        %v2944 = vsel %vm2941, %v2943, %v2939
        %v2945 = vmul.f32 1.0, %v2944
        %v2946 = vrcp.pop %v2930
        %v2947 = vmul.f32 %v2930, %v2946
        %v2948 = vsub.f32 1.0, %v2947
        %v2949 = vmul.f32 %v2946, %v2948
        %v2950 = vadd.f32 %v2946, %v2949
        %vm2951 = vweird.f32 %v2930
        %vm2952 = vweird.f32 %v2946
        %vm2953 = vmor %vm2951, %vm2952
        %v2954 = vsel %vm2953, %v2946, %v2950
        %v2955 = vand.u32 2147483647, %v2930
        %vm2956 = vcmp.eq.f32.partialorder %v2955, 8.507059e+37
        %v2957 = vand.u32 %v2930, 2147483648
        %v2958 = vor.u32 1.1754944e-38, %v2957
        %v2959 = vsel %vm2956, %v2958, %v2954
        %v2960 = vmul.f32 1.0, %v2959
        %v2963 = vrot.slane %v2840, 7
        %v2964 = vrot.slane %v2866, 7
        %v2967 = vmul.f32 %v2899, %v2963
        %v2968 = vmul.f32 %v2914, %v2964
        %v2969 = vadd.f32 %v2040, %v2967
        %v2970 = vadd.f32 %v2066, %v2968
        %v2971 = vtanh.pop %v2969
        %v2972 = vtanh.pop %v2970
        %v2973 = vsub.f32 1.0, %v2945
        %v2974 = vsub.f32 1.0, %v2960
        %v2975 = vmul.f32 %v2973, %v2971
        %v2976 = vmul.f32 %v2974, %v2972
        %v2977 = vrot.slane %v2694, 7
        %v2980 = vmul.f32 %v2945, %v2977
        %v2981 = vmul.f32 %v2960, %v2698
        %v2982 = vadd.f32 %v2975, %v2980
        %v2983 = vadd.f32 %v2976, %v2981
        %2986 = vst [vmem:[#allocation1] sm:$0xff] %v2982
        %2987 = vst [vmem:[#allocation1 + $0x9] sm:$0xff] %v2983
        %s2988 = scalar_lea.vmem [#allocation1], 1
        %v2989 = vld [vmem:[%s2988] ss:$9 sm:$0xff]
        %s2991 = scalar_lea.vmem [#allocation2], 1
        %2992 = vst.msk [vmem:[%s2991] ss:$8 sm:$0x3] %vm2705, %v2989
        %2993 = vst.msk [vmem:[%s2991] ss:$8 sm:$0x0] %vm2705, %v2989
        %v2994 = vpack.c.bf16 %v2982, %v2982
        %v2995 = vpack.c.bf16 %v2983, %v2983
        %v2997 = vshrl.u32 %v2994, 16
        %v3000 = vshrl.u32 %v2995, 16
        %v3004 = vsel %vm1097, %v3000, 0
        %3006 = vmatpush.bf16.msra.mxu0 %v2352
        %3007 = vmatpush.bf16.msra.mxu0 %v2346
        %3008 = vmatpush.bf16.msra.mxu0 %v2340
        %3009 = vmatpush.bf16.msra.mxu0 %v2334
        %3010 = vmatpush.bf16.msra.mxu0 %v2328
        %3011 = vmatpush.bf16.msra.mxu0 %v2322
        %3012 = vmatpush.bf16.msra.mxu0 %v2316
        %3013 = vmatpush.bf16.msra.mxu0 %v2310
        %3014 = vmatmul.bf16.gmra.mxu0 %v2997
        %v3015 = vpop.f32.mrf.mxu0
        %v3016 = vadd.f32 %v2431, %v3015
        %v3017 = vpop.f32.mrf.mxu0
        %3018 = vdwg.mxu0
        %3019 = vmatpush.bf16.msra.mxu0 0
        %3020 = vmatpush.bf16.msra.mxu0 0
        %3021 = vmatpush.bf16.msra.mxu0 0
        %3022 = vmatpush.bf16.msra.mxu0 0
        %3023 = vmatpush.bf16.msra.mxu0 0
        %3024 = vmatpush.bf16.msra.mxu0 0
        %3025 = vmatpush.bf16.msra.mxu0 %v2364
        %3026 = vmatpush.bf16.msra.mxu0 %v2358
        %3027 = vmatmul.bf16.gmra.mxu0 %v3004
        %v3028 = vpop.f32.mrf.mxu0
        %v3029 = vadd.f32 %v3016, %v3028
        %v3030 = vpop.f32.mrf.mxu0
        %3031 = vdwg.mxu0
        %3032 = vmatpush.bf16.msra.mxu0 %v2353
        %3033 = vmatpush.bf16.msra.mxu0 %v2347
        %3034 = vmatpush.bf16.msra.mxu0 %v2341
        %3035 = vmatpush.bf16.msra.mxu0 %v2335
        %3036 = vmatpush.bf16.msra.mxu0 %v2329
        %3037 = vmatpush.bf16.msra.mxu0 %v2323
        %3038 = vmatpush.bf16.msra.mxu0 %v2317
        %3039 = vmatpush.bf16.msra.mxu0 %v2311
        %3040 = vmatmul.bf16.gmra.mxu0 %v2997
        %v3041 = vpop.f32.mrf.mxu0
        %v3042 = vadd.f32 %v2432, %v3041
        %v3043 = vpop.f32.mrf.mxu0
        %3044 = vdwg.mxu0
        %3045 = vmatpush.bf16.msra.mxu0 0
        %3046 = vmatpush.bf16.msra.mxu0 0
        %3047 = vmatpush.bf16.msra.mxu0 0
        %3048 = vmatpush.bf16.msra.mxu0 0
        %3049 = vmatpush.bf16.msra.mxu0 0
        %3050 = vmatpush.bf16.msra.mxu0 0
        %3051 = vmatpush.bf16.msra.mxu0 %v2365
        %3052 = vmatpush.bf16.msra.mxu0 %v2359
        %3053 = vmatmul.bf16.gmra.mxu0 %v3004
        %v3054 = vpop.f32.mrf.mxu0
        %v3055 = vadd.f32 %v3042, %v3054
        %v3056 = vpop.f32.mrf.mxu0
        %3057 = vdwg.mxu0
        %3058 = vmatpush.bf16.msra.mxu0 %v2354
        %3059 = vmatpush.bf16.msra.mxu0 %v2348
        %3060 = vmatpush.bf16.msra.mxu0 %v2342
        %3061 = vmatpush.bf16.msra.mxu0 %v2336
        %3062 = vmatpush.bf16.msra.mxu0 %v2330
        %3063 = vmatpush.bf16.msra.mxu0 %v2324
        %3064 = vmatpush.bf16.msra.mxu0 %v2318
        %3065 = vmatpush.bf16.msra.mxu0 %v2312
        %3066 = vmatmul.bf16.gmra.mxu0 %v2997
        %v3067 = vpop.f32.mrf.mxu0
        %v3068 = vadd.f32 %v2433, %v3067
        %v3069 = vpop.f32.mrf.mxu0
        %3070 = vdwg.mxu0
        %3071 = vmatpush.bf16.msra.mxu0 0
        %3072 = vmatpush.bf16.msra.mxu0 0
        %3073 = vmatpush.bf16.msra.mxu0 0
        %3074 = vmatpush.bf16.msra.mxu0 0
        %3075 = vmatpush.bf16.msra.mxu0 0
        %3076 = vmatpush.bf16.msra.mxu0 0
        %3077 = vmatpush.bf16.msra.mxu0 %v2366
        %3078 = vmatpush.bf16.msra.mxu0 %v2360
        %3079 = vmatmul.bf16.gmra.mxu0 %v3004
        %v3080 = vpop.f32.mrf.mxu0
        %v3081 = vadd.f32 %v3068, %v3080
        %v3082 = vpop.f32.mrf.mxu0
        %3083 = vdwg.mxu0
        %3084 = vmatpush.bf16.msra.mxu0 %v2355
        %3085 = vmatpush.bf16.msra.mxu0 %v2349
        %3086 = vmatpush.bf16.msra.mxu0 %v2343
        %3087 = vmatpush.bf16.msra.mxu0 %v2337
        %3088 = vmatpush.bf16.msra.mxu0 %v2331
        %3089 = vmatpush.bf16.msra.mxu0 %v2325
        %3090 = vmatpush.bf16.msra.mxu0 %v2319
        %3091 = vmatpush.bf16.msra.mxu0 %v2313
        %3092 = vmatmul.bf16.gmra.mxu0 %v2997
        %v3093 = vpop.f32.mrf.mxu0
        %v3094 = vadd.f32 %v2434, %v3093
        %v3095 = vpop.f32.mrf.mxu0
        %3096 = vdwg.mxu0
        %3097 = vmatpush.bf16.msra.mxu0 0
        %3098 = vmatpush.bf16.msra.mxu0 0
        %3099 = vmatpush.bf16.msra.mxu0 0
        %3100 = vmatpush.bf16.msra.mxu0 0
        %3101 = vmatpush.bf16.msra.mxu0 0
        %3102 = vmatpush.bf16.msra.mxu0 0
        %3103 = vmatpush.bf16.msra.mxu0 %v2367
        %3104 = vmatpush.bf16.msra.mxu0 %v2361
        %3105 = vmatmul.bf16.gmra.mxu0 %v3004
        %v3106 = vpop.f32.mrf.mxu0
        %v3107 = vadd.f32 %v3094, %v3106
        %v3108 = vpop.f32.mrf.mxu0
        %3109 = vdwg.mxu0
        %3110 = vmatpush.bf16.msra.mxu0 %v2356
        %3111 = vmatpush.bf16.msra.mxu0 %v2350
        %3112 = vmatpush.bf16.msra.mxu0 %v2344
        %3113 = vmatpush.bf16.msra.mxu0 %v2338
        %3114 = vmatpush.bf16.msra.mxu0 %v2332
        %3115 = vmatpush.bf16.msra.mxu0 %v2326
        %3116 = vmatpush.bf16.msra.mxu0 %v2320
        %3117 = vmatpush.bf16.msra.mxu0 %v2314
        %3118 = vmatmul.bf16.gmra.mxu0 %v2997
        %v3119 = vpop.f32.mrf.mxu0
        %v3120 = vadd.f32 %v2435, %v3119
        %v3121 = vpop.f32.mrf.mxu0
        %3122 = vdwg.mxu0
        %3123 = vmatpush.bf16.msra.mxu0 0
        %3124 = vmatpush.bf16.msra.mxu0 0
        %3125 = vmatpush.bf16.msra.mxu0 0
        %3126 = vmatpush.bf16.msra.mxu0 0
        %3127 = vmatpush.bf16.msra.mxu0 0
        %3128 = vmatpush.bf16.msra.mxu0 0
        %3129 = vmatpush.bf16.msra.mxu0 %v2368
        %3130 = vmatpush.bf16.msra.mxu0 %v2362
        %3131 = vmatmul.bf16.gmra.mxu0 %v3004
        %v3132 = vpop.f32.mrf.mxu0
        %v3133 = vadd.f32 %v3120, %v3132
        %v3134 = vpop.f32.mrf.mxu0
        %3135 = vdwg.mxu0
        %3136 = vmatpush.bf16.msra.mxu0 %v2357
        %3137 = vmatpush.bf16.msra.mxu0 %v2351
        %3138 = vmatpush.bf16.msra.mxu0 %v2345
        %3139 = vmatpush.bf16.msra.mxu0 %v2339
        %3140 = vmatpush.bf16.msra.mxu0 %v2333
        %3141 = vmatpush.bf16.msra.mxu0 %v2327
        %3142 = vmatpush.bf16.msra.mxu0 %v2321
        %3143 = vmatpush.bf16.msra.mxu0 %v2315
        %3144 = vmatmul.bf16.gmra.mxu0 %v2997
        %v3145 = vpop.f32.mrf.mxu0
        %v3146 = vadd.f32 %v2436, %v3145
        %v3147 = vpop.f32.mrf.mxu0
        %3148 = vdwg.mxu0
        %3149 = vmatpush.bf16.msra.mxu0 0
        %3150 = vmatpush.bf16.msra.mxu0 0
        %3151 = vmatpush.bf16.msra.mxu0 0
        %3152 = vmatpush.bf16.msra.mxu0 0
        %3153 = vmatpush.bf16.msra.mxu0 0
        %3154 = vmatpush.bf16.msra.mxu0 0
        %3155 = vmatpush.bf16.msra.mxu0 %v2369
        %3156 = vmatpush.bf16.msra.mxu0 %v2363
        %3157 = vmatmul.bf16.gmra.mxu0 %v3004
        %v3158 = vpop.f32.mrf.mxu0
        %v3159 = vadd.f32 %v3146, %v3158
        %v3160 = vpop.f32.mrf.mxu0
        %3161 = vdwg.mxu0
        %v3164 = vrot.slane %v3029, 6
        %v3165 = vrot.slane %v3055, 6
        %v3168 = vadd.f32 %v1936, %v3164
        %v3169 = vadd.f32 %v1962, %v3165
        %v3170 = vxor.u32 %v3168, 2147483648
        %v3171 = vxor.u32 %v3169, 2147483648
        %v3172 = vmul.f32 %v3170, 1.442695
        %v3173 = vpow.pop %v3172
        %v3174 = vmul.f32 %v3171, 1.442695
        %v3175 = vpow.pop %v3174
        %v3176 = vadd.f32 %v3173, 1.0
        %v3177 = vadd.f32 %v3175, 1.0
        %v3178 = vrcp.pop %v3176
        %v3179 = vmul.f32 %v3176, %v3178
        %v3180 = vsub.f32 1.0, %v3179
        %v3181 = vmul.f32 %v3178, %v3180
        %v3182 = vadd.f32 %v3178, %v3181
        %vm3183 = vweird.f32 %v3176
        %vm3184 = vweird.f32 %v3178
        %vm3185 = vmor %vm3183, %vm3184
        %v3186 = vsel %vm3185, %v3178, %v3182
        %v3187 = vand.u32 2147483647, %v3176
        %vm3188 = vcmp.eq.f32.partialorder %v3187, 8.507059e+37
        %v3189 = vand.u32 %v3176, 2147483648
        %v3190 = vor.u32 1.1754944e-38, %v3189
        %v3191 = vsel %vm3188, %v3190, %v3186
        %v3192 = vmul.f32 1.0, %v3191
        %v3193 = vrcp.pop %v3177
        %v3194 = vmul.f32 %v3177, %v3193
        %v3195 = vsub.f32 1.0, %v3194
        %v3196 = vmul.f32 %v3193, %v3195
        %v3197 = vadd.f32 %v3193, %v3196
        %vm3198 = vweird.f32 %v3177
        %vm3199 = vweird.f32 %v3193
        %vm3200 = vmor %vm3198, %vm3199
        %v3201 = vsel %vm3200, %v3193, %v3197
        %v3202 = vand.u32 2147483647, %v3177
        %vm3203 = vcmp.eq.f32.partialorder %v3202, 8.507059e+37
        %v3204 = vand.u32 %v3177, 2147483648
        %v3205 = vor.u32 1.1754944e-38, %v3204
        %v3206 = vsel %vm3203, %v3205, %v3201
        %v3207 = vmul.f32 1.0, %v3206
        %v3210 = vrot.slane %v3081, 6
        %v3211 = vrot.slane %v3107, 6
        %v3214 = vadd.f32 %v1988, %v3210
        %v3215 = vadd.f32 %v2014, %v3211
        %v3216 = vxor.u32 %v3214, 2147483648
        %v3217 = vxor.u32 %v3215, 2147483648
        %v3218 = vmul.f32 %v3216, 1.442695
        %v3219 = vpow.pop %v3218
        %v3220 = vmul.f32 %v3217, 1.442695
        %v3221 = vpow.pop %v3220
        %v3222 = vadd.f32 %v3219, 1.0
        %v3223 = vadd.f32 %v3221, 1.0
        %v3224 = vrcp.pop %v3222
        %v3225 = vmul.f32 %v3222, %v3224
        %v3226 = vsub.f32 1.0, %v3225
        %v3227 = vmul.f32 %v3224, %v3226
        %v3228 = vadd.f32 %v3224, %v3227
        %vm3229 = vweird.f32 %v3222
        %vm3230 = vweird.f32 %v3224
        %vm3231 = vmor %vm3229, %vm3230
        %v3232 = vsel %vm3231, %v3224, %v3228
        %v3233 = vand.u32 2147483647, %v3222
        %vm3234 = vcmp.eq.f32.partialorder %v3233, 8.507059e+37
        %v3235 = vand.u32 %v3222, 2147483648
        %v3236 = vor.u32 1.1754944e-38, %v3235
        %v3237 = vsel %vm3234, %v3236, %v3232
        %v3238 = vmul.f32 1.0, %v3237
        %v3239 = vrcp.pop %v3223
        %v3240 = vmul.f32 %v3223, %v3239
        %v3241 = vsub.f32 1.0, %v3240
        %v3242 = vmul.f32 %v3239, %v3241
        %v3243 = vadd.f32 %v3239, %v3242
        %vm3244 = vweird.f32 %v3223
        %vm3245 = vweird.f32 %v3239
        %vm3246 = vmor %vm3244, %vm3245
        %v3247 = vsel %vm3246, %v3239, %v3243
        %v3248 = vand.u32 2147483647, %v3223
        %vm3249 = vcmp.eq.f32.partialorder %v3248, 8.507059e+37
        %v3250 = vand.u32 %v3223, 2147483648
        %v3251 = vor.u32 1.1754944e-38, %v3250
        %v3252 = vsel %vm3249, %v3251, %v3247
        %v3253 = vmul.f32 1.0, %v3252
        %v3256 = vrot.slane %v3133, 6
        %v3257 = vrot.slane %v3159, 6
        %v3260 = vmul.f32 %v3192, %v3256
        %v3261 = vmul.f32 %v3207, %v3257
        %v3262 = vadd.f32 %v2040, %v3260
        %v3263 = vadd.f32 %v2066, %v3261
        %v3264 = vtanh.pop %v3262
        %v3265 = vtanh.pop %v3263
        %v3266 = vsub.f32 1.0, %v3238
        %v3267 = vsub.f32 1.0, %v3253
        %v3268 = vmul.f32 %v3266, %v3264
        %v3269 = vmul.f32 %v3267, %v3265
        %v3270 = vrot.slane %v2982, 7
        %v3271 = vrot.slane %v2983, 7
        %v3274 = vmul.f32 %v3238, %v3270
        %v3275 = vmul.f32 %v3253, %v3271
        %v3276 = vadd.f32 %v3268, %v3274
        %v3277 = vadd.f32 %v3269, %v3275
        %3280 = vst [vmem:[#allocation1] sm:$0xff] %v3276
        %3281 = vst [vmem:[#allocation1 + $0x9] sm:$0xff] %v3277
        %s3282 = scalar_lea.vmem [#allocation1], 2
        %v3283 = vld [vmem:[%s3282] ss:$9 sm:$0xff]
        %s3285 = scalar_lea.vmem [#allocation2], 2
        %3286 = vst.msk [vmem:[%s3285] ss:$8 sm:$0x3] %vm2705, %v3283
        %3287 = vst.msk [vmem:[%s3285] ss:$8 sm:$0x0] %vm2705, %v3283
        %v3288 = vpack.c.bf16 %v3276, %v3276
        %v3289 = vpack.c.bf16 %v3277, %v3277
        %v3292 = vrot.slane %v3288, 1
        %v3293 = vrot.slane %v3289, 1
        %v3296 = vsel %vm1097, %v3293, 0
        %3298 = vmatpush.bf16.msra.mxu0 %v2352
        %3299 = vmatpush.bf16.msra.mxu0 %v2346
        %3300 = vmatpush.bf16.msra.mxu0 %v2340
        %3301 = vmatpush.bf16.msra.mxu0 %v2334
        %3302 = vmatpush.bf16.msra.mxu0 %v2328
        %3303 = vmatpush.bf16.msra.mxu0 %v2322
        %3304 = vmatpush.bf16.msra.mxu0 %v2316
        %3305 = vmatpush.bf16.msra.mxu0 %v2310
        %3306 = vmatmul.bf16.gmra.mxu0 %v3292
        %v3307 = vpop.f32.mrf.mxu0
        %v3308 = vadd.f32 %v2431, %v3307
        %v3309 = vpop.f32.mrf.mxu0
        %3310 = vdwg.mxu0
        %3311 = vmatpush.bf16.msra.mxu0 0
        %3312 = vmatpush.bf16.msra.mxu0 0
        %3313 = vmatpush.bf16.msra.mxu0 0
        %3314 = vmatpush.bf16.msra.mxu0 0
        %3315 = vmatpush.bf16.msra.mxu0 0
        %3316 = vmatpush.bf16.msra.mxu0 0
        %3317 = vmatpush.bf16.msra.mxu0 %v2364
        %3318 = vmatpush.bf16.msra.mxu0 %v2358
        %3319 = vmatmul.bf16.gmra.mxu0 %v3296
        %v3320 = vpop.f32.mrf.mxu0
        %v3321 = vadd.f32 %v3308, %v3320
        %v3322 = vpop.f32.mrf.mxu0
        %3323 = vdwg.mxu0
        %3324 = vmatpush.bf16.msra.mxu0 %v2353
        %3325 = vmatpush.bf16.msra.mxu0 %v2347
        %3326 = vmatpush.bf16.msra.mxu0 %v2341
        %3327 = vmatpush.bf16.msra.mxu0 %v2335
        %3328 = vmatpush.bf16.msra.mxu0 %v2329
        %3329 = vmatpush.bf16.msra.mxu0 %v2323
        %3330 = vmatpush.bf16.msra.mxu0 %v2317
        %3331 = vmatpush.bf16.msra.mxu0 %v2311
        %3332 = vmatmul.bf16.gmra.mxu0 %v3292
        %v3333 = vpop.f32.mrf.mxu0
        %v3334 = vadd.f32 %v2432, %v3333
        %v3335 = vpop.f32.mrf.mxu0
        %3336 = vdwg.mxu0
        %3337 = vmatpush.bf16.msra.mxu0 0
        %3338 = vmatpush.bf16.msra.mxu0 0
        %3339 = vmatpush.bf16.msra.mxu0 0
        %3340 = vmatpush.bf16.msra.mxu0 0
        %3341 = vmatpush.bf16.msra.mxu0 0
        %3342 = vmatpush.bf16.msra.mxu0 0
        %3343 = vmatpush.bf16.msra.mxu0 %v2365
        %3344 = vmatpush.bf16.msra.mxu0 %v2359
        %3345 = vmatmul.bf16.gmra.mxu0 %v3296
        %v3346 = vpop.f32.mrf.mxu0
        %v3347 = vadd.f32 %v3334, %v3346
        %v3348 = vpop.f32.mrf.mxu0
        %3349 = vdwg.mxu0
        %3350 = vmatpush.bf16.msra.mxu0 %v2354
        %3351 = vmatpush.bf16.msra.mxu0 %v2348
        %3352 = vmatpush.bf16.msra.mxu0 %v2342
        %3353 = vmatpush.bf16.msra.mxu0 %v2336
        %3354 = vmatpush.bf16.msra.mxu0 %v2330
        %3355 = vmatpush.bf16.msra.mxu0 %v2324
        %3356 = vmatpush.bf16.msra.mxu0 %v2318
        %3357 = vmatpush.bf16.msra.mxu0 %v2312
        %3358 = vmatmul.bf16.gmra.mxu0 %v3292
        %v3359 = vpop.f32.mrf.mxu0
        %v3360 = vadd.f32 %v2433, %v3359
        %v3361 = vpop.f32.mrf.mxu0
        %3362 = vdwg.mxu0
        %3363 = vmatpush.bf16.msra.mxu0 0
        %3364 = vmatpush.bf16.msra.mxu0 0
        %3365 = vmatpush.bf16.msra.mxu0 0
        %3366 = vmatpush.bf16.msra.mxu0 0
        %3367 = vmatpush.bf16.msra.mxu0 0
        %3368 = vmatpush.bf16.msra.mxu0 0
        %3369 = vmatpush.bf16.msra.mxu0 %v2366
        %3370 = vmatpush.bf16.msra.mxu0 %v2360
        %3371 = vmatmul.bf16.gmra.mxu0 %v3296
        %v3372 = vpop.f32.mrf.mxu0
        %v3373 = vadd.f32 %v3360, %v3372
        %v3374 = vpop.f32.mrf.mxu0
        %3375 = vdwg.mxu0
        %3376 = vmatpush.bf16.msra.mxu0 %v2355
        %3377 = vmatpush.bf16.msra.mxu0 %v2349
        %3378 = vmatpush.bf16.msra.mxu0 %v2343
        %3379 = vmatpush.bf16.msra.mxu0 %v2337
        %3380 = vmatpush.bf16.msra.mxu0 %v2331
        %3381 = vmatpush.bf16.msra.mxu0 %v2325
        %3382 = vmatpush.bf16.msra.mxu0 %v2319
        %3383 = vmatpush.bf16.msra.mxu0 %v2313
        %3384 = vmatmul.bf16.gmra.mxu0 %v3292
        %v3385 = vpop.f32.mrf.mxu0
        %v3386 = vadd.f32 %v2434, %v3385
        %v3387 = vpop.f32.mrf.mxu0
        %3388 = vdwg.mxu0
        %3389 = vmatpush.bf16.msra.mxu0 0
        %3390 = vmatpush.bf16.msra.mxu0 0
        %3391 = vmatpush.bf16.msra.mxu0 0
        %3392 = vmatpush.bf16.msra.mxu0 0
        %3393 = vmatpush.bf16.msra.mxu0 0
        %3394 = vmatpush.bf16.msra.mxu0 0
        %3395 = vmatpush.bf16.msra.mxu0 %v2367
        %3396 = vmatpush.bf16.msra.mxu0 %v2361
        %3397 = vmatmul.bf16.gmra.mxu0 %v3296
        %v3398 = vpop.f32.mrf.mxu0
        %v3399 = vadd.f32 %v3386, %v3398
        %v3400 = vpop.f32.mrf.mxu0
        %3401 = vdwg.mxu0
        %3402 = vmatpush.bf16.msra.mxu0 %v2356
        %3403 = vmatpush.bf16.msra.mxu0 %v2350
        %3404 = vmatpush.bf16.msra.mxu0 %v2344
        %3405 = vmatpush.bf16.msra.mxu0 %v2338
        %3406 = vmatpush.bf16.msra.mxu0 %v2332
        %3407 = vmatpush.bf16.msra.mxu0 %v2326
        %3408 = vmatpush.bf16.msra.mxu0 %v2320
        %3409 = vmatpush.bf16.msra.mxu0 %v2314
        %3410 = vmatmul.bf16.gmra.mxu0 %v3292
        %v3411 = vpop.f32.mrf.mxu0
        %v3412 = vadd.f32 %v2435, %v3411
        %v3413 = vpop.f32.mrf.mxu0
        %3414 = vdwg.mxu0
        %3415 = vmatpush.bf16.msra.mxu0 0
        %3416 = vmatpush.bf16.msra.mxu0 0
        %3417 = vmatpush.bf16.msra.mxu0 0
        %3418 = vmatpush.bf16.msra.mxu0 0
        %3419 = vmatpush.bf16.msra.mxu0 0
        %3420 = vmatpush.bf16.msra.mxu0 0
        %3421 = vmatpush.bf16.msra.mxu0 %v2368
        %3422 = vmatpush.bf16.msra.mxu0 %v2362
        %3423 = vmatmul.bf16.gmra.mxu0 %v3296
        %v3424 = vpop.f32.mrf.mxu0
        %v3425 = vadd.f32 %v3412, %v3424
        %v3426 = vpop.f32.mrf.mxu0
        %3427 = vdwg.mxu0
        %3428 = vmatpush.bf16.msra.mxu0 %v2357
        %3429 = vmatpush.bf16.msra.mxu0 %v2351
        %3430 = vmatpush.bf16.msra.mxu0 %v2345
        %3431 = vmatpush.bf16.msra.mxu0 %v2339
        %3432 = vmatpush.bf16.msra.mxu0 %v2333
        %3433 = vmatpush.bf16.msra.mxu0 %v2327
        %3434 = vmatpush.bf16.msra.mxu0 %v2321
        %3435 = vmatpush.bf16.msra.mxu0 %v2315
        %3436 = vmatmul.bf16.gmra.mxu0 %v3292
        %v3437 = vpop.f32.mrf.mxu0
        %v3438 = vadd.f32 %v2436, %v3437
        %v3439 = vpop.f32.mrf.mxu0
        %3440 = vdwg.mxu0
        %3441 = vmatpush.bf16.msra.mxu0 0
        %3442 = vmatpush.bf16.msra.mxu0 0
        %3443 = vmatpush.bf16.msra.mxu0 0
        %3444 = vmatpush.bf16.msra.mxu0 0
        %3445 = vmatpush.bf16.msra.mxu0 0
        %3446 = vmatpush.bf16.msra.mxu0 0
        %3447 = vmatpush.bf16.msra.mxu0 %v2369
        %3448 = vmatpush.bf16.msra.mxu0 %v2363
        %3449 = vmatmul.bf16.gmra.mxu0 %v3296
        %v3450 = vpop.f32.mrf.mxu0
        %v3451 = vadd.f32 %v3438, %v3450
        %v3452 = vpop.f32.mrf.mxu0
        %3453 = vdwg.mxu0
        %v3456 = vrot.slane %v3321, 5
        %v3457 = vrot.slane %v3347, 5
        %v3460 = vadd.f32 %v1936, %v3456
        %v3461 = vadd.f32 %v1962, %v3457
        %v3462 = vxor.u32 %v3460, 2147483648
        %v3463 = vxor.u32 %v3461, 2147483648
        %v3464 = vmul.f32 %v3462, 1.442695
        %v3465 = vpow.pop %v3464
        %v3466 = vmul.f32 %v3463, 1.442695
        %v3467 = vpow.pop %v3466
        %v3468 = vadd.f32 %v3465, 1.0
        %v3469 = vadd.f32 %v3467, 1.0
        %v3470 = vrcp.pop %v3468
        %v3471 = vmul.f32 %v3468, %v3470
        %v3472 = vsub.f32 1.0, %v3471
        %v3473 = vmul.f32 %v3470, %v3472
        %v3474 = vadd.f32 %v3470, %v3473
        %vm3475 = vweird.f32 %v3468
        %vm3476 = vweird.f32 %v3470
        %vm3477 = vmor %vm3475, %vm3476
        %v3478 = vsel %vm3477, %v3470, %v3474
        %v3479 = vand.u32 2147483647, %v3468
        %vm3480 = vcmp.eq.f32.partialorder %v3479, 8.507059e+37
        %v3481 = vand.u32 %v3468, 2147483648
        %v3482 = vor.u32 1.1754944e-38, %v3481
        %v3483 = vsel %vm3480, %v3482, %v3478
        %v3484 = vmul.f32 1.0, %v3483
        %v3485 = vrcp.pop %v3469
        %v3486 = vmul.f32 %v3469, %v3485
        %v3487 = vsub.f32 1.0, %v3486
        %v3488 = vmul.f32 %v3485, %v3487
        %v3489 = vadd.f32 %v3485, %v3488
        %vm3490 = vweird.f32 %v3469
        %vm3491 = vweird.f32 %v3485
        %vm3492 = vmor %vm3490, %vm3491
        %v3493 = vsel %vm3492, %v3485, %v3489
        %v3494 = vand.u32 2147483647, %v3469
        %vm3495 = vcmp.eq.f32.partialorder %v3494, 8.507059e+37
        %v3496 = vand.u32 %v3469, 2147483648
        %v3497 = vor.u32 1.1754944e-38, %v3496
        %v3498 = vsel %vm3495, %v3497, %v3493
        %v3499 = vmul.f32 1.0, %v3498
        %v3502 = vrot.slane %v3373, 5
        %v3503 = vrot.slane %v3399, 5
        %v3506 = vadd.f32 %v1988, %v3502
        %v3507 = vadd.f32 %v2014, %v3503
        %v3508 = vxor.u32 %v3506, 2147483648
        %v3509 = vxor.u32 %v3507, 2147483648
        %v3510 = vmul.f32 %v3508, 1.442695
        %v3511 = vpow.pop %v3510
        %v3512 = vmul.f32 %v3509, 1.442695
        %v3513 = vpow.pop %v3512
        %v3514 = vadd.f32 %v3511, 1.0
        %v3515 = vadd.f32 %v3513, 1.0
        %v3516 = vrcp.pop %v3514
        %v3517 = vmul.f32 %v3514, %v3516
        %v3518 = vsub.f32 1.0, %v3517
        %v3519 = vmul.f32 %v3516, %v3518
        %v3520 = vadd.f32 %v3516, %v3519
        %vm3521 = vweird.f32 %v3514
        %vm3522 = vweird.f32 %v3516
        %vm3523 = vmor %vm3521, %vm3522
        %v3524 = vsel %vm3523, %v3516, %v3520
        %v3525 = vand.u32 2147483647, %v3514
        %vm3526 = vcmp.eq.f32.partialorder %v3525, 8.507059e+37
        %v3527 = vand.u32 %v3514, 2147483648
        %v3528 = vor.u32 1.1754944e-38, %v3527
        %v3529 = vsel %vm3526, %v3528, %v3524
        %v3530 = vmul.f32 1.0, %v3529
        %v3531 = vrcp.pop %v3515
        %v3532 = vmul.f32 %v3515, %v3531
        %v3533 = vsub.f32 1.0, %v3532
        %v3534 = vmul.f32 %v3531, %v3533
        %v3535 = vadd.f32 %v3531, %v3534
        %vm3536 = vweird.f32 %v3515
        %vm3537 = vweird.f32 %v3531
        %vm3538 = vmor %vm3536, %vm3537
        %v3539 = vsel %vm3538, %v3531, %v3535
        %v3540 = vand.u32 2147483647, %v3515
        %vm3541 = vcmp.eq.f32.partialorder %v3540, 8.507059e+37
        %v3542 = vand.u32 %v3515, 2147483648
        %v3543 = vor.u32 1.1754944e-38, %v3542
        %v3544 = vsel %vm3541, %v3543, %v3539
        %v3545 = vmul.f32 1.0, %v3544
        %v3548 = vrot.slane %v3425, 5
        %v3549 = vrot.slane %v3451, 5
        %v3552 = vmul.f32 %v3484, %v3548
        %v3553 = vmul.f32 %v3499, %v3549
        %v3554 = vadd.f32 %v2040, %v3552
        %v3555 = vadd.f32 %v2066, %v3553
        %v3556 = vtanh.pop %v3554
        %v3557 = vtanh.pop %v3555
        %v3558 = vsub.f32 1.0, %v3530
        %v3559 = vsub.f32 1.0, %v3545
        %v3560 = vmul.f32 %v3558, %v3556
        %v3561 = vmul.f32 %v3559, %v3557
        %v3562 = vrot.slane %v3276, 7
        %v3563 = vrot.slane %v3277, 7
        %v3566 = vmul.f32 %v3530, %v3562
        %v3567 = vmul.f32 %v3545, %v3563
        %v3568 = vadd.f32 %v3560, %v3566
        %v3569 = vadd.f32 %v3561, %v3567
        %3572 = vst [vmem:[#allocation1] sm:$0xff] %v3568
        %3573 = vst [vmem:[#allocation1 + $0x9] sm:$0xff] %v3569
        %s3574 = scalar_lea.vmem [#allocation1], 3
        %v3575 = vld [vmem:[%s3574] ss:$9 sm:$0xff]
        %s3577 = scalar_lea.vmem [#allocation2], 3
        %3578 = vst.msk [vmem:[%s3577] ss:$8 sm:$0x3] %vm2705, %v3575
        %3579 = vst.msk [vmem:[%s3577] ss:$8 sm:$0x0] %vm2705, %v3575
        %v3580 = vpack.c.bf16 %v3568, %v3568
        %v3581 = vpack.c.bf16 %v3569, %v3569
        %v3583 = vshrl.u32 %v3580, 16
        %v3585 = vrot.slane %v3583, 1
        %v3587 = vshrl.u32 %v3581, 16
        %v3589 = vrot.slane %v3587, 1
        %v3592 = vsel %vm1097, %v3589, 0
        %3594 = vmatpush.bf16.msra.mxu0 %v2352
        %3595 = vmatpush.bf16.msra.mxu0 %v2346
        %3596 = vmatpush.bf16.msra.mxu0 %v2340
        %3597 = vmatpush.bf16.msra.mxu0 %v2334
        %3598 = vmatpush.bf16.msra.mxu0 %v2328
        %3599 = vmatpush.bf16.msra.mxu0 %v2322
        %3600 = vmatpush.bf16.msra.mxu0 %v2316
        %3601 = vmatpush.bf16.msra.mxu0 %v2310
        %3602 = vmatmul.bf16.gmra.mxu0 %v3585
        %v3603 = vpop.f32.mrf.mxu0
        %v3604 = vadd.f32 %v2431, %v3603
        %v3605 = vpop.f32.mrf.mxu0
        %3606 = vdwg.mxu0
        %3607 = vmatpush.bf16.msra.mxu0 0
        %3608 = vmatpush.bf16.msra.mxu0 0
        %3609 = vmatpush.bf16.msra.mxu0 0
        %3610 = vmatpush.bf16.msra.mxu0 0
        %3611 = vmatpush.bf16.msra.mxu0 0
        %3612 = vmatpush.bf16.msra.mxu0 0
        %3613 = vmatpush.bf16.msra.mxu0 %v2364
        %3614 = vmatpush.bf16.msra.mxu0 %v2358
        %3615 = vmatmul.bf16.gmra.mxu0 %v3592
        %v3616 = vpop.f32.mrf.mxu0
        %v3617 = vadd.f32 %v3604, %v3616
        %v3618 = vpop.f32.mrf.mxu0
        %3619 = vdwg.mxu0
        %3620 = vmatpush.bf16.msra.mxu0 %v2353
        %3621 = vmatpush.bf16.msra.mxu0 %v2347
        %3622 = vmatpush.bf16.msra.mxu0 %v2341
        %3623 = vmatpush.bf16.msra.mxu0 %v2335
        %3624 = vmatpush.bf16.msra.mxu0 %v2329
        %3625 = vmatpush.bf16.msra.mxu0 %v2323
        %3626 = vmatpush.bf16.msra.mxu0 %v2317
        %3627 = vmatpush.bf16.msra.mxu0 %v2311
        %3628 = vmatmul.bf16.gmra.mxu0 %v3585
        %v3629 = vpop.f32.mrf.mxu0
        %v3630 = vadd.f32 %v2432, %v3629
        %v3631 = vpop.f32.mrf.mxu0
        %3632 = vdwg.mxu0
        %3633 = vmatpush.bf16.msra.mxu0 0
        %3634 = vmatpush.bf16.msra.mxu0 0
        %3635 = vmatpush.bf16.msra.mxu0 0
        %3636 = vmatpush.bf16.msra.mxu0 0
        %3637 = vmatpush.bf16.msra.mxu0 0
        %3638 = vmatpush.bf16.msra.mxu0 0
        %3639 = vmatpush.bf16.msra.mxu0 %v2365
        %3640 = vmatpush.bf16.msra.mxu0 %v2359
        %3641 = vmatmul.bf16.gmra.mxu0 %v3592
        %v3642 = vpop.f32.mrf.mxu0
        %v3643 = vadd.f32 %v3630, %v3642
        %v3644 = vpop.f32.mrf.mxu0
        %3645 = vdwg.mxu0
        %3646 = vmatpush.bf16.msra.mxu0 %v2354
        %3647 = vmatpush.bf16.msra.mxu0 %v2348
        %3648 = vmatpush.bf16.msra.mxu0 %v2342
        %3649 = vmatpush.bf16.msra.mxu0 %v2336
        %3650 = vmatpush.bf16.msra.mxu0 %v2330
        %3651 = vmatpush.bf16.msra.mxu0 %v2324
        %3652 = vmatpush.bf16.msra.mxu0 %v2318
        %3653 = vmatpush.bf16.msra.mxu0 %v2312
        %3654 = vmatmul.bf16.gmra.mxu0 %v3585
        %v3655 = vpop.f32.mrf.mxu0
        %v3656 = vadd.f32 %v2433, %v3655
        %v3657 = vpop.f32.mrf.mxu0
        %3658 = vdwg.mxu0
        %3659 = vmatpush.bf16.msra.mxu0 0
        %3660 = vmatpush.bf16.msra.mxu0 0
        %3661 = vmatpush.bf16.msra.mxu0 0
        %3662 = vmatpush.bf16.msra.mxu0 0
        %3663 = vmatpush.bf16.msra.mxu0 0
        %3664 = vmatpush.bf16.msra.mxu0 0
        %3665 = vmatpush.bf16.msra.mxu0 %v2366
        %3666 = vmatpush.bf16.msra.mxu0 %v2360
        %3667 = vmatmul.bf16.gmra.mxu0 %v3592
        %v3668 = vpop.f32.mrf.mxu0
        %v3669 = vadd.f32 %v3656, %v3668
        %v3670 = vpop.f32.mrf.mxu0
        %3671 = vdwg.mxu0
        %3672 = vmatpush.bf16.msra.mxu0 %v2355
        %3673 = vmatpush.bf16.msra.mxu0 %v2349
        %3674 = vmatpush.bf16.msra.mxu0 %v2343
        %3675 = vmatpush.bf16.msra.mxu0 %v2337
        %3676 = vmatpush.bf16.msra.mxu0 %v2331
        %3677 = vmatpush.bf16.msra.mxu0 %v2325
        %3678 = vmatpush.bf16.msra.mxu0 %v2319
        %3679 = vmatpush.bf16.msra.mxu0 %v2313
        %3680 = vmatmul.bf16.gmra.mxu0 %v3585
        %v3681 = vpop.f32.mrf.mxu0
        %v3682 = vadd.f32 %v2434, %v3681
        %v3683 = vpop.f32.mrf.mxu0
        %3684 = vdwg.mxu0
        %3685 = vmatpush.bf16.msra.mxu0 0
        %3686 = vmatpush.bf16.msra.mxu0 0
        %3687 = vmatpush.bf16.msra.mxu0 0
        %3688 = vmatpush.bf16.msra.mxu0 0
        %3689 = vmatpush.bf16.msra.mxu0 0
        %3690 = vmatpush.bf16.msra.mxu0 0
        %3691 = vmatpush.bf16.msra.mxu0 %v2367
        %3692 = vmatpush.bf16.msra.mxu0 %v2361
        %3693 = vmatmul.bf16.gmra.mxu0 %v3592
        %v3694 = vpop.f32.mrf.mxu0
        %v3695 = vadd.f32 %v3682, %v3694
        %v3696 = vpop.f32.mrf.mxu0
        %3697 = vdwg.mxu0
        %3698 = vmatpush.bf16.msra.mxu0 %v2356
        %3699 = vmatpush.bf16.msra.mxu0 %v2350
        %3700 = vmatpush.bf16.msra.mxu0 %v2344
        %3701 = vmatpush.bf16.msra.mxu0 %v2338
        %3702 = vmatpush.bf16.msra.mxu0 %v2332
        %3703 = vmatpush.bf16.msra.mxu0 %v2326
        %3704 = vmatpush.bf16.msra.mxu0 %v2320
        %3705 = vmatpush.bf16.msra.mxu0 %v2314
        %3706 = vmatmul.bf16.gmra.mxu0 %v3585
        %v3707 = vpop.f32.mrf.mxu0
        %v3708 = vadd.f32 %v2435, %v3707
        %v3709 = vpop.f32.mrf.mxu0
        %3710 = vdwg.mxu0
        %3711 = vmatpush.bf16.msra.mxu0 0
        %3712 = vmatpush.bf16.msra.mxu0 0
        %3713 = vmatpush.bf16.msra.mxu0 0
        %3714 = vmatpush.bf16.msra.mxu0 0
        %3715 = vmatpush.bf16.msra.mxu0 0
        %3716 = vmatpush.bf16.msra.mxu0 0
        %3717 = vmatpush.bf16.msra.mxu0 %v2368
        %3718 = vmatpush.bf16.msra.mxu0 %v2362
        %3719 = vmatmul.bf16.gmra.mxu0 %v3592
        %v3720 = vpop.f32.mrf.mxu0
        %v3721 = vadd.f32 %v3708, %v3720
        %v3722 = vpop.f32.mrf.mxu0
        %3723 = vdwg.mxu0
        %3724 = vmatpush.bf16.msra.mxu0 %v2357
        %3725 = vmatpush.bf16.msra.mxu0 %v2351
        %3726 = vmatpush.bf16.msra.mxu0 %v2345
        %3727 = vmatpush.bf16.msra.mxu0 %v2339
        %3728 = vmatpush.bf16.msra.mxu0 %v2333
        %3729 = vmatpush.bf16.msra.mxu0 %v2327
        %3730 = vmatpush.bf16.msra.mxu0 %v2321
        %3731 = vmatpush.bf16.msra.mxu0 %v2315
        %3732 = vmatmul.bf16.gmra.mxu0 %v3585
        %v3733 = vpop.f32.mrf.mxu0
        %v3734 = vadd.f32 %v2436, %v3733
        %v3735 = vpop.f32.mrf.mxu0
        %3736 = vdwg.mxu0
        %3737 = vmatpush.bf16.msra.mxu0 0
        %3738 = vmatpush.bf16.msra.mxu0 0
        %3739 = vmatpush.bf16.msra.mxu0 0
        %3740 = vmatpush.bf16.msra.mxu0 0
        %3741 = vmatpush.bf16.msra.mxu0 0
        %3742 = vmatpush.bf16.msra.mxu0 0
        %3743 = vmatpush.bf16.msra.mxu0 %v2369
        %3744 = vmatpush.bf16.msra.mxu0 %v2363
        %3745 = vmatmul.bf16.gmra.mxu0 %v3592
        %v3746 = vpop.f32.mrf.mxu0
        %v3747 = vadd.f32 %v3734, %v3746
        %v3748 = vpop.f32.mrf.mxu0
        %3749 = vdwg.mxu0
        %v3752 = vrot.slane %v3617, 4
        %v3753 = vrot.slane %v3643, 4
        %v3756 = vadd.f32 %v1936, %v3752
        %v3757 = vadd.f32 %v1962, %v3753
        %v3758 = vxor.u32 %v3756, 2147483648
        %v3759 = vxor.u32 %v3757, 2147483648
        %v3760 = vmul.f32 %v3758, 1.442695
        %v3761 = vpow.pop %v3760
        %v3762 = vmul.f32 %v3759, 1.442695
        %v3763 = vpow.pop %v3762
        %v3764 = vadd.f32 %v3761, 1.0
        %v3765 = vadd.f32 %v3763, 1.0
        %v3766 = vrcp.pop %v3764
        %v3767 = vmul.f32 %v3764, %v3766
        %v3768 = vsub.f32 1.0, %v3767
        %v3769 = vmul.f32 %v3766, %v3768
        %v3770 = vadd.f32 %v3766, %v3769
        %vm3771 = vweird.f32 %v3764
        %vm3772 = vweird.f32 %v3766
        %vm3773 = vmor %vm3771, %vm3772
        %v3774 = vsel %vm3773, %v3766, %v3770
        %v3775 = vand.u32 2147483647, %v3764
        %vm3776 = vcmp.eq.f32.partialorder %v3775, 8.507059e+37
        %v3777 = vand.u32 %v3764, 2147483648
        %v3778 = vor.u32 1.1754944e-38, %v3777
        %v3779 = vsel %vm3776, %v3778, %v3774
        %v3780 = vmul.f32 1.0, %v3779
        %v3781 = vrcp.pop %v3765
        %v3782 = vmul.f32 %v3765, %v3781
        %v3783 = vsub.f32 1.0, %v3782
        %v3784 = vmul.f32 %v3781, %v3783
        %v3785 = vadd.f32 %v3781, %v3784
        %vm3786 = vweird.f32 %v3765
        %vm3787 = vweird.f32 %v3781
        %vm3788 = vmor %vm3786, %vm3787
        %v3789 = vsel %vm3788, %v3781, %v3785
        %v3790 = vand.u32 2147483647, %v3765
        %vm3791 = vcmp.eq.f32.partialorder %v3790, 8.507059e+37
        %v3792 = vand.u32 %v3765, 2147483648
        %v3793 = vor.u32 1.1754944e-38, %v3792
        %v3794 = vsel %vm3791, %v3793, %v3789
        %v3795 = vmul.f32 1.0, %v3794
        %v3798 = vrot.slane %v3669, 4
        %v3799 = vrot.slane %v3695, 4
        %v3802 = vadd.f32 %v1988, %v3798
        %v3803 = vadd.f32 %v2014, %v3799
        %v3804 = vxor.u32 %v3802, 2147483648
        %v3805 = vxor.u32 %v3803, 2147483648
        %v3806 = vmul.f32 %v3804, 1.442695
        %v3807 = vpow.pop %v3806
        %v3808 = vmul.f32 %v3805, 1.442695
        %v3809 = vpow.pop %v3808
        %v3810 = vadd.f32 %v3807, 1.0
        %v3811 = vadd.f32 %v3809, 1.0
        %v3812 = vrcp.pop %v3810
        %v3813 = vmul.f32 %v3810, %v3812
        %v3814 = vsub.f32 1.0, %v3813
        %v3815 = vmul.f32 %v3812, %v3814
        %v3816 = vadd.f32 %v3812, %v3815
        %vm3817 = vweird.f32 %v3810
        %vm3818 = vweird.f32 %v3812
        %vm3819 = vmor %vm3817, %vm3818
        %v3820 = vsel %vm3819, %v3812, %v3816
        %v3821 = vand.u32 2147483647, %v3810
        %vm3822 = vcmp.eq.f32.partialorder %v3821, 8.507059e+37
        %v3823 = vand.u32 %v3810, 2147483648
        %v3824 = vor.u32 1.1754944e-38, %v3823
        %v3825 = vsel %vm3822, %v3824, %v3820
        %v3826 = vmul.f32 1.0, %v3825
        %v3827 = vrcp.pop %v3811
        %v3828 = vmul.f32 %v3811, %v3827
        %v3829 = vsub.f32 1.0, %v3828
        %v3830 = vmul.f32 %v3827, %v3829
        %v3831 = vadd.f32 %v3827, %v3830
        %vm3832 = vweird.f32 %v3811
        %vm3833 = vweird.f32 %v3827
        %vm3834 = vmor %vm3832, %vm3833
        %v3835 = vsel %vm3834, %v3827, %v3831
        %v3836 = vand.u32 2147483647, %v3811
        %vm3837 = vcmp.eq.f32.partialorder %v3836, 8.507059e+37
        %v3838 = vand.u32 %v3811, 2147483648
        %v3839 = vor.u32 1.1754944e-38, %v3838
        %v3840 = vsel %vm3837, %v3839, %v3835
        %v3841 = vmul.f32 1.0, %v3840
        %v3844 = vrot.slane %v3721, 4
        %v3845 = vrot.slane %v3747, 4
        %v3848 = vmul.f32 %v3780, %v3844
        %v3849 = vmul.f32 %v3795, %v3845
        %v3850 = vadd.f32 %v2040, %v3848
        %v3851 = vadd.f32 %v2066, %v3849
        %v3852 = vtanh.pop %v3850
        %v3853 = vtanh.pop %v3851
        %v3854 = vsub.f32 1.0, %v3826
        %v3855 = vsub.f32 1.0, %v3841
        %v3856 = vmul.f32 %v3854, %v3852
        %v3857 = vmul.f32 %v3855, %v3853
        %v3858 = vrot.slane %v3568, 7
        %v3859 = vrot.slane %v3569, 7
        %v3862 = vmul.f32 %v3826, %v3858
        %v3863 = vmul.f32 %v3841, %v3859
        %v3864 = vadd.f32 %v3856, %v3862
        %v3865 = vadd.f32 %v3857, %v3863
        %3868 = vst [vmem:[#allocation1] sm:$0xff] %v3864
        %3869 = vst [vmem:[#allocation1 + $0x9] sm:$0xff] %v3865
        %s3870 = scalar_lea.vmem [#allocation1], 4
        %v3871 = vld [vmem:[%s3870] ss:$9 sm:$0xff]
        %s3873 = scalar_lea.vmem [#allocation2], 4
        %3874 = vst.msk [vmem:[%s3873] ss:$8 sm:$0x3] %vm2705, %v3871
        %3875 = vst.msk [vmem:[%s3873] ss:$8 sm:$0x0] %vm2705, %v3871
        %v3876 = vpack.c.bf16 %v3864, %v3864
        %v3877 = vpack.c.bf16 %v3865, %v3865
        %v3880 = vrot.slane %v3876, 2
        %v3881 = vrot.slane %v3877, 2
        %v3884 = vsel %vm1097, %v3881, 0
        %3886 = vmatpush.bf16.msra.mxu0 %v2352
        %3887 = vmatpush.bf16.msra.mxu0 %v2346
        %3888 = vmatpush.bf16.msra.mxu0 %v2340
        %3889 = vmatpush.bf16.msra.mxu0 %v2334
        %3890 = vmatpush.bf16.msra.mxu0 %v2328
        %3891 = vmatpush.bf16.msra.mxu0 %v2322
        %3892 = vmatpush.bf16.msra.mxu0 %v2316
        %3893 = vmatpush.bf16.msra.mxu0 %v2310
        %3894 = vmatmul.bf16.gmra.mxu0 %v3880
        %v3895 = vpop.f32.mrf.mxu0
        %v3896 = vadd.f32 %v2431, %v3895
        %v3897 = vpop.f32.mrf.mxu0
        %3898 = vdwg.mxu0
        %3899 = vmatpush.bf16.msra.mxu0 0
        %3900 = vmatpush.bf16.msra.mxu0 0
        %3901 = vmatpush.bf16.msra.mxu0 0
        %3902 = vmatpush.bf16.msra.mxu0 0
        %3903 = vmatpush.bf16.msra.mxu0 0
        %3904 = vmatpush.bf16.msra.mxu0 0
        %3905 = vmatpush.bf16.msra.mxu0 %v2364
        %3906 = vmatpush.bf16.msra.mxu0 %v2358
        %3907 = vmatmul.bf16.gmra.mxu0 %v3884
        %v3908 = vpop.f32.mrf.mxu0
        %v3909 = vadd.f32 %v3896, %v3908
        %v3910 = vpop.f32.mrf.mxu0
        %3911 = vdwg.mxu0
        %3912 = vmatpush.bf16.msra.mxu0 %v2353
        %3913 = vmatpush.bf16.msra.mxu0 %v2347
        %3914 = vmatpush.bf16.msra.mxu0 %v2341
        %3915 = vmatpush.bf16.msra.mxu0 %v2335
        %3916 = vmatpush.bf16.msra.mxu0 %v2329
        %3917 = vmatpush.bf16.msra.mxu0 %v2323
        %3918 = vmatpush.bf16.msra.mxu0 %v2317
        %3919 = vmatpush.bf16.msra.mxu0 %v2311
        %3920 = vmatmul.bf16.gmra.mxu0 %v3880
        %v3921 = vpop.f32.mrf.mxu0
        %v3922 = vadd.f32 %v2432, %v3921
        %v3923 = vpop.f32.mrf.mxu0
        %3924 = vdwg.mxu0
        %3925 = vmatpush.bf16.msra.mxu0 0
        %3926 = vmatpush.bf16.msra.mxu0 0
        %3927 = vmatpush.bf16.msra.mxu0 0
        %3928 = vmatpush.bf16.msra.mxu0 0
        %3929 = vmatpush.bf16.msra.mxu0 0
        %3930 = vmatpush.bf16.msra.mxu0 0
        %3931 = vmatpush.bf16.msra.mxu0 %v2365
        %3932 = vmatpush.bf16.msra.mxu0 %v2359
        %3933 = vmatmul.bf16.gmra.mxu0 %v3884
        %v3934 = vpop.f32.mrf.mxu0
        %v3935 = vadd.f32 %v3922, %v3934
        %v3936 = vpop.f32.mrf.mxu0
        %3937 = vdwg.mxu0
        %3938 = vmatpush.bf16.msra.mxu0 %v2354
        %3939 = vmatpush.bf16.msra.mxu0 %v2348
        %3940 = vmatpush.bf16.msra.mxu0 %v2342
        %3941 = vmatpush.bf16.msra.mxu0 %v2336
        %3942 = vmatpush.bf16.msra.mxu0 %v2330
        %3943 = vmatpush.bf16.msra.mxu0 %v2324
        %3944 = vmatpush.bf16.msra.mxu0 %v2318
        %3945 = vmatpush.bf16.msra.mxu0 %v2312
        %3946 = vmatmul.bf16.gmra.mxu0 %v3880
        %v3947 = vpop.f32.mrf.mxu0
        %v3948 = vadd.f32 %v2433, %v3947
        %v3949 = vpop.f32.mrf.mxu0
        %3950 = vdwg.mxu0
        %3951 = vmatpush.bf16.msra.mxu0 0
        %3952 = vmatpush.bf16.msra.mxu0 0
        %3953 = vmatpush.bf16.msra.mxu0 0
        %3954 = vmatpush.bf16.msra.mxu0 0
        %3955 = vmatpush.bf16.msra.mxu0 0
        %3956 = vmatpush.bf16.msra.mxu0 0
        %3957 = vmatpush.bf16.msra.mxu0 %v2366
        %3958 = vmatpush.bf16.msra.mxu0 %v2360
        %3959 = vmatmul.bf16.gmra.mxu0 %v3884
        %v3960 = vpop.f32.mrf.mxu0
        %v3961 = vadd.f32 %v3948, %v3960
        %v3962 = vpop.f32.mrf.mxu0
        %3963 = vdwg.mxu0
        %3964 = vmatpush.bf16.msra.mxu0 %v2355
        %3965 = vmatpush.bf16.msra.mxu0 %v2349
        %3966 = vmatpush.bf16.msra.mxu0 %v2343
        %3967 = vmatpush.bf16.msra.mxu0 %v2337
        %3968 = vmatpush.bf16.msra.mxu0 %v2331
        %3969 = vmatpush.bf16.msra.mxu0 %v2325
        %3970 = vmatpush.bf16.msra.mxu0 %v2319
        %3971 = vmatpush.bf16.msra.mxu0 %v2313
        %3972 = vmatmul.bf16.gmra.mxu0 %v3880
        %v3973 = vpop.f32.mrf.mxu0
        %v3974 = vadd.f32 %v2434, %v3973
        %v3975 = vpop.f32.mrf.mxu0
        %3976 = vdwg.mxu0
        %3977 = vmatpush.bf16.msra.mxu0 0
        %3978 = vmatpush.bf16.msra.mxu0 0
        %3979 = vmatpush.bf16.msra.mxu0 0
        %3980 = vmatpush.bf16.msra.mxu0 0
        %3981 = vmatpush.bf16.msra.mxu0 0
        %3982 = vmatpush.bf16.msra.mxu0 0
        %3983 = vmatpush.bf16.msra.mxu0 %v2367
        %3984 = vmatpush.bf16.msra.mxu0 %v2361
        %3985 = vmatmul.bf16.gmra.mxu0 %v3884
        %v3986 = vpop.f32.mrf.mxu0
        %v3987 = vadd.f32 %v3974, %v3986
        %v3988 = vpop.f32.mrf.mxu0
        %3989 = vdwg.mxu0
        %3990 = vmatpush.bf16.msra.mxu0 %v2356
        %3991 = vmatpush.bf16.msra.mxu0 %v2350
        %3992 = vmatpush.bf16.msra.mxu0 %v2344
        %3993 = vmatpush.bf16.msra.mxu0 %v2338
        %3994 = vmatpush.bf16.msra.mxu0 %v2332
        %3995 = vmatpush.bf16.msra.mxu0 %v2326
        %3996 = vmatpush.bf16.msra.mxu0 %v2320
        %3997 = vmatpush.bf16.msra.mxu0 %v2314
        %3998 = vmatmul.bf16.gmra.mxu0 %v3880
        %v3999 = vpop.f32.mrf.mxu0
        %v4000 = vadd.f32 %v2435, %v3999
        %v4001 = vpop.f32.mrf.mxu0
        %4002 = vdwg.mxu0
        %4003 = vmatpush.bf16.msra.mxu0 0
        %4004 = vmatpush.bf16.msra.mxu0 0
        %4005 = vmatpush.bf16.msra.mxu0 0
        %4006 = vmatpush.bf16.msra.mxu0 0
        %4007 = vmatpush.bf16.msra.mxu0 0
        %4008 = vmatpush.bf16.msra.mxu0 0
        %4009 = vmatpush.bf16.msra.mxu0 %v2368
        %4010 = vmatpush.bf16.msra.mxu0 %v2362
        %4011 = vmatmul.bf16.gmra.mxu0 %v3884
        %v4012 = vpop.f32.mrf.mxu0
        %v4013 = vadd.f32 %v4000, %v4012
        %v4014 = vpop.f32.mrf.mxu0
        %4015 = vdwg.mxu0
        %4016 = vmatpush.bf16.msra.mxu0 %v2357
        %4017 = vmatpush.bf16.msra.mxu0 %v2351
        %4018 = vmatpush.bf16.msra.mxu0 %v2345
        %4019 = vmatpush.bf16.msra.mxu0 %v2339
        %4020 = vmatpush.bf16.msra.mxu0 %v2333
        %4021 = vmatpush.bf16.msra.mxu0 %v2327
        %4022 = vmatpush.bf16.msra.mxu0 %v2321
        %4023 = vmatpush.bf16.msra.mxu0 %v2315
        %4024 = vmatmul.bf16.gmra.mxu0 %v3880
        %v4025 = vpop.f32.mrf.mxu0
        %v4026 = vadd.f32 %v2436, %v4025
        %v4027 = vpop.f32.mrf.mxu0
        %4028 = vdwg.mxu0
        %4029 = vmatpush.bf16.msra.mxu0 0
        %4030 = vmatpush.bf16.msra.mxu0 0
        %4031 = vmatpush.bf16.msra.mxu0 0
        %4032 = vmatpush.bf16.msra.mxu0 0
        %4033 = vmatpush.bf16.msra.mxu0 0
        %4034 = vmatpush.bf16.msra.mxu0 0
        %4035 = vmatpush.bf16.msra.mxu0 %v2369
        %4036 = vmatpush.bf16.msra.mxu0 %v2363
        %4037 = vmatmul.bf16.gmra.mxu0 %v3884
        %v4038 = vpop.f32.mrf.mxu0
        %v4039 = vadd.f32 %v4026, %v4038
        %v4040 = vpop.f32.mrf.mxu0
        %4041 = vdwg.mxu0
        %v4044 = vrot.slane %v3909, 3
        %v4045 = vrot.slane %v3935, 3
        %v4048 = vadd.f32 %v1936, %v4044
        %v4049 = vadd.f32 %v1962, %v4045
        %v4050 = vxor.u32 %v4048, 2147483648
        %v4051 = vxor.u32 %v4049, 2147483648
        %v4052 = vmul.f32 %v4050, 1.442695
        %v4053 = vpow.pop %v4052
        %v4054 = vmul.f32 %v4051, 1.442695
        %v4055 = vpow.pop %v4054
        %v4056 = vadd.f32 %v4053, 1.0
        %v4057 = vadd.f32 %v4055, 1.0
        %v4058 = vrcp.pop %v4056
        %v4059 = vmul.f32 %v4056, %v4058
        %v4060 = vsub.f32 1.0, %v4059
        %v4061 = vmul.f32 %v4058, %v4060
        %v4062 = vadd.f32 %v4058, %v4061
        %vm4063 = vweird.f32 %v4056
        %vm4064 = vweird.f32 %v4058
        %vm4065 = vmor %vm4063, %vm4064
        %v4066 = vsel %vm4065, %v4058, %v4062
        %v4067 = vand.u32 2147483647, %v4056
        %vm4068 = vcmp.eq.f32.partialorder %v4067, 8.507059e+37
        %v4069 = vand.u32 %v4056, 2147483648
        %v4070 = vor.u32 1.1754944e-38, %v4069
        %v4071 = vsel %vm4068, %v4070, %v4066
        %v4072 = vmul.f32 1.0, %v4071
        %v4073 = vrcp.pop %v4057
        %v4074 = vmul.f32 %v4057, %v4073
        %v4075 = vsub.f32 1.0, %v4074
        %v4076 = vmul.f32 %v4073, %v4075
        %v4077 = vadd.f32 %v4073, %v4076
        %vm4078 = vweird.f32 %v4057
        %vm4079 = vweird.f32 %v4073
        %vm4080 = vmor %vm4078, %vm4079
        %v4081 = vsel %vm4080, %v4073, %v4077
        %v4082 = vand.u32 2147483647, %v4057
        %vm4083 = vcmp.eq.f32.partialorder %v4082, 8.507059e+37
        %v4084 = vand.u32 %v4057, 2147483648
        %v4085 = vor.u32 1.1754944e-38, %v4084
        %v4086 = vsel %vm4083, %v4085, %v4081
        %v4087 = vmul.f32 1.0, %v4086
        %v4090 = vrot.slane %v3961, 3
        %v4091 = vrot.slane %v3987, 3
        %v4094 = vadd.f32 %v1988, %v4090
        %v4095 = vadd.f32 %v2014, %v4091
        %v4096 = vxor.u32 %v4094, 2147483648
        %v4097 = vxor.u32 %v4095, 2147483648
        %v4098 = vmul.f32 %v4096, 1.442695
        %v4099 = vpow.pop %v4098
        %v4100 = vmul.f32 %v4097, 1.442695
        %v4101 = vpow.pop %v4100
        %v4102 = vadd.f32 %v4099, 1.0
        %v4103 = vadd.f32 %v4101, 1.0
        %v4104 = vrcp.pop %v4102
        %v4105 = vmul.f32 %v4102, %v4104
        %v4106 = vsub.f32 1.0, %v4105
        %v4107 = vmul.f32 %v4104, %v4106
        %v4108 = vadd.f32 %v4104, %v4107
        %vm4109 = vweird.f32 %v4102
        %vm4110 = vweird.f32 %v4104
        %vm4111 = vmor %vm4109, %vm4110
        %v4112 = vsel %vm4111, %v4104, %v4108
        %v4113 = vand.u32 2147483647, %v4102
        %vm4114 = vcmp.eq.f32.partialorder %v4113, 8.507059e+37
        %v4115 = vand.u32 %v4102, 2147483648
        %v4116 = vor.u32 1.1754944e-38, %v4115
        %v4117 = vsel %vm4114, %v4116, %v4112
        %v4118 = vmul.f32 1.0, %v4117
        %v4119 = vrcp.pop %v4103
        %v4120 = vmul.f32 %v4103, %v4119
        %v4121 = vsub.f32 1.0, %v4120
        %v4122 = vmul.f32 %v4119, %v4121
        %v4123 = vadd.f32 %v4119, %v4122
        %vm4124 = vweird.f32 %v4103
        %vm4125 = vweird.f32 %v4119
        %vm4126 = vmor %vm4124, %vm4125
        %v4127 = vsel %vm4126, %v4119, %v4123
        %v4128 = vand.u32 2147483647, %v4103
        %vm4129 = vcmp.eq.f32.partialorder %v4128, 8.507059e+37
        %v4130 = vand.u32 %v4103, 2147483648
        %v4131 = vor.u32 1.1754944e-38, %v4130
        %v4132 = vsel %vm4129, %v4131, %v4127
        %v4133 = vmul.f32 1.0, %v4132
        %v4136 = vrot.slane %v4013, 3
        %v4137 = vrot.slane %v4039, 3
        %v4140 = vmul.f32 %v4072, %v4136
        %v4141 = vmul.f32 %v4087, %v4137
        %v4142 = vadd.f32 %v2040, %v4140
        %v4143 = vadd.f32 %v2066, %v4141
        %v4144 = vtanh.pop %v4142
        %v4145 = vtanh.pop %v4143
        %v4146 = vsub.f32 1.0, %v4118
        %v4147 = vsub.f32 1.0, %v4133
        %v4148 = vmul.f32 %v4146, %v4144
        %v4149 = vmul.f32 %v4147, %v4145
        %v4150 = vrot.slane %v3864, 7
        %v4151 = vrot.slane %v3865, 7
        %v4154 = vmul.f32 %v4118, %v4150
        %v4155 = vmul.f32 %v4133, %v4151
        %v4156 = vadd.f32 %v4148, %v4154
        %v4157 = vadd.f32 %v4149, %v4155
        %4160 = vst [vmem:[#allocation1] sm:$0xff] %v4156
        %4161 = vst [vmem:[#allocation1 + $0x9] sm:$0xff] %v4157
        %s4162 = scalar_lea.vmem [#allocation1], 5
        %v4163 = vld [vmem:[%s4162] ss:$9 sm:$0xff]
        %s4165 = scalar_lea.vmem [#allocation2], 5
        %4166 = vst.msk [vmem:[%s4165] ss:$8 sm:$0x3] %vm2705, %v4163
        %4167 = vst.msk [vmem:[%s4165] ss:$8 sm:$0x0] %vm2705, %v4163
        %v4168 = vpack.c.bf16 %v4156, %v4156
        %v4169 = vpack.c.bf16 %v4157, %v4157
        %v4171 = vshrl.u32 %v4168, 16
        %v4173 = vrot.slane %v4171, 2
        %v4175 = vshrl.u32 %v4169, 16
        %v4177 = vrot.slane %v4175, 2
        %v4180 = vsel %vm1097, %v4177, 0
        %4182 = vmatpush.bf16.msra.mxu0 %v2352
        %4183 = vmatpush.bf16.msra.mxu0 %v2346
        %4184 = vmatpush.bf16.msra.mxu0 %v2340
        %4185 = vmatpush.bf16.msra.mxu0 %v2334
        %4186 = vmatpush.bf16.msra.mxu0 %v2328
        %4187 = vmatpush.bf16.msra.mxu0 %v2322
        %4188 = vmatpush.bf16.msra.mxu0 %v2316
        %4189 = vmatpush.bf16.msra.mxu0 %v2310
        %4190 = vmatmul.bf16.gmra.mxu0 %v4173
        %v4191 = vpop.f32.mrf.mxu0
        %v4192 = vadd.f32 %v2431, %v4191
        %v4193 = vpop.f32.mrf.mxu0
        %4194 = vdwg.mxu0
        %4195 = vmatpush.bf16.msra.mxu0 0
        %4196 = vmatpush.bf16.msra.mxu0 0
        %4197 = vmatpush.bf16.msra.mxu0 0
        %4198 = vmatpush.bf16.msra.mxu0 0
        %4199 = vmatpush.bf16.msra.mxu0 0
        %4200 = vmatpush.bf16.msra.mxu0 0
        %4201 = vmatpush.bf16.msra.mxu0 %v2364
        %4202 = vmatpush.bf16.msra.mxu0 %v2358
        %4203 = vmatmul.bf16.gmra.mxu0 %v4180
        %v4204 = vpop.f32.mrf.mxu0
        %v4205 = vadd.f32 %v4192, %v4204
        %v4206 = vpop.f32.mrf.mxu0
        %4207 = vdwg.mxu0
        %4208 = vmatpush.bf16.msra.mxu0 %v2353
        %4209 = vmatpush.bf16.msra.mxu0 %v2347
        %4210 = vmatpush.bf16.msra.mxu0 %v2341
        %4211 = vmatpush.bf16.msra.mxu0 %v2335
        %4212 = vmatpush.bf16.msra.mxu0 %v2329
        %4213 = vmatpush.bf16.msra.mxu0 %v2323
        %4214 = vmatpush.bf16.msra.mxu0 %v2317
        %4215 = vmatpush.bf16.msra.mxu0 %v2311
        %4216 = vmatmul.bf16.gmra.mxu0 %v4173
        %v4217 = vpop.f32.mrf.mxu0
        %v4218 = vadd.f32 %v2432, %v4217
        %v4219 = vpop.f32.mrf.mxu0
        %4220 = vdwg.mxu0
        %4221 = vmatpush.bf16.msra.mxu0 0
        %4222 = vmatpush.bf16.msra.mxu0 0
        %4223 = vmatpush.bf16.msra.mxu0 0
        %4224 = vmatpush.bf16.msra.mxu0 0
        %4225 = vmatpush.bf16.msra.mxu0 0
        %4226 = vmatpush.bf16.msra.mxu0 0
        %4227 = vmatpush.bf16.msra.mxu0 %v2365
        %4228 = vmatpush.bf16.msra.mxu0 %v2359
        %4229 = vmatmul.bf16.gmra.mxu0 %v4180
        %v4230 = vpop.f32.mrf.mxu0
        %v4231 = vadd.f32 %v4218, %v4230
        %v4232 = vpop.f32.mrf.mxu0
        %4233 = vdwg.mxu0
        %4234 = vmatpush.bf16.msra.mxu0 %v2354
        %4235 = vmatpush.bf16.msra.mxu0 %v2348
        %4236 = vmatpush.bf16.msra.mxu0 %v2342
        %4237 = vmatpush.bf16.msra.mxu0 %v2336
        %4238 = vmatpush.bf16.msra.mxu0 %v2330
        %4239 = vmatpush.bf16.msra.mxu0 %v2324
        %4240 = vmatpush.bf16.msra.mxu0 %v2318
        %4241 = vmatpush.bf16.msra.mxu0 %v2312
        %4242 = vmatmul.bf16.gmra.mxu0 %v4173
        %v4243 = vpop.f32.mrf.mxu0
        %v4244 = vadd.f32 %v2433, %v4243
        %v4245 = vpop.f32.mrf.mxu0
        %4246 = vdwg.mxu0
        %4247 = vmatpush.bf16.msra.mxu0 0
        %4248 = vmatpush.bf16.msra.mxu0 0
        %4249 = vmatpush.bf16.msra.mxu0 0
        %4250 = vmatpush.bf16.msra.mxu0 0
        %4251 = vmatpush.bf16.msra.mxu0 0
        %4252 = vmatpush.bf16.msra.mxu0 0
        %4253 = vmatpush.bf16.msra.mxu0 %v2366
        %4254 = vmatpush.bf16.msra.mxu0 %v2360
        %4255 = vmatmul.bf16.gmra.mxu0 %v4180
        %v4256 = vpop.f32.mrf.mxu0
        %v4257 = vadd.f32 %v4244, %v4256
        %v4258 = vpop.f32.mrf.mxu0
        %4259 = vdwg.mxu0
        %4260 = vmatpush.bf16.msra.mxu0 %v2355
        %4261 = vmatpush.bf16.msra.mxu0 %v2349
        %4262 = vmatpush.bf16.msra.mxu0 %v2343
        %4263 = vmatpush.bf16.msra.mxu0 %v2337
        %4264 = vmatpush.bf16.msra.mxu0 %v2331
        %4265 = vmatpush.bf16.msra.mxu0 %v2325
        %4266 = vmatpush.bf16.msra.mxu0 %v2319
        %4267 = vmatpush.bf16.msra.mxu0 %v2313
        %4268 = vmatmul.bf16.gmra.mxu0 %v4173
        %v4269 = vpop.f32.mrf.mxu0
        %v4270 = vadd.f32 %v2434, %v4269
        %v4271 = vpop.f32.mrf.mxu0
        %4272 = vdwg.mxu0
        %4273 = vmatpush.bf16.msra.mxu0 0
        %4274 = vmatpush.bf16.msra.mxu0 0
        %4275 = vmatpush.bf16.msra.mxu0 0
        %4276 = vmatpush.bf16.msra.mxu0 0
        %4277 = vmatpush.bf16.msra.mxu0 0
        %4278 = vmatpush.bf16.msra.mxu0 0
        %4279 = vmatpush.bf16.msra.mxu0 %v2367
        %4280 = vmatpush.bf16.msra.mxu0 %v2361
        %4281 = vmatmul.bf16.gmra.mxu0 %v4180
        %v4282 = vpop.f32.mrf.mxu0
        %v4283 = vadd.f32 %v4270, %v4282
        %v4284 = vpop.f32.mrf.mxu0
        %4285 = vdwg.mxu0
        %4286 = vmatpush.bf16.msra.mxu0 %v2356
        %4287 = vmatpush.bf16.msra.mxu0 %v2350
        %4288 = vmatpush.bf16.msra.mxu0 %v2344
        %4289 = vmatpush.bf16.msra.mxu0 %v2338
        %4290 = vmatpush.bf16.msra.mxu0 %v2332
        %4291 = vmatpush.bf16.msra.mxu0 %v2326
        %4292 = vmatpush.bf16.msra.mxu0 %v2320
        %4293 = vmatpush.bf16.msra.mxu0 %v2314
        %4294 = vmatmul.bf16.gmra.mxu0 %v4173
        %v4295 = vpop.f32.mrf.mxu0
        %v4296 = vadd.f32 %v2435, %v4295
        %v4297 = vpop.f32.mrf.mxu0
        %4298 = vdwg.mxu0
        %4299 = vmatpush.bf16.msra.mxu0 0
        %4300 = vmatpush.bf16.msra.mxu0 0
        %4301 = vmatpush.bf16.msra.mxu0 0
        %4302 = vmatpush.bf16.msra.mxu0 0
        %4303 = vmatpush.bf16.msra.mxu0 0
        %4304 = vmatpush.bf16.msra.mxu0 0
        %4305 = vmatpush.bf16.msra.mxu0 %v2368
        %4306 = vmatpush.bf16.msra.mxu0 %v2362
        %4307 = vmatmul.bf16.gmra.mxu0 %v4180
        %v4308 = vpop.f32.mrf.mxu0
        %v4309 = vadd.f32 %v4296, %v4308
        %v4310 = vpop.f32.mrf.mxu0
        %4311 = vdwg.mxu0
        %4312 = vmatpush.bf16.msra.mxu0 %v2357
        %4313 = vmatpush.bf16.msra.mxu0 %v2351
        %4314 = vmatpush.bf16.msra.mxu0 %v2345
        %4315 = vmatpush.bf16.msra.mxu0 %v2339
        %4316 = vmatpush.bf16.msra.mxu0 %v2333
        %4317 = vmatpush.bf16.msra.mxu0 %v2327
        %4318 = vmatpush.bf16.msra.mxu0 %v2321
        %4319 = vmatpush.bf16.msra.mxu0 %v2315
        %4320 = vmatmul.bf16.gmra.mxu0 %v4173
        %v4321 = vpop.f32.mrf.mxu0
        %v4322 = vadd.f32 %v2436, %v4321
        %v4323 = vpop.f32.mrf.mxu0
        %4324 = vdwg.mxu0
        %4325 = vmatpush.bf16.msra.mxu0 0
        %4326 = vmatpush.bf16.msra.mxu0 0
        %4327 = vmatpush.bf16.msra.mxu0 0
        %4328 = vmatpush.bf16.msra.mxu0 0
        %4329 = vmatpush.bf16.msra.mxu0 0
        %4330 = vmatpush.bf16.msra.mxu0 0
        %4331 = vmatpush.bf16.msra.mxu0 %v2369
        %4332 = vmatpush.bf16.msra.mxu0 %v2363
        %4333 = vmatmul.bf16.gmra.mxu0 %v4180
        %v4334 = vpop.f32.mrf.mxu0
        %v4335 = vadd.f32 %v4322, %v4334
        %v4336 = vpop.f32.mrf.mxu0
        %4337 = vdwg.mxu0
        %v4340 = vrot.slane %v4205, 2
        %v4341 = vrot.slane %v4231, 2
        %v4344 = vadd.f32 %v1936, %v4340
        %v4345 = vadd.f32 %v1962, %v4341
        %v4346 = vxor.u32 %v4344, 2147483648
        %v4347 = vxor.u32 %v4345, 2147483648
        %v4348 = vmul.f32 %v4346, 1.442695
        %v4349 = vpow.pop %v4348
        %v4350 = vmul.f32 %v4347, 1.442695
        %v4351 = vpow.pop %v4350
        %v4352 = vadd.f32 %v4349, 1.0
        %v4353 = vadd.f32 %v4351, 1.0
        %v4354 = vrcp.pop %v4352
        %v4355 = vmul.f32 %v4352, %v4354
        %v4356 = vsub.f32 1.0, %v4355
        %v4357 = vmul.f32 %v4354, %v4356
        %v4358 = vadd.f32 %v4354, %v4357
        %vm4359 = vweird.f32 %v4352
        %vm4360 = vweird.f32 %v4354
        %vm4361 = vmor %vm4359, %vm4360
        %v4362 = vsel %vm4361, %v4354, %v4358
        %v4363 = vand.u32 2147483647, %v4352
        %vm4364 = vcmp.eq.f32.partialorder %v4363, 8.507059e+37
        %v4365 = vand.u32 %v4352, 2147483648
        %v4366 = vor.u32 1.1754944e-38, %v4365
        %v4367 = vsel %vm4364, %v4366, %v4362
        %v4368 = vmul.f32 1.0, %v4367
        %v4369 = vrcp.pop %v4353
        %v4370 = vmul.f32 %v4353, %v4369
        %v4371 = vsub.f32 1.0, %v4370
        %v4372 = vmul.f32 %v4369, %v4371
        %v4373 = vadd.f32 %v4369, %v4372
        %vm4374 = vweird.f32 %v4353
        %vm4375 = vweird.f32 %v4369
        %vm4376 = vmor %vm4374, %vm4375
        %v4377 = vsel %vm4376, %v4369, %v4373
        %v4378 = vand.u32 2147483647, %v4353
        %vm4379 = vcmp.eq.f32.partialorder %v4378, 8.507059e+37
        %v4380 = vand.u32 %v4353, 2147483648
        %v4381 = vor.u32 1.1754944e-38, %v4380
        %v4382 = vsel %vm4379, %v4381, %v4377
        %v4383 = vmul.f32 1.0, %v4382
        %v4386 = vrot.slane %v4257, 2
        %v4387 = vrot.slane %v4283, 2
        %v4390 = vadd.f32 %v1988, %v4386
        %v4391 = vadd.f32 %v2014, %v4387
        %v4392 = vxor.u32 %v4390, 2147483648
        %v4393 = vxor.u32 %v4391, 2147483648
        %v4394 = vmul.f32 %v4392, 1.442695
        %v4395 = vpow.pop %v4394
        %v4396 = vmul.f32 %v4393, 1.442695
        %v4397 = vpow.pop %v4396
        %v4398 = vadd.f32 %v4395, 1.0
        %v4399 = vadd.f32 %v4397, 1.0
        %v4400 = vrcp.pop %v4398
        %v4401 = vmul.f32 %v4398, %v4400
        %v4402 = vsub.f32 1.0, %v4401
        %v4403 = vmul.f32 %v4400, %v4402
        %v4404 = vadd.f32 %v4400, %v4403
        %vm4405 = vweird.f32 %v4398
        %vm4406 = vweird.f32 %v4400
        %vm4407 = vmor %vm4405, %vm4406
        %v4408 = vsel %vm4407, %v4400, %v4404
        %v4409 = vand.u32 2147483647, %v4398
        %vm4410 = vcmp.eq.f32.partialorder %v4409, 8.507059e+37
        %v4411 = vand.u32 %v4398, 2147483648
        %v4412 = vor.u32 1.1754944e-38, %v4411
        %v4413 = vsel %vm4410, %v4412, %v4408
        %v4414 = vmul.f32 1.0, %v4413
        %v4415 = vrcp.pop %v4399
        %v4416 = vmul.f32 %v4399, %v4415
        %v4417 = vsub.f32 1.0, %v4416
        %v4418 = vmul.f32 %v4415, %v4417
        %v4419 = vadd.f32 %v4415, %v4418
        %vm4420 = vweird.f32 %v4399
        %vm4421 = vweird.f32 %v4415
        %vm4422 = vmor %vm4420, %vm4421
        %v4423 = vsel %vm4422, %v4415, %v4419
        %v4424 = vand.u32 2147483647, %v4399
        %vm4425 = vcmp.eq.f32.partialorder %v4424, 8.507059e+37
        %v4426 = vand.u32 %v4399, 2147483648
        %v4427 = vor.u32 1.1754944e-38, %v4426
        %v4428 = vsel %vm4425, %v4427, %v4423
        %v4429 = vmul.f32 1.0, %v4428
        %v4432 = vrot.slane %v4309, 2
        %v4433 = vrot.slane %v4335, 2
        %v4436 = vmul.f32 %v4368, %v4432
        %v4437 = vmul.f32 %v4383, %v4433
        %v4438 = vadd.f32 %v2040, %v4436
        %v4439 = vadd.f32 %v2066, %v4437
        %v4440 = vtanh.pop %v4438
        %v4441 = vtanh.pop %v4439
        %v4442 = vsub.f32 1.0, %v4414
        %v4443 = vsub.f32 1.0, %v4429
        %v4444 = vmul.f32 %v4442, %v4440
        %v4445 = vmul.f32 %v4443, %v4441
        %v4446 = vrot.slane %v4156, 7
        %v4447 = vrot.slane %v4157, 7
        %v4450 = vmul.f32 %v4414, %v4446
        %v4451 = vmul.f32 %v4429, %v4447
        %v4452 = vadd.f32 %v4444, %v4450
        %v4453 = vadd.f32 %v4445, %v4451
        %4456 = vst [vmem:[#allocation1] sm:$0xff] %v4452
        %4457 = vst [vmem:[#allocation1 + $0x9] sm:$0xff] %v4453
        %s4458 = scalar_lea.vmem [#allocation1], 6
        %v4459 = vld [vmem:[%s4458] ss:$9 sm:$0xff]
        %s4461 = scalar_lea.vmem [#allocation2], 6
        %4462 = vst.msk [vmem:[%s4461] ss:$8 sm:$0x3] %vm2705, %v4459
        %4463 = vst.msk [vmem:[%s4461] ss:$8 sm:$0x0] %vm2705, %v4459
        %v4464 = vpack.c.bf16 %v4452, %v4452
        %v4465 = vpack.c.bf16 %v4453, %v4453
        %v4468 = vrot.slane %v4464, 3
        %v4469 = vrot.slane %v4465, 3
        %v4472 = vsel %vm1097, %v4469, 0
        %4474 = vmatpush.bf16.msra.mxu0 %v2352
        %4475 = vmatpush.bf16.msra.mxu0 %v2346
        %4476 = vmatpush.bf16.msra.mxu0 %v2340
        %4477 = vmatpush.bf16.msra.mxu0 %v2334
        %4478 = vmatpush.bf16.msra.mxu0 %v2328
        %4479 = vmatpush.bf16.msra.mxu0 %v2322
        %4480 = vmatpush.bf16.msra.mxu0 %v2316
        %4481 = vmatpush.bf16.msra.mxu0 %v2310
        %4482 = vmatmul.bf16.gmra.mxu0 %v4468
        %v4483 = vpop.f32.mrf.mxu0
        %v4484 = vadd.f32 %v2431, %v4483
        %v4485 = vpop.f32.mrf.mxu0
        %4486 = vdwg.mxu0
        %4487 = vmatpush.bf16.msra.mxu0 0
        %4488 = vmatpush.bf16.msra.mxu0 0
        %4489 = vmatpush.bf16.msra.mxu0 0
        %4490 = vmatpush.bf16.msra.mxu0 0
        %4491 = vmatpush.bf16.msra.mxu0 0
        %4492 = vmatpush.bf16.msra.mxu0 0
        %4493 = vmatpush.bf16.msra.mxu0 %v2364
        %4494 = vmatpush.bf16.msra.mxu0 %v2358
        %4495 = vmatmul.bf16.gmra.mxu0 %v4472
        %v4496 = vpop.f32.mrf.mxu0
        %v4497 = vadd.f32 %v4484, %v4496
        %v4498 = vpop.f32.mrf.mxu0
        %4499 = vdwg.mxu0
        %4500 = vmatpush.bf16.msra.mxu0 %v2353
        %4501 = vmatpush.bf16.msra.mxu0 %v2347
        %4502 = vmatpush.bf16.msra.mxu0 %v2341
        %4503 = vmatpush.bf16.msra.mxu0 %v2335
        %4504 = vmatpush.bf16.msra.mxu0 %v2329
        %4505 = vmatpush.bf16.msra.mxu0 %v2323
        %4506 = vmatpush.bf16.msra.mxu0 %v2317
        %4507 = vmatpush.bf16.msra.mxu0 %v2311
        %4508 = vmatmul.bf16.gmra.mxu0 %v4468
        %v4509 = vpop.f32.mrf.mxu0
        %v4510 = vadd.f32 %v2432, %v4509
        %v4511 = vpop.f32.mrf.mxu0
        %4512 = vdwg.mxu0
        %4513 = vmatpush.bf16.msra.mxu0 0
        %4514 = vmatpush.bf16.msra.mxu0 0
        %4515 = vmatpush.bf16.msra.mxu0 0
        %4516 = vmatpush.bf16.msra.mxu0 0
        %4517 = vmatpush.bf16.msra.mxu0 0
        %4518 = vmatpush.bf16.msra.mxu0 0
        %4519 = vmatpush.bf16.msra.mxu0 %v2365
        %4520 = vmatpush.bf16.msra.mxu0 %v2359
        %4521 = vmatmul.bf16.gmra.mxu0 %v4472
        %v4522 = vpop.f32.mrf.mxu0
        %v4523 = vadd.f32 %v4510, %v4522
        %v4524 = vpop.f32.mrf.mxu0
        %4525 = vdwg.mxu0
        %4526 = vmatpush.bf16.msra.mxu0 %v2354
        %4527 = vmatpush.bf16.msra.mxu0 %v2348
        %4528 = vmatpush.bf16.msra.mxu0 %v2342
        %4529 = vmatpush.bf16.msra.mxu0 %v2336
        %4530 = vmatpush.bf16.msra.mxu0 %v2330
        %4531 = vmatpush.bf16.msra.mxu0 %v2324
        %4532 = vmatpush.bf16.msra.mxu0 %v2318
        %4533 = vmatpush.bf16.msra.mxu0 %v2312
        %4534 = vmatmul.bf16.gmra.mxu0 %v4468
        %v4535 = vpop.f32.mrf.mxu0
        %v4536 = vadd.f32 %v2433, %v4535
        %v4537 = vpop.f32.mrf.mxu0
        %4538 = vdwg.mxu0
        %4539 = vmatpush.bf16.msra.mxu0 0
        %4540 = vmatpush.bf16.msra.mxu0 0
        %4541 = vmatpush.bf16.msra.mxu0 0
        %4542 = vmatpush.bf16.msra.mxu0 0
        %4543 = vmatpush.bf16.msra.mxu0 0
        %4544 = vmatpush.bf16.msra.mxu0 0
        %4545 = vmatpush.bf16.msra.mxu0 %v2366
        %4546 = vmatpush.bf16.msra.mxu0 %v2360
        %4547 = vmatmul.bf16.gmra.mxu0 %v4472
        %v4548 = vpop.f32.mrf.mxu0
        %v4549 = vadd.f32 %v4536, %v4548
        %v4550 = vpop.f32.mrf.mxu0
        %4551 = vdwg.mxu0
        %4552 = vmatpush.bf16.msra.mxu0 %v2355
        %4553 = vmatpush.bf16.msra.mxu0 %v2349
        %4554 = vmatpush.bf16.msra.mxu0 %v2343
        %4555 = vmatpush.bf16.msra.mxu0 %v2337
        %4556 = vmatpush.bf16.msra.mxu0 %v2331
        %4557 = vmatpush.bf16.msra.mxu0 %v2325
        %4558 = vmatpush.bf16.msra.mxu0 %v2319
        %4559 = vmatpush.bf16.msra.mxu0 %v2313
        %4560 = vmatmul.bf16.gmra.mxu0 %v4468
        %v4561 = vpop.f32.mrf.mxu0
        %v4562 = vadd.f32 %v2434, %v4561
        %v4563 = vpop.f32.mrf.mxu0
        %4564 = vdwg.mxu0
        %4565 = vmatpush.bf16.msra.mxu0 0
        %4566 = vmatpush.bf16.msra.mxu0 0
        %4567 = vmatpush.bf16.msra.mxu0 0
        %4568 = vmatpush.bf16.msra.mxu0 0
        %4569 = vmatpush.bf16.msra.mxu0 0
        %4570 = vmatpush.bf16.msra.mxu0 0
        %4571 = vmatpush.bf16.msra.mxu0 %v2367
        %4572 = vmatpush.bf16.msra.mxu0 %v2361
        %4573 = vmatmul.bf16.gmra.mxu0 %v4472
        %v4574 = vpop.f32.mrf.mxu0
        %v4575 = vadd.f32 %v4562, %v4574
        %v4576 = vpop.f32.mrf.mxu0
        %4577 = vdwg.mxu0
        %4578 = vmatpush.bf16.msra.mxu0 %v2356
        %4579 = vmatpush.bf16.msra.mxu0 %v2350
        %4580 = vmatpush.bf16.msra.mxu0 %v2344
        %4581 = vmatpush.bf16.msra.mxu0 %v2338
        %4582 = vmatpush.bf16.msra.mxu0 %v2332
        %4583 = vmatpush.bf16.msra.mxu0 %v2326
        %4584 = vmatpush.bf16.msra.mxu0 %v2320
        %4585 = vmatpush.bf16.msra.mxu0 %v2314
        %4586 = vmatmul.bf16.gmra.mxu0 %v4468
        %v4587 = vpop.f32.mrf.mxu0
        %v4588 = vadd.f32 %v2435, %v4587
        %v4589 = vpop.f32.mrf.mxu0
        %4590 = vdwg.mxu0
        %4591 = vmatpush.bf16.msra.mxu0 0
        %4592 = vmatpush.bf16.msra.mxu0 0
        %4593 = vmatpush.bf16.msra.mxu0 0
        %4594 = vmatpush.bf16.msra.mxu0 0
        %4595 = vmatpush.bf16.msra.mxu0 0
        %4596 = vmatpush.bf16.msra.mxu0 0
        %4597 = vmatpush.bf16.msra.mxu0 %v2368
        %4598 = vmatpush.bf16.msra.mxu0 %v2362
        %4599 = vmatmul.bf16.gmra.mxu0 %v4472
        %v4600 = vpop.f32.mrf.mxu0
        %v4601 = vadd.f32 %v4588, %v4600
        %v4602 = vpop.f32.mrf.mxu0
        %4603 = vdwg.mxu0
        %4604 = vmatpush.bf16.msra.mxu0 %v2357
        %4605 = vmatpush.bf16.msra.mxu0 %v2351
        %4606 = vmatpush.bf16.msra.mxu0 %v2345
        %4607 = vmatpush.bf16.msra.mxu0 %v2339
        %4608 = vmatpush.bf16.msra.mxu0 %v2333
        %4609 = vmatpush.bf16.msra.mxu0 %v2327
        %4610 = vmatpush.bf16.msra.mxu0 %v2321
        %4611 = vmatpush.bf16.msra.mxu0 %v2315
        %4612 = vmatmul.bf16.gmra.mxu0 %v4468
        %v4613 = vpop.f32.mrf.mxu0
        %v4614 = vadd.f32 %v2436, %v4613
        %v4615 = vpop.f32.mrf.mxu0
        %4616 = vdwg.mxu0
        %4617 = vmatpush.bf16.msra.mxu0 0
        %4618 = vmatpush.bf16.msra.mxu0 0
        %4619 = vmatpush.bf16.msra.mxu0 0
        %4620 = vmatpush.bf16.msra.mxu0 0
        %4621 = vmatpush.bf16.msra.mxu0 0
        %4622 = vmatpush.bf16.msra.mxu0 0
        %4623 = vmatpush.bf16.msra.mxu0 %v2369
        %4624 = vmatpush.bf16.msra.mxu0 %v2363
        %4625 = vmatmul.bf16.gmra.mxu0 %v4472
        %v4626 = vpop.f32.mrf.mxu0
        %v4627 = vadd.f32 %v4614, %v4626
        %v4628 = vpop.f32.mrf.mxu0
        %4629 = vdwg.mxu0
        %v4632 = vrot.slane %v4497, 1
        %v4633 = vrot.slane %v4523, 1
        %v4636 = vadd.f32 %v1936, %v4632
        %v4637 = vadd.f32 %v1962, %v4633
        %v4638 = vxor.u32 %v4636, 2147483648
        %v4639 = vxor.u32 %v4637, 2147483648
        %v4640 = vmul.f32 %v4638, 1.442695
        %v4641 = vpow.pop %v4640
        %v4642 = vmul.f32 %v4639, 1.442695
        %v4643 = vpow.pop %v4642
        %v4644 = vadd.f32 %v4641, 1.0
        %v4645 = vadd.f32 %v4643, 1.0
        %v4646 = vrcp.pop %v4644
        %v4647 = vmul.f32 %v4644, %v4646
        %v4648 = vsub.f32 1.0, %v4647
        %v4649 = vmul.f32 %v4646, %v4648
        %v4650 = vadd.f32 %v4646, %v4649
        %vm4651 = vweird.f32 %v4644
        %vm4652 = vweird.f32 %v4646
        %vm4653 = vmor %vm4651, %vm4652
        %v4654 = vsel %vm4653, %v4646, %v4650
        %v4655 = vand.u32 2147483647, %v4644
        %vm4656 = vcmp.eq.f32.partialorder %v4655, 8.507059e+37
        %v4657 = vand.u32 %v4644, 2147483648
        %v4658 = vor.u32 1.1754944e-38, %v4657
        %v4659 = vsel %vm4656, %v4658, %v4654
        %v4660 = vmul.f32 1.0, %v4659
        %v4661 = vrcp.pop %v4645
        %v4662 = vmul.f32 %v4645, %v4661
        %v4663 = vsub.f32 1.0, %v4662
        %v4664 = vmul.f32 %v4661, %v4663
        %v4665 = vadd.f32 %v4661, %v4664
        %vm4666 = vweird.f32 %v4645
        %vm4667 = vweird.f32 %v4661
        %vm4668 = vmor %vm4666, %vm4667
        %v4669 = vsel %vm4668, %v4661, %v4665
        %v4670 = vand.u32 2147483647, %v4645
        %vm4671 = vcmp.eq.f32.partialorder %v4670, 8.507059e+37
        %v4672 = vand.u32 %v4645, 2147483648
        %v4673 = vor.u32 1.1754944e-38, %v4672
        %v4674 = vsel %vm4671, %v4673, %v4669
        %v4675 = vmul.f32 1.0, %v4674
        %v4678 = vrot.slane %v4549, 1
        %v4679 = vrot.slane %v4575, 1
        %v4682 = vadd.f32 %v1988, %v4678
        %v4683 = vadd.f32 %v2014, %v4679
        %v4684 = vxor.u32 %v4682, 2147483648
        %v4685 = vxor.u32 %v4683, 2147483648
        %v4686 = vmul.f32 %v4684, 1.442695
        %v4687 = vpow.pop %v4686
        %v4688 = vmul.f32 %v4685, 1.442695
        %v4689 = vpow.pop %v4688
        %v4690 = vadd.f32 %v4687, 1.0
        %v4691 = vadd.f32 %v4689, 1.0
        %v4692 = vrcp.pop %v4690
        %v4693 = vmul.f32 %v4690, %v4692
        %v4694 = vsub.f32 1.0, %v4693
        %v4695 = vmul.f32 %v4692, %v4694
        %v4696 = vadd.f32 %v4692, %v4695
        %vm4697 = vweird.f32 %v4690
        %vm4698 = vweird.f32 %v4692
        %vm4699 = vmor %vm4697, %vm4698
        %v4700 = vsel %vm4699, %v4692, %v4696
        %v4701 = vand.u32 2147483647, %v4690
        %vm4702 = vcmp.eq.f32.partialorder %v4701, 8.507059e+37
        %v4703 = vand.u32 %v4690, 2147483648
        %v4704 = vor.u32 1.1754944e-38, %v4703
        %v4705 = vsel %vm4702, %v4704, %v4700
        %v4706 = vmul.f32 1.0, %v4705
        %v4707 = vrcp.pop %v4691
        %v4708 = vmul.f32 %v4691, %v4707
        %v4709 = vsub.f32 1.0, %v4708
        %v4710 = vmul.f32 %v4707, %v4709
        %v4711 = vadd.f32 %v4707, %v4710
        %vm4712 = vweird.f32 %v4691
        %vm4713 = vweird.f32 %v4707
        %vm4714 = vmor %vm4712, %vm4713
        %v4715 = vsel %vm4714, %v4707, %v4711
        %v4716 = vand.u32 2147483647, %v4691
        %vm4717 = vcmp.eq.f32.partialorder %v4716, 8.507059e+37
        %v4718 = vand.u32 %v4691, 2147483648
        %v4719 = vor.u32 1.1754944e-38, %v4718
        %v4720 = vsel %vm4717, %v4719, %v4715
        %v4721 = vmul.f32 1.0, %v4720
        %v4724 = vrot.slane %v4601, 1
        %v4725 = vrot.slane %v4627, 1
        %v4728 = vmul.f32 %v4660, %v4724
        %v4729 = vmul.f32 %v4675, %v4725
        %v4730 = vadd.f32 %v2040, %v4728
        %v4731 = vadd.f32 %v2066, %v4729
        %v4732 = vtanh.pop %v4730
        %v4733 = vtanh.pop %v4731
        %v4734 = vsub.f32 1.0, %v4706
        %v4735 = vsub.f32 1.0, %v4721
        %v4736 = vmul.f32 %v4734, %v4732
        %v4737 = vmul.f32 %v4735, %v4733
        %v4738 = vrot.slane %v4452, 7
        %v4739 = vrot.slane %v4453, 7
        %v4742 = vmul.f32 %v4706, %v4738
        %v4743 = vmul.f32 %v4721, %v4739
        %v4744 = vadd.f32 %v4736, %v4742
        %v4745 = vadd.f32 %v4737, %v4743
        %4748 = vst [vmem:[#allocation1] sm:$0xff] %v4744
        %4749 = vst [vmem:[#allocation1 + $0x9] sm:$0xff] %v4745
        %s4750 = scalar_lea.vmem [#allocation1], 7
        %v4751 = vld [vmem:[%s4750] ss:$9 sm:$0xff]
        %s4753 = scalar_lea.vmem [#allocation2], 7
        %4754 = vst.msk [vmem:[%s4753] ss:$8 sm:$0x3] %vm2705, %v4751
        %4755 = vst.msk [vmem:[%s4753] ss:$8 sm:$0x0] %vm2705, %v4751
        %v4756 = vld [vmem:[#allocation2] sm:$0xff]
        %v4757 = vld [vmem:[#allocation2 + $0x8] sm:$0xff]
        %v4760 = vrot.slane %v1536, 7
        %v4761 = vsel %vm2699, %v1523, %v4760
        %v4762 = vsel %vm1446, %v1523, %v4760
        %v4763 = vrot.slane %v4762, 1
        %v4764 = vperm.slane %v4761, 0
        %v4765 = vperm.slane %v4761, 1
        %v4766 = vperm.slane %v4763, 0
        %v4767 = vperm.slane %v4763, 1
        %v4772 = vmul.f32 %v4764, %v4756
        %v4773 = vmul.f32 %v4765, %v4757
        %v4774 = vmul.f32 %v4766, %v4756
        %v4775 = vmul.f32 %v4767, %v4757
        %v4776 = vsel %vm1097, %v4773, 0.0
        %v4777 = vadd.f32 %v4772, %v4776
        %4778 = vadd.xlane.f32.xlu0 %v4777
        %v4779 = vpop.xlane.xlu0 %4778
        %v4780 = vsel %vm1097, %v4775, 0.0
        %v4781 = vadd.f32 %v4774, %v4780
        %4782 = vadd.xlane.f32.xlu0 %v4781
        %v4783 = vpop.xlane.xlu0 %4782
        %v4786 = vperm.slane %v4779, %v1443
        %v4787 = vperm.slane %v4783, %v1443
        %v4788 = vsel %vm1446, %v4787, %v4786
        %v4790 = vsel %vm1449, %v4788, -inf
        %4791 = vmax.xlane.f32.xlu0 %v4790
        %v4792 = vpop.xlane.xlu0 %4791
        %v4794 = vperm.slane %v4792, 0
        %v4795 = vperm.slane %v4792, 1
        %v4798 = vsub.f32 %v4779, %v4794
        %v4799 = vsub.f32 %v4783, %v4795
        %v4800 = vmul.f32 %v4798, 1.442695
        %v4801 = vpow.pop %v4800
        %v4802 = vmul.f32 %v4799, 1.442695
        %v4803 = vpow.pop %v4802
        %4806 = vset.pattern.permute.xlu0 0
        %4807 = vperm.xlu0 %4806, %v4801
        %v4808 = vpop.permute.xlu0 %4807
        %4809 = vset.pattern.permute.xlu0 0
        %4810 = vperm.xlu0 %4809, %v4803
        %v4811 = vpop.permute.xlu0 %4810
        %v4812 = vperm.slane %v4808, %v1443
        %v4813 = vperm.slane %v4811, %v1443
        %v4814 = vsel %vm1446, %v4813, %v4812
        %v4816 = vsel %vm1449, %v4814, 0.0
        %4817 = vadd.xlane.f32.xlu0 %v4816
        %v4818 = vpop.xlane.xlu0 %4817
        %v4819 = vrcp.pop %v4818
        %v4821 = vperm.slane %v4819, 0
        %v4822 = vperm.slane %v4819, 1
        %v4825 = vmul.f32 %v4801, %v4821
        %v4826 = vmul.f32 %v4803, %v4822
        %v4827 = vpack.c.bf16 %v4825, %v4825
        %v4828 = vpack.c.bf16 %v4826, %v4826
        %v4829 = vpack.c.bf16 %v4756, %v4756
        %v4830 = vpack.c.bf16 %v4757, %v4757
        %v4833 = vunpack.c.l.b16 %v4827
        %v4834 = vunpack.c.l.b16 %v4828
        %4835 = vset.pattern.permute.xlu0 0
        %4836 = vperm.xlu0 %4835, %v4833
        %v4837 = vpop.permute.xlu0 %4836
        %4838 = vset.pattern.permute.xlu0 0
        %4839 = vperm.xlu0 %4838, %v4834
        %v4840 = vpop.permute.xlu0 %4839
        %v4841 = vperm.slane %v4837, %v1443
        %v4842 = vperm.slane %v4840, %v1443
        %v4843 = vsel %vm1446, %v4842, %v4841
        %v4844 = vpack.c.b16 %v4843, %v4843
        %v4846 = vsel %vm1503, %v4844, 0
        %v4849 = vsel %vm1507, %v4829, 0
        %v4852 = vsel %vm1507, %v4830, 0
        %4854 = vmatpush.bf16.msra.mxu0 0
        %4855 = vmatpush.bf16.msra.mxu0 0
        %4856 = vmatpush.bf16.msra.mxu0 0
        %4857 = vmatpush.bf16.msra.mxu0 0
        %4858 = vmatpush.bf16.msra.mxu0 0
        %4859 = vmatpush.bf16.msra.mxu0 0
        %4860 = vmatpush.bf16.msra.mxu0 0
        %4861 = vmatpush.bf16.msra.mxu0 %v4849
        %4862 = vmatmul.bf16.gmra.mxu0 %v4846
        %v4863 = vpop.f32.mrf.mxu0
        %v4864 = vadd.f32 0.0, %v4863
        %v4865 = vpop.f32.mrf.mxu0
        %4866 = vdwg.mxu0
        %4867 = vmatpush.bf16.msra.mxu0 0
        %4868 = vmatpush.bf16.msra.mxu0 0
        %4869 = vmatpush.bf16.msra.mxu0 0
        %4870 = vmatpush.bf16.msra.mxu0 0
        %4871 = vmatpush.bf16.msra.mxu0 0
        %4872 = vmatpush.bf16.msra.mxu0 0
        %4873 = vmatpush.bf16.msra.mxu0 0
        %4874 = vmatpush.bf16.msra.mxu0 %v4852
        %4875 = vmatmul.bf16.gmra.mxu0 %v4846
        %v4876 = vpop.f32.mrf.mxu0
        %v4877 = vadd.f32 0.0, %v4876
        %v4878 = vpop.f32.mrf.mxu0
        %4879 = vdwg.mxu0
        %v4880 = vld [vmem:[%s16] sm:$0x3]
        %v4881 = vld [vmem:[%s17] sm:$0x3]
        %vm4882 = vcmask 1041408
        %v4883 = vsel %vm4882, %v4864, 0.0
        %vm4884 = vcmask 254976
        %v4885 = vsel %vm4884, %v4877, 0.0
        %v4886 = vadd.f32 %v4883, %v4885
        %4887 = vadd.xlane.f32.xlu0 %v4886
        %v4888 = vpop.xlane.xlu0 %4887
        %v4889 = vmul.f32 %v4888, %v1108
        %v4890 = vsub.f32 %v4864, %v4889
        %v4891 = vsub.f32 %v4877, %v4889
        %v4892 = vmul.f32 %v4890, %v4890
        %v4893 = vmul.f32 %v4891, %v4891
        %v4894 = vsel %vm4882, %v4892, 0.0
        %v4895 = vsel %vm4884, %v4893, 0.0
        %v4896 = vadd.f32 %v4894, %v4895
        %4897 = vadd.xlane.f32.xlu0 %v4896
        %v4898 = vpop.xlane.xlu0 %4897
        %v4899 = vmul.f32 %v4898, %v1108
        %v4900 = vadd.f32 %v4899, 1e-05
        %v4901 = vrsqrt.pop %v4900
        %v4902 = vmul.f32 %v4901, %v4900
        %v4903 = vmul.f32 %v4902, %v4901
        %v4904 = vmul.f32 0.5, %v4903
        %v4905 = vsub.f32 1.5, %v4904
        %v4906 = vmul.f32 %v4901, %v4905
        %vm4907 = vweird.f32 %v4900
        %vm4908 = vweird.f32 %v4901
        %vm4909 = vmor %vm4907, %vm4908
        %v4910 = vsel %vm4909, %v4901, %v4906
        %v4911 = vmul.f32 %v4890, %v4910
        %v4912 = vmul.f32 %v4891, %v4910
        %v4914 = vperm.slane %v4880, 0
        %v4915 = vperm.slane %v4880, 1
        %v4918 = vmul.f32 %v4911, %v4914
        %v4919 = vmul.f32 %v4912, %v4915
        %v4921 = vperm.slane %v4881, 0
        %v4922 = vperm.slane %v4881, 1
        %v4925 = vadd.f32 %v4918, %v4921
        %v4926 = vadd.f32 %v4919, %v4922
        %v4929 = vrot.slane %v4926, 6
        %v4930 = vsel %vm4882, %v4925, %v4929
        %vm4932 = vcmask 257026
        %vm4933 = vmor %vm4932, %vm4882
        %4934 = vst.msk [vmem:[%s818] sm:$0xf] %vm4933, %v4930
        %s4935 = sand.u32 %s440, 1
        %s4936 = scalar_lea.sflag [#allocation5], %s4935
        %s4937 = sand.u32 %s440, 1
        %s4938 = smul.addr %s4937, 4
        %s4939 = scalar_lea.vmem [#allocation26], %s4938
        // Predicated region
        $region149: #{tpu_custom_call.1} parent=91 // pred_check
          %p4940 = pneg %p450
        $region150: #{tpu_custom_call.1} parent=91 // pred_check_branch
          %4942 = sbr.rel (%p4940) target = $region152
        $region151: #{tpu_custom_call.1} parent=91 // pred_region
          %4944 = vsyncadd %s4936, 0
          %s4945 = smul.addr %s44, 2
          %s4946 = smul.addr %s4945, 2
          %s4947 = scalar_lea.hbm %s18, %s4946
          %s4949 = sshll.u32 %s4939, 4
          %s4950 = int_to_ptr.vmem [resolvable:$true] %s4949
          %s4951 = sshll.u32 %s4947, 4
          %s4952 = int_to_ptr.hbm [resolvable:$true] %s4951
          %4954 = dma.vmem_to_hbm [thread:$0]  %s4950, 64, %s4952, %s4936
        $region152: #{tpu_custom_call.1} parent=91 // pred_fallthru
          _
      $region92: #{tpu_custom_call.1} parent=5 // pred_fallthru
        _
      %p4955 = scmp.le.s32.totalorder 2, %s39
      // Predicated region
      $region153: #{tpu_custom_call.1} parent=5 // pred_check
        %p4956 = pneg %p4955
      $region154: #{tpu_custom_call.1} parent=5 // pred_check_branch
        %4958 = sbr.rel (%p4956) target = $region156
      $region155: #{tpu_custom_call.1} parent=5 // pred_region
        %s4959 = ssub.s32 %s39, 2
        // Predicated region
        $region157: #{tpu_custom_call.1} parent=155 // pred_check
          %p4960 = pneg %p456
        $region158: #{tpu_custom_call.1} parent=155 // pred_check_branch
          %4962 = sbr.rel (%p4960) target = $region160
        $region159: #{tpu_custom_call.1} parent=155 // pred_region
          %s4963 = sand.u32 %s441, 1
          %s4964 = scalar_lea.sflag [#allocation5], %s4963
          %s4965 = sand.u32 %s441, 1
          %s4966 = smul.addr %s4965, 4
          %s4967 = scalar_lea.vmem [#allocation26], %s4966
          %4969 = dma.done %s4964, 64
        $region160: #{tpu_custom_call.1} parent=155 // pred_fallthru
          _
      $region156: #{tpu_custom_call.1} parent=5 // pred_fallthru
        _
    $region6: #{tpu_custom_call.1} parent=1 // loop_footer
      %s43 = sadd.s32 1, %s39
    $region7: #{tpu_custom_call.1} parent=1 // loop_footer_branch
      %38 = sbr.rel target = $region3
    $region8: #{tpu_custom_call.1} parent=1 // loop_exit
      _
    %4970 = vsyncpa [#allocation4], 1
    %s4971 = scalar_lea.sflag [#allocation4], 1
    %4972 = vsyncpa %s4971, 1
    %4973 = vsyncpa [#allocation7], 1
    %4974 = vsyncpa [#allocation10], 1
    %4975 = vsyncpa [#allocation13], 1
    %4976 = vsyncpa [#allocation16], 1
    %s4977 = scalar_lea.sflag [#allocation16], 1
    %4978 = vsyncpa %s4977, 1
    %4979 = vsyncpa [#allocation19], 1
    %4980 = vsyncpa [#allocation22], 1
    %4981 = vsyncpa [#allocation25], 1
    %4982 = vsyncpa [#allocation5], 1
    %s4983 = scalar_lea.sflag [#allocation5], 1
    %4984 = vsyncpa %s4983, 1

</llo_original>
